<compile_context>
chip_gen: v5e
topology: v5e:2x2
jax: 0.10.0
libtpu: 0.0.40
codegen_flags: <defaults>
</compile_context>

<pallas_src>
import functools

import jax
import jax.numpy as jnp
from jax.experimental import pallas as pl
from jax.experimental.pallas import tpu as pltpu


_VMEM_LIMIT = 48 * 1024 * 1024   # explicit scoped-VMEM limit (safe on v5e/v6e/v7x)


# ----------------------------- small helpers -----------------------------

def _round_up(x, m):
    return ((x + m - 1) // m) * m


def _pick_tile(size, pref, align):
    """Pick a block size (<= pref) for one axis.

    If the axis fits in one block, use the full unpadded extent (full-extent
    blocks are exempt from the (8,128) rule).  Otherwise pad the axis to a
    multiple of `align` and pick the largest aligned tile dividing it evenly.
    Returns (tile, padded_size).
    """
    if size <= pref:
        return size, size
    padded = _round_up(size, align)
    tile = (pref // align) * align
    while padded % tile:
        tile -= align
    return tile, padded


def _pad2(a, rows, cols):
    pr, pc = rows - a.shape[0], cols - a.shape[1]
    if pr or pc:
        a = jnp.pad(a, ((0, pr), (0, pc)))
    return a


# ----------------------------- Pallas kernels -----------------------------

def _linear_kernel(x_ref, w_ref, b_ref, o_ref, acc_ref):
    # o = x @ w + b, K-tiled with f32 VMEM accumulator; x/w arrive bf16.
    @pl.when(pl.program_id(2) == 0)
    def _():
        acc_ref[...] = jnp.zeros_like(acc_ref)

    acc_ref[...] += jnp.dot(x_ref[...], w_ref[...],
                            preferred_element_type=jnp.float32)

    @pl.when(pl.program_id(2) == pl.num_programs(2) - 1)
    def _():
        o_ref[...] = (acc_ref[...] + b_ref[...]).astype(o_ref.dtype)


def _linear_residual_kernel(x_ref, w_ref, b_ref, r_ref, o_ref, acc_ref):
    # o = residual + x @ w + b  (residual add fused into the flush).
    @pl.when(pl.program_id(2) == 0)
    def _():
        acc_ref[...] = jnp.zeros_like(acc_ref)

    acc_ref[...] += jnp.dot(x_ref[...], w_ref[...],
                            preferred_element_type=jnp.float32)

    @pl.when(pl.program_id(2) == pl.num_programs(2) - 1)
    def _():
        o_ref[...] = (acc_ref[...] + b_ref[...]
                      + r_ref[...].astype(jnp.float32)).astype(o_ref.dtype)


def _ln_linear_kernel(x_ref, g_ref, bln_ref, w_ref, b_ref, o_ref, xn_ref, *, gelu):
    # o = act(LayerNorm(x) @ w + b).  LN statistics need the full feature dim,
    # so K (= hidden D) is a single full-extent block.  The normalized bf16
    # activations are cached in VMEM scratch and computed only on the first
    # N-tile of each row-tile (N is the innermost, sequential grid axis).
    @pl.when(pl.program_id(1) == 0)
    def _():
        x = x_ref[...].astype(jnp.float32)                   # [tm, K]
        mean = jnp.mean(x, axis=-1, keepdims=True)
        var = jnp.mean(jnp.square(x - mean), axis=-1, keepdims=True)
        h = (x - mean) * jax.lax.rsqrt(var + 1e-6)
        h = h * g_ref[...] + bln_ref[...]
        xn_ref[...] = h.astype(jnp.bfloat16)

    acc = jnp.dot(xn_ref[...], w_ref[...],
                  preferred_element_type=jnp.float32) + b_ref[...]
    if gelu:
        # tanh-approx GELU (EUP tanh); exact erf GELU differs by <1e-3 rel.
        acc = jax.nn.gelu(acc, approximate=True)
    o_ref[...] = acc.astype(o_ref.dtype)


def _layernorm_kernel(x_ref, g_ref, b_ref, o_ref):
    x = x_ref[...].astype(jnp.float32)
    mean = jnp.mean(x, axis=-1, keepdims=True)
    var = jnp.mean(jnp.square(x - mean), axis=-1, keepdims=True)
    o_ref[...] = ((x - mean) * jax.lax.rsqrt(var + 1e-6) * g_ref[...]
                  + b_ref[...]).astype(o_ref.dtype)


def _batchnorm1d_kernel(x_ref, g_ref, b_ref, m_ref, v_ref, o_ref):
    # BatchNorm1d, inference mode (running stats), eps=1e-5 (PyTorch default).
    x = x_ref[...].astype(jnp.float32)
    y = (x - m_ref[...]) * jax.lax.rsqrt(v_ref[...] + 1e-5)
    o_ref[...] = (y * g_ref[...] + b_ref[...]).astype(o_ref.dtype)


def _attention_kernel(qkv_ref, o_ref, *, heads, dh, scale, n_valid):
    # One batch element per grid step; qkv_ref is [Npad, 3*D] bf16 in the
    # token-major layout produced by the qkv matmul (no HBM transposes).
    # Heads are unrolled as a static Python loop over lane slices, so only one
    # head's [Npad, Npad] f32 score block is live at a time (bounded vreg /
    # VMEM pressure even at re-id resolutions).
    D = heads * dh
    qkv = qkv_ref[...]
    npad = qkv.shape[0]
    col = jax.lax.broadcasted_iota(jnp.int32, (npad, npad), 1)
    key_ok = col < n_valid
    outs = []
    for h in range(heads):
        qh = qkv[:, h * dh:(h + 1) * dh]                 # [Npad, dh] bf16
        kh = qkv[:, D + h * dh:D + (h + 1) * dh]
        vh = qkv[:, 2 * D + h * dh:2 * D + (h + 1) * dh]
        # q @ k^T via dot_general contracting the last dims (no materialized .T)
        s = jax.lax.dot_general(qh, kh, (((1,), (1,)), ((), ())),
                                preferred_element_type=jnp.float32) * scale
        if n_valid < npad:                               # mask padded keys (f32)
            s = jnp.where(key_ok, s, -1e30)
        s = s - jnp.max(s, axis=-1, keepdims=True)
        p = jnp.exp(s)
        p = p * pl.reciprocal(jnp.sum(p, axis=-1, keepdims=True), approx=True)
        outs.append(jnp.dot(p.astype(jnp.bfloat16), vh,
                            preferred_element_type=jnp.float32))
    # lane-dense [Npad, D] store (D = heads*dh)
    o_ref[...] = jnp.concatenate(outs, axis=-1).astype(o_ref.dtype)


# ----------------------------- Pallas wrappers -----------------------------

def linear(x, w, b, residual=None, *, tm=512, tn=512, tk=1536):
    """o = x @ w + b (+ residual).  Tiled (M,N,K) grid, bf16 in/out, f32 acc."""
    M, K = x.shape
    N = w.shape[1]
    tm, Mp = _pick_tile(M, tm, 8)
    tn, Np = _pick_tile(N, tn, 128)
    tk, Kp = _pick_tile(K, tk, 128)
    xp = _pad2(x.astype(jnp.bfloat16), Mp, Kp)
    wp = _pad2(w, Kp, Np)                      # weights pre-cast bf16 at init
    bp = _pad2(b, 1, Np)                       # bias pre-shaped (1, N) f32

    in_specs = [
        pl.BlockSpec((tm, tk), lambda i, j, k: (i, k)),
        pl.BlockSpec((tk, tn), lambda i, j, k: (k, j)),
        pl.BlockSpec((1, tn), lambda i, j, k: (0, j)),
    ]
    operands = [xp, wp, bp]
    kernel = _linear_kernel
    if residual is not None:
        in_specs.append(pl.BlockSpec((tm, tn), lambda i, j, k: (i, j)))
        operands.append(_pad2(residual.astype(jnp.bfloat16), Mp, Np))
        kernel = _linear_residual_kernel

    out = pl.pallas_call(
        kernel,
        out_shape=jax.ShapeDtypeStruct((Mp, Np), jnp.bfloat16),
        grid=(Mp // tm, Np // tn, Kp // tk),
        in_specs=in_specs,
        out_specs=pl.BlockSpec((tm, tn), lambda i, j, k: (i, j)),
        scratch_shapes=[pltpu.VMEM((tm, tn), jnp.float32)],
        compiler_params=pltpu.CompilerParams(
            dimension_semantics=("parallel", "parallel", "arbitrary"),
            vmem_limit_bytes=_VMEM_LIMIT),
        cost_estimate=pl.CostEstimate(
            flops=2 * Mp * Np * Kp, transcendentals=0,
            bytes_accessed=Mp * Kp * 2 + Kp * Np * 2 + Mp * Np * 2),
    )(*operands)
    if (Mp, Np) != (M, N):
        out = out[:M, :N]
    return out


def ln_linear(x, gamma, beta, w, b, *, gelu=False, tm=512, tn=512):
    """o = act(LayerNorm(x) @ w + b); LN fused + cached across N tiles."""
    M, K = x.shape                       # K = true hidden D (kept whole for LN)
    N = w.shape[1]
    tm, Mp = _pick_tile(M, tm, 8)
    tn, Np = _pick_tile(N, tn, 128)
    xp = _pad2(x.astype(jnp.bfloat16), Mp, K)
    wp = _pad2(w, K, Np)
    bp = _pad2(b, 1, Np)

    out = pl.pallas_call(
        functools.partial(_ln_linear_kernel, gelu=gelu),
        out_shape=jax.ShapeDtypeStruct((Mp, Np), jnp.bfloat16),
        grid=(Mp // tm, Np // tn),           # N innermost -> scratch reuse
        in_specs=[
            pl.BlockSpec((tm, K), lambda i, j: (i, 0)),
            pl.BlockSpec((1, K), lambda i, j: (0, 0)),
            pl.BlockSpec((1, K), lambda i, j: (0, 0)),
            pl.BlockSpec((K, tn), lambda i, j: (0, j)),
            pl.BlockSpec((1, tn), lambda i, j: (0, j)),
        ],
        out_specs=pl.BlockSpec((tm, tn), lambda i, j: (i, j)),
        scratch_shapes=[pltpu.VMEM((tm, K), jnp.bfloat16)],
        compiler_params=pltpu.CompilerParams(
            dimension_semantics=("parallel", "arbitrary"),
            vmem_limit_bytes=_VMEM_LIMIT),
        cost_estimate=pl.CostEstimate(
            flops=2 * Mp * Np * K + 8 * Mp * K,
            transcendentals=Mp * Np if gelu else 0,
            bytes_accessed=Mp * K * 2 + K * Np * 2 + Mp * Np * 2),
    )(xp, gamma, beta, wp, bp)
    if (Mp, Np) != (M, N):
        out = out[:M, :N]
    return out


def layernorm(x, gamma, beta, *, tm=512, out_dtype=jnp.float32):
    M, D = x.shape
    tm, Mp = _pick_tile(M, tm, 8)
    xp = _pad2(x, Mp, D)
    out = pl.pallas_call(
        _layernorm_kernel,
        out_shape=jax.ShapeDtypeStruct((Mp, D), out_dtype),
        grid=(Mp // tm,),
        in_specs=[pl.BlockSpec((tm, D), lambda i: (i, 0)),
                  pl.BlockSpec((1, D), lambda i: (0, 0)),
                  pl.BlockSpec((1, D), lambda i: (0, 0))],
        out_specs=pl.BlockSpec((tm, D), lambda i: (i, 0)),
        compiler_params=pltpu.CompilerParams(
            dimension_semantics=("parallel",), vmem_limit_bytes=_VMEM_LIMIT),
    )(xp, gamma, beta)
    return out[:M] if Mp != M else out


def batchnorm1d(x, gamma, beta, mean, var, *, tm=512):
    M, D = x.shape
    tm, Mp = _pick_tile(M, tm, 8)
    xp = _pad2(x, Mp, D)
    out = pl.pallas_call(
        _batchnorm1d_kernel,
        out_shape=jax.ShapeDtypeStruct((Mp, D), jnp.float32),
        grid=(Mp // tm,),
        in_specs=[pl.BlockSpec((tm, D), lambda i: (i, 0))]
                 + [pl.BlockSpec((1, D), lambda i: (0, 0))] * 4,
        out_specs=pl.BlockSpec((tm, D), lambda i: (i, 0)),
        compiler_params=pltpu.CompilerParams(
            dimension_semantics=("parallel",), vmem_limit_bytes=_VMEM_LIMIT),
    )(xp, gamma, beta, mean, var)
    return out[:M] if Mp != M else out


def attention(qkv, batch, n_valid, heads, dh, scale):
    """Multi-head self-attention.  qkv: [B*Npad, 3*heads*dh] (bf16, token-major).

    No wrapper-side transposes: qkv reshapes (free) to [B, Npad, 3*D], one
    batch element per grid step, per-head slicing happens inside the kernel,
    and the output lands directly in a lane-dense [B, Npad, D] buffer that
    reshapes for free back to [B*Npad, D].
    """
    D = heads * dh
    npad = qkv.shape[0] // batch
    qkv3 = qkv.reshape(batch, npad, 3 * D)

    out = pl.pallas_call(
        functools.partial(_attention_kernel, heads=heads, dh=dh,
                          scale=scale, n_valid=n_valid),
        out_shape=jax.ShapeDtypeStruct((batch, npad, D), jnp.bfloat16),
        grid=(batch,),
        in_specs=[pl.BlockSpec((None, npad, 3 * D), lambda b: (b, 0, 0))],
        out_specs=pl.BlockSpec((None, npad, D), lambda b: (b, 0, 0)),
        compiler_params=pltpu.CompilerParams(
            dimension_semantics=("parallel",), vmem_limit_bytes=_VMEM_LIMIT),
        cost_estimate=pl.CostEstimate(
            flops=4 * batch * heads * npad * npad * dh,
            transcendentals=batch * heads * npad * npad,
            bytes_accessed=batch * npad * (3 * D + D) * 2),
    )(qkv3)
    return out.reshape(batch * npad, D)


# ----------------------------- Backbone (part-attention ViT, scaled down) ----

def vit_forward(x, params, cfg):
    B, C, H, W = x.shape
    p = cfg["patch"]
    D = cfg["dim"]
    heads = cfg["heads"]
    dh = D // heads
    scale = dh ** -0.5

    # patch embedding: non-overlapping p x p patches -> rows -> tiled matmul
    Hp, Wp = H // p, W // p
    patches = (
        x.reshape(B, C, Hp, p, Wp, p)
        .transpose(0, 2, 4, 1, 3, 5)
        .reshape(B * Hp * Wp, C * p * p)
    )
    tok = linear(patches, params["patch_w"], params["patch_b"]).reshape(B, Hp * Wp, D)

    cls = jnp.broadcast_to(params["cls_token"], (B, 1, D))
    part = jnp.broadcast_to(params["part_tokens"], (B, 3, D))
    tokens = (jnp.concatenate([cls, part, tok], axis=1)
              + params["pos_embed"]).astype(jnp.bfloat16)
    N = tokens.shape[1]

    # pad token axis to a multiple of 8 sublanes; padded keys masked in attention
    npad = _round_up(N, 8)
    if npad != N:
        tokens = jnp.pad(tokens, ((0, 0), (0, npad - N), (0, 0)))
    tflat = tokens.reshape(B * npad, D)          # bf16 residual stream

    layerwise = []
    for blk in params["blocks"]:
        # attention sub-block: fused LN+QKV, attention, fused proj+residual
        qkv = ln_linear(tflat, blk["ln1_g"], blk["ln1_b"], blk["qkv_w"], blk["qkv_b"])
        a = attention(qkv, B, N, heads, dh, scale)
        tflat = linear(a, blk["proj_w"], blk["proj_b"], residual=tflat)

        # MLP sub-block: fused LN+fc1+GELU, fused fc2+residual
        h = ln_linear(tflat, blk["ln2_g"], blk["ln2_b"], blk["fc1_w"], blk["fc1_b"],
                      gelu=True)
        tflat = linear(h, blk["fc2_w"], blk["fc2_b"], residual=tflat)

        layerwise.append(tflat.reshape(B, npad, D)[:, :N])

    # final LayerNorm on the last layer's tokens (timm ViT convention), f32 out
    last = layernorm(tflat, params["norm_g"], params["norm_b"])
    layerwise[-1] = last.reshape(B, npad, D)[:, :N]
    return layerwise


# ----------------------------- PAT forward -----------------------------

def pat_forward(x, params, cfg, is_training=False):
    layerwise_tokens = vit_forward(x, params, cfg)
    layerwise_cls_tokens = [t[:, 0] for t in layerwise_tokens]
    part_feat_list = layerwise_tokens[-1][:, 1:4]                         # noqa: F841
    layerwise_part_tokens = [[t[:, i] for i in range(1, 4)] for t in layerwise_tokens]

    # BN-neck (computed as in the PyTorch forward; unused in eval return path)
    feat = batchnorm1d(layerwise_cls_tokens[-1], params["bn_g"], params["bn_b"],
                       params["bn_mean"], params["bn_var"])

    if is_training:
        # TODO(synk): reference builds nn.Linear(768, num_classes=0, bias=False);
        # a zero-output-column classifier has no meaningful Pallas matmul, so the
        # training branch returns the classifier inputs instead.
        return [feat, layerwise_cls_tokens, layerwise_part_tokens]
    return [layerwise_cls_tokens[-1]]


# ----------------------------- deterministic params -----------------------------

def init_params(key, cfg):
    D = cfg["dim"]
    C = cfg["in_chans"]
    p = cfg["patch"]
    mlp = cfg["mlp_ratio"] * D
    num_patches = (cfg["img"][0] // p) * (cfg["img"][1] // p)
    N = 1 + 3 + num_patches

    keys = iter(jax.random.split(key, 8 + 8 * cfg["depth"]))

    def normal(shape, std, dtype=jnp.float32):
        return (jax.random.normal(next(keys), shape, jnp.float32) * std).astype(dtype)

    # Weights pre-cast to bf16 (MXU inputs, halved HBM/VMEM traffic); biases and
    # per-feature scale vectors pre-shaped (1, N) f32 so no per-forward
    # reshape/astype ops run on constants.
    params = {
        "patch_w": normal((C * p * p, D), 0.02, jnp.bfloat16),
        "patch_b": jnp.zeros((1, D), jnp.float32),
        "cls_token": normal((1, 1, D), 0.02),
        "part_tokens": normal((1, 3, D), 0.02),
        "pos_embed": normal((1, N, D), 0.02),
        "norm_g": jnp.ones((1, D), jnp.float32),
        "norm_b": jnp.zeros((1, D), jnp.float32),
        # bottleneck BatchNorm1d: weights_init_kaiming -> weight=1, bias=0,
        # running stats at defaults (mean=0, var=1)
        "bn_g": jnp.ones((1, D), jnp.float32),
        "bn_b": jnp.zeros((1, D), jnp.float32),
        "bn_mean": jnp.zeros((1, D), jnp.float32),
        "bn_var": jnp.ones((1, D), jnp.float32),
        "blocks": [],
    }
    for _ in range(cfg["depth"]):
        params["blocks"].append({
            "ln1_g": jnp.ones((1, D), jnp.float32),
            "ln1_b": jnp.zeros((1, D), jnp.float32),
            "qkv_w": normal((D, 3 * D), 0.02, jnp.bfloat16),
            "qkv_b": jnp.zeros((1, 3 * D), jnp.float32),
            "proj_w": normal((D, D), 0.02, jnp.bfloat16),
            "proj_b": jnp.zeros((1, D), jnp.float32),
            "ln2_g": jnp.ones((1, D), jnp.float32),
            "ln2_b": jnp.zeros((1, D), jnp.float32),
            "fc1_w": normal((D, mlp), 0.02, jnp.bfloat16),
            "fc1_b": jnp.zeros((1, mlp), jnp.float32),
            "fc2_w": normal((mlp, D), 0.02, jnp.bfloat16),
            "fc2_b": jnp.zeros((1, D), jnp.float32),
        })
    return params


# ----------------------------- main -----------------------------

if __name__ == "__main__":
    # Scaled-down analogue of the [256,128] re-id config; dims chosen lane-
    # aligned (D=128, 3D=384, mlp=512) so the no-padding fast path is exercised.
    cfg = dict(img=(32, 16), patch=8, in_chans=3, dim=128, heads=4, depth=2,
               mlp_ratio=4)

    key = jax.random.PRNGKey(0)
    pkey, xkey = jax.random.split(key)
    params = init_params(pkey, cfg)

    # NCHW input
    x = jax.random.normal(xkey, (2, cfg["in_chans"], cfg["img"][0], cfg["img"][1]),
                          jnp.float32)

    fwd = jax.jit(functools.partial(pat_forward, cfg=cfg, is_training=False))
    out = fwd(x, params)
    feat = jax.block_until_ready(out[0])
    assert feat.shape == (2, cfg["dim"]) and feat.dtype == jnp.float32
    assert bool(jnp.all(jnp.isfinite(feat)))
    print("KERNEL_OK")
</pallas_src>

<mosaic_0001>
module attributes {stable_mosaic.version = 11 : i64} {
  func.func @_linear_kernel(%arg0: i32, %arg1: i32, %arg2: i32, %arg3: memref<16x192xbf16, #tpu.memory_space<vmem>>, %arg4: memref<192x128xbf16, #tpu.memory_space<vmem>>, %arg5: memref<1x128xf32, #tpu.memory_space<vmem>>, %arg6: memref<16x128xbf16, #tpu.memory_space<vmem>>, %arg7: memref<16x128xf32, #tpu.memory_space<vmem>>) attributes {dimension_semantics = [#tpu.dimension_semantics<parallel>, #tpu.dimension_semantics<parallel>, #tpu.dimension_semantics<arbitrary>], iteration_bounds = array<i64: 1, 1, 1>, scalar_prefetch = 0 : i64, scratch_operands = 1 : i64, tpu.core_type = #tpu.core_type<tc>, window_params = [{transform_indices = @transform_0, window_bounds = array<i64: 16, 192>}, {transform_indices = @transform_1, window_bounds = array<i64: 192, 128>}, {transform_indices = @transform_2, window_bounds = array<i64: 1, 128>}, {transform_indices = @transform_3, window_bounds = array<i64: 16, 128>}]} {
    %c0_i32 = arith.constant 0 : i32
    %0 = arith.cmpi eq, %arg2, %c0_i32 : i32
    %1 = arith.extui %0 : i1 to i32
    %c0_i32_0 = arith.constant 0 : i32
    %2 = arith.cmpi ne, %1, %c0_i32_0 : i32
    scf.if %2 {
      %cst_10 = arith.constant 0.000000e+00 : f32
      %12 = vector.broadcast %cst_10 : f32 to vector<16x128xf32>
      %c0_11 = arith.constant 0 : index
      %c0_12 = arith.constant 0 : index
      %13 = vector.load %arg7[%c0_11, %c0_12] : memref<16x128xf32, #tpu.memory_space<vmem>>, vector<16x128xf32>
      tpu.vector_store %arg7[%c0_11, %c0_12], %12 {strides = array<i32>} : memref<16x128xf32, #tpu.memory_space<vmem>>, vector<16x128xf32>,
    } else {
    }
    %c0 = arith.constant 0 : index
    %c0_1 = arith.constant 0 : index
    %3 = vector.load %arg7[%c0, %c0_1] : memref<16x128xf32, #tpu.memory_space<vmem>>, vector<16x128xf32>
    %c0_2 = arith.constant 0 : index
    %c0_3 = arith.constant 0 : index
    %4 = vector.load %arg3[%c0_2, %c0_3] : memref<16x192xbf16, #tpu.memory_space<vmem>>, vector<16x192xbf16>
    %c0_4 = arith.constant 0 : index
    %c0_5 = arith.constant 0 : index
    %5 = vector.load %arg4[%c0_4, %c0_5] : memref<192x128xbf16, #tpu.memory_space<vmem>>, vector<192x128xbf16>
    %cst = arith.constant dense<0.000000e+00> : vector<16x128xf32>
    %6 = tpu.matmul %4, %5, %cst {dimension_numbers = #tpu.dot_dimension_numbers<[1], [0], [0], [1], [0, 0, 1, 1], [], []>} : vector<16x192xbf16>, vector<192x128xbf16>, vector<16x128xf32> -> vector<16x128xf32>
    %7 = arith.addf %3, %6 : vector<16x128xf32>
    %c0_6 = arith.constant 0 : index
    %c0_7 = arith.constant 0 : index
    %8 = vector.load %arg7[%c0_6, %c0_7] : memref<16x128xf32, #tpu.memory_space<vmem>>, vector<16x128xf32>
    tpu.vector_store %arg7[%c0_6, %c0_7], %7 {strides = array<i32>} : memref<16x128xf32, #tpu.memory_space<vmem>>, vector<16x128xf32>,
    %c0_i32_8 = arith.constant 0 : i32
    %9 = arith.cmpi eq, %arg2, %c0_i32_8 : i32
    %10 = arith.extui %9 : i1 to i32
    %c0_i32_9 = arith.constant 0 : i32
    %11 = arith.cmpi ne, %10, %c0_i32_9 : i32
    scf.if %11 {
      %c0_10 = arith.constant 0 : index
      %c0_11 = arith.constant 0 : index
      %12 = vector.load %arg7[%c0_10, %c0_11] : memref<16x128xf32, #tpu.memory_space<vmem>>, vector<16x128xf32>
      %c0_12 = arith.constant 0 : index
      %c0_13 = arith.constant 0 : index
      %13 = vector.load %arg5[%c0_12, %c0_13] : memref<1x128xf32, #tpu.memory_space<vmem>>, vector<1x128xf32>
      %14 = vector.broadcast %13 : vector<1x128xf32> to vector<16x128xf32>
      %15 = arith.addf %12, %14 : vector<16x128xf32>
      %16 = arith.truncf %15 : vector<16x128xf32> to vector<16x128xbf16>
      %c0_14 = arith.constant 0 : index
      %c0_15 = arith.constant 0 : index
      %17 = vector.load %arg6[%c0_14, %c0_15] : memref<16x128xbf16, #tpu.memory_space<vmem>>, vector<16x128xbf16>
      tpu.vector_store %arg6[%c0_14, %c0_15], %16 {strides = array<i32>} : memref<16x128xbf16, #tpu.memory_space<vmem>>, vector<16x128xbf16>,
    } else {
    }
    return
  }
  func.func @transform_0(%arg0: i32, %arg1: i32, %arg2: i32) -> (i32, i32) {
    %c0_i32 = arith.constant 0 : i32
    return %arg0, %arg2 : i32, i32
  }
  func.func @transform_1(%arg0: i32, %arg1: i32, %arg2: i32) -> (i32, i32) {
    %c0_i32 = arith.constant 0 : i32
    return %arg2, %arg1 : i32, i32
  }
  func.func @transform_2(%arg0: i32, %arg1: i32, %arg2: i32) -> (i32, i32) {
    %c0_i32 = arith.constant 0 : i32
    %c0_i32_0 = arith.constant 0 : i32
    return %c0_i32, %arg1 : i32, i32
  }
  func.func @transform_3(%arg0: i32, %arg1: i32, %arg2: i32) -> (i32, i32) {
    %c0_i32 = arith.constant 0 : i32
    return %arg0, %arg1 : i32, i32
  }
}

module attributes {stable_mosaic.version = 11 : i64} {
  func.func @_attention_kernel(%arg0: i32, %arg1: memref<1x16x384xbf16, #tpu.memory_space<vmem>>, %arg2: memref<1x16x128xbf16, #tpu.memory_space<vmem>>) attributes {dimension_semantics = [#tpu.dimension_semantics<parallel>], iteration_bounds = array<i64: 2>, scalar_prefetch = 0 : i64, scratch_operands = 0 : i64, tpu.core_type = #tpu.core_type<tc>, window_params = [{transform_indices = @transform_0, window_bounds = array<i64: 1, 16, 384>}, {transform_indices = @transform_1, window_bounds = array<i64: 1, 16, 128>}]} {
    %c0 = arith.constant 0 : index
    %c0_0 = arith.constant 0 : index
    %c0_1 = arith.constant 0 : index
    %0 = vector.load %arg1[%c0, %c0_0, %c0_1] : memref<1x16x384xbf16, #tpu.memory_space<vmem>>, vector<1x16x384xbf16>
    %1 = vector.shape_cast %0 : vector<1x16x384xbf16> to vector<16x384xbf16>
    %2 = tpu.iota {dimensions = array<i32: 1>} : vector<16x16xi32>
    %c12_i32 = arith.constant 12 : i32
    %3 = vector.broadcast %c12_i32 : i32 to vector<16x16xi32>
    %4 = arith.cmpi slt, %2, %3 : vector<16x16xi32>
    %5 = vector.extract_strided_slice %1 {offsets = [0, 0], sizes = [16, 32], strides = [1, 1]} : vector<16x384xbf16> to vector<16x32xbf16>
    %6 = vector.extract_strided_slice %1 {offsets = [0, 128], sizes = [16, 32], strides = [1, 1]} : vector<16x384xbf16> to vector<16x32xbf16>
    %7 = vector.extract_strided_slice %1 {offsets = [0, 256], sizes = [16, 32], strides = [1, 1]} : vector<16x384xbf16> to vector<16x32xbf16>
    %cst = arith.constant dense<0.000000e+00> : vector<16x16xf32>
    %8 = tpu.matmul %5, %6, %cst {dimension_numbers = #tpu.dot_dimension_numbers<[1], [1], [0], [0], [0, 0, 1, 0], [], []>} : vector<16x32xbf16>, vector<16x32xbf16>, vector<16x16xf32> -> vector<16x16xf32>
    %cst_2 = arith.constant 0.176776692 : f32
    %9 = vector.broadcast %cst_2 : f32 to vector<16x16xf32>
    %10 = arith.mulf %8, %9 : vector<16x16xf32>
    %cst_3 = arith.constant -1.000000e+30 : f32
    %11 = vector.broadcast %cst_3 : f32 to vector<16x16xf32>
    %12 = arith.select %4, %10, %11 : vector<16x16xi1>, vector<16x16xf32>
    %cst_4 = arith.constant dense<0xFF800000> : vector<16xf32>
    %13 = vector.multi_reduction <maximumf>, %12, %cst_4 [1] : vector<16x16xf32> to vector<16xf32>
    %14 = vector.shape_cast %13 : vector<16xf32> to vector<16x1xf32>
    %15 = vector.broadcast %14 : vector<16x1xf32> to vector<16x16xf32>
    %16 = arith.subf %12, %15 : vector<16x16xf32>
    %17 = math.exp %16 : vector<16x16xf32>
    %cst_5 = arith.constant dense<0.000000e+00> : vector<16xf32>
    %18 = vector.multi_reduction <add>, %17, %cst_5 [1] : vector<16x16xf32> to vector<16xf32>
    %19 = vector.shape_cast %18 : vector<16xf32> to vector<16x1xf32>
    %20 = tpu.reciprocal %19 {approx = true} : vector<16x1xf32> -> vector<16x1xf32>
    %21 = vector.broadcast %20 : vector<16x1xf32> to vector<16x16xf32>
    %22 = arith.mulf %17, %21 : vector<16x16xf32>
    %23 = arith.truncf %22 : vector<16x16xf32> to vector<16x16xbf16>
    %cst_6 = arith.constant dense<0.000000e+00> : vector<16x32xf32>
    %24 = tpu.matmul %23, %7, %cst_6 {dimension_numbers = #tpu.dot_dimension_numbers<[1], [0], [0], [1], [0, 0, 1, 1], [], []>} : vector<16x16xbf16>, vector<16x32xbf16>, vector<16x32xf32> -> vector<16x32xf32>
    %25 = vector.extract_strided_slice %1 {offsets = [0, 32], sizes = [16, 32], strides = [1, 1]} : vector<16x384xbf16> to vector<16x32xbf16>
    %26 = vector.extract_strided_slice %1 {offsets = [0, 160], sizes = [16, 32], strides = [1, 1]} : vector<16x384xbf16> to vector<16x32xbf16>
    %27 = vector.extract_strided_slice %1 {offsets = [0, 288], sizes = [16, 32], strides = [1, 1]} : vector<16x384xbf16> to vector<16x32xbf16>
    %cst_7 = arith.constant dense<0.000000e+00> : vector<16x16xf32>
    %28 = tpu.matmul %25, %26, %cst_7 {dimension_numbers = #tpu.dot_dimension_numbers<[1], [1], [0], [0], [0, 0, 1, 0], [], []>} : vector<16x32xbf16>, vector<16x32xbf16>, vector<16x16xf32> -> vector<16x16xf32>
    %cst_8 = arith.constant 0.176776692 : f32
    %29 = vector.broadcast %cst_8 : f32 to vector<16x16xf32>
    %30 = arith.mulf %28, %29 : vector<16x16xf32>
    %cst_9 = arith.constant -1.000000e+30 : f32
    %31 = vector.broadcast %cst_9 : f32 to vector<16x16xf32>
    %32 = arith.select %4, %30, %31 : vector<16x16xi1>, vector<16x16xf32>
    %cst_10 = arith.constant dense<0xFF800000> : vector<16xf32>
    %33 = vector.multi_reduction <maximumf>, %32, %cst_10 [1] : vector<16x16xf32> to vector<16xf32>
    %34 = vector.shape_cast %33 : vector<16xf32> to vector<16x1xf32>
    %35 = vector.broadcast %34 : vector<16x1xf32> to vector<16x16xf32>
    %36 = arith.subf %32, %35 : vector<16x16xf32>
    %37 = math.exp %36 : vector<16x16xf32>
    %cst_11 = arith.constant dense<0.000000e+00> : vector<16xf32>
    %38 = vector.multi_reduction <add>, %37, %cst_11 [1] : vector<16x16xf32> to vector<16xf32>
    %39 = vector.shape_cast %38 : vector<16xf32> to vector<16x1xf32>
    %40 = tpu.reciprocal %39 {approx = true} : vector<16x1xf32> -> vector<16x1xf32>
    %41 = vector.broadcast %40 : vector<16x1xf32> to vector<16x16xf32>
    %42 = arith.mulf %37, %41 : vector<16x16xf32>
    %43 = arith.truncf %42 : vector<16x16xf32> to vector<16x16xbf16>
    %cst_12 = arith.constant dense<0.000000e+00> : vector<16x32xf32>
    %44 = tpu.matmul %43, %27, %cst_12 {dimension_numbers = #tpu.dot_dimension_numbers<[1], [0], [0], [1], [0, 0, 1, 1], [], []>} : vector<16x16xbf16>, vector<16x32xbf16>, vector<16x32xf32> -> vector<16x32xf32>
    %45 = vector.extract_strided_slice %1 {offsets = [0, 64], sizes = [16, 32], strides = [1, 1]} : vector<16x384xbf16> to vector<16x32xbf16>
    %46 = vector.extract_strided_slice %1 {offsets = [0, 192], sizes = [16, 32], strides = [1, 1]} : vector<16x384xbf16> to vector<16x32xbf16>
    %47 = vector.extract_strided_slice %1 {offsets = [0, 320], sizes = [16, 32], strides = [1, 1]} : vector<16x384xbf16> to vector<16x32xbf16>
    %cst_13 = arith.constant dense<0.000000e+00> : vector<16x16xf32>
    %48 = tpu.matmul %45, %46, %cst_13 {dimension_numbers = #tpu.dot_dimension_numbers<[1], [1], [0], [0], [0, 0, 1, 0], [], []>} : vector<16x32xbf16>, vector<16x32xbf16>, vector<16x16xf32> -> vector<16x16xf32>
    %cst_14 = arith.constant 0.176776692 : f32
    %49 = vector.broadcast %cst_14 : f32 to vector<16x16xf32>
    %50 = arith.mulf %48, %49 : vector<16x16xf32>
    %cst_15 = arith.constant -1.000000e+30 : f32
    %51 = vector.broadcast %cst_15 : f32 to vector<16x16xf32>
    %52 = arith.select %4, %50, %51 : vector<16x16xi1>, vector<16x16xf32>
    %cst_16 = arith.constant dense<0xFF800000> : vector<16xf32>
    %53 = vector.multi_reduction <maximumf>, %52, %cst_16 [1] : vector<16x16xf32> to vector<16xf32>
    %54 = vector.shape_cast %53 : vector<16xf32> to vector<16x1xf32>
    %55 = vector.broadcast %54 : vector<16x1xf32> to vector<16x16xf32>
    %56 = arith.subf %52, %55 : vector<16x16xf32>
    %57 = math.exp %56 : vector<16x16xf32>
    %cst_17 = arith.constant dense<0.000000e+00> : vector<16xf32>
    %58 = vector.multi_reduction <add>, %57, %cst_17 [1] : vector<16x16xf32> to vector<16xf32>
    %59 = vector.shape_cast %58 : vector<16xf32> to vector<16x1xf32>
    %60 = tpu.reciprocal %59 {approx = true} : vector<16x1xf32> -> vector<16x1xf32>
    %61 = vector.broadcast %60 : vector<16x1xf32> to vector<16x16xf32>
    %62 = arith.mulf %57, %61 : vector<16x16xf32>
    %63 = arith.truncf %62 : vector<16x16xf32> to vector<16x16xbf16>
    %cst_18 = arith.constant dense<0.000000e+00> : vector<16x32xf32>
    %64 = tpu.matmul %63, %47, %cst_18 {dimension_numbers = #tpu.dot_dimension_numbers<[1], [0], [0], [1], [0, 0, 1, 1], [], []>} : vector<16x16xbf16>, vector<16x32xbf16>, vector<16x32xf32> -> vector<16x32xf32>
    %65 = vector.extract_strided_slice %1 {offsets = [0, 96], sizes = [16, 32], strides = [1, 1]} : vector<16x384xbf16> to vector<16x32xbf16>
    %66 = vector.extract_strided_slice %1 {offsets = [0, 224], sizes = [16, 32], strides = [1, 1]} : vector<16x384xbf16> to vector<16x32xbf16>
    %67 = vector.extract_strided_slice %1 {offsets = [0, 352], sizes = [16, 32], strides = [1, 1]} : vector<16x384xbf16> to vector<16x32xbf16>
    %cst_19 = arith.constant dense<0.000000e+00> : vector<16x16xf32>
    %68 = tpu.matmul %65, %66, %cst_19 {dimension_numbers = #tpu.dot_dimension_numbers<[1], [1], [0], [0], [0, 0, 1, 0], [], []>} : vector<16x32xbf16>, vector<16x32xbf16>, vector<16x16xf32> -> vector<16x16xf32>
    %cst_20 = arith.constant 0.176776692 : f32
    %69 = vector.broadcast %cst_20 : f32 to vector<16x16xf32>
    %70 = arith.mulf %68, %69 : vector<16x16xf32>
    %cst_21 = arith.constant -1.000000e+30 : f32
    %71 = vector.broadcast %cst_21 : f32 to vector<16x16xf32>
    %72 = arith.select %4, %70, %71 : vector<16x16xi1>, vector<16x16xf32>
    %cst_22 = arith.constant dense<0xFF800000> : vector<16xf32>
    %73 = vector.multi_reduction <maximumf>, %72, %cst_22 [1] : vector<16x16xf32> to vector<16xf32>
    %74 = vector.shape_cast %73 : vector<16xf32> to vector<16x1xf32>
    %75 = vector.broadcast %74 : vector<16x1xf32> to vector<16x16xf32>
    %76 = arith.subf %72, %75 : vector<16x16xf32>
    %77 = math.exp %76 : vector<16x16xf32>
    %cst_23 = arith.constant dense<0.000000e+00> : vector<16xf32>
    %78 = vector.multi_reduction <add>, %77, %cst_23 [1] : vector<16x16xf32> to vector<16xf32>
    %79 = vector.shape_cast %78 : vector<16xf32> to vector<16x1xf32>
    %80 = tpu.reciprocal %79 {approx = true} : vector<16x1xf32> -> vector<16x1xf32>
    %81 = vector.broadcast %80 : vector<16x1xf32> to vector<16x16xf32>
    %82 = arith.mulf %77, %81 : vector<16x16xf32>
    %83 = arith.truncf %82 : vector<16x16xf32> to vector<16x16xbf16>
    %cst_24 = arith.constant dense<0.000000e+00> : vector<16x32xf32>
    %84 = tpu.matmul %83, %67, %cst_24 {dimension_numbers = #tpu.dot_dimension_numbers<[1], [0], [0], [1], [0, 0, 1, 1], [], []>} : vector<16x16xbf16>, vector<16x32xbf16>, vector<16x32xf32> -> vector<16x32xf32>
    %85 = tpu.concatenate %24, %44, %64, %84 in 1 : vector<16x32xf32>, vector<16x32xf32>, vector<16x32xf32>, vector<16x32xf32> -> vector<16x128xf32>
    %86 = arith.truncf %85 : vector<16x128xf32> to vector<16x128xbf16>
    %c0_25 = arith.constant 0 : index
    %c0_26 = arith.constant 0 : index
    %c0_27 = arith.constant 0 : index
    %87 = vector.load %arg2[%c0_25, %c0_26, %c0_27] : memref<1x16x128xbf16, #tpu.memory_space<vmem>>, vector<1x16x128xbf16>
    %88 = vector.shape_cast %87 : vector<1x16x128xbf16> to vector<16x128xbf16>
    %89 = vector.shape_cast %86 : vector<16x128xbf16> to vector<1x16x128xbf16>
    tpu.vector_store %arg2[%c0_25, %c0_26, %c0_27], %89 {strides = array<i32>} : memref<1x16x128xbf16, #tpu.memory_space<vmem>>, vector<1x16x128xbf16>,
    return
  }
  func.func @transform_0(%arg0: i32) -> (i32, i32, i32) {
    %c0_i32 = arith.constant 0 : i32
    %c0_i32_0 = arith.constant 0 : i32
    %c0_i32_1 = arith.constant 0 : i32
    return %arg0, %c0_i32, %c0_i32_0 : i32, i32, i32
  }
  func.func @transform_1(%arg0: i32) -> (i32, i32, i32) {
    %c0_i32 = arith.constant 0 : i32
    %c0_i32_0 = arith.constant 0 : i32
    %c0_i32_1 = arith.constant 0 : i32
    return %arg0, %c0_i32, %c0_i32_0 : i32, i32, i32
  }
}

module attributes {stable_mosaic.version = 11 : i64} {
  func.func @_ln_linear_kernel(%arg0: i32, %arg1: i32, %arg2: memref<32x128xbf16, #tpu.memory_space<vmem>>, %arg3: memref<1x128xf32, #tpu.memory_space<vmem>>, %arg4: memref<1x128xf32, #tpu.memory_space<vmem>>, %arg5: memref<128x384xbf16, #tpu.memory_space<vmem>>, %arg6: memref<1x384xf32, #tpu.memory_space<vmem>>, %arg7: memref<32x384xbf16, #tpu.memory_space<vmem>>, %arg8: memref<32x128xbf16, #tpu.memory_space<vmem>>) attributes {dimension_semantics = [#tpu.dimension_semantics<parallel>, #tpu.dimension_semantics<arbitrary>], iteration_bounds = array<i64: 1, 1>, scalar_prefetch = 0 : i64, scratch_operands = 1 : i64, tpu.core_type = #tpu.core_type<tc>, window_params = [{transform_indices = @transform_0, window_bounds = array<i64: 32, 128>}, {pipeline_mode = #tpu.pipeline_mode<synchronous>, transform_indices = @transform_1, window_bounds = array<i64: 1, 128>}, {pipeline_mode = #tpu.pipeline_mode<synchronous>, transform_indices = @transform_2, window_bounds = array<i64: 1, 128>}, {transform_indices = @transform_3, window_bounds = array<i64: 128, 384>}, {transform_indices = @transform_4, window_bounds = array<i64: 1, 384>}, {transform_indices = @transform_5, window_bounds = array<i64: 32, 384>}]} {
    %c0_i32 = arith.constant 0 : i32
    %0 = arith.cmpi eq, %arg1, %c0_i32 : i32
    %1 = arith.extui %0 : i1 to i32
    %c0_i32_0 = arith.constant 0 : i32
    %2 = arith.cmpi ne, %1, %c0_i32_0 : i32
    scf.if %2 {
      %c0_8 = arith.constant 0 : index
      %c0_9 = arith.constant 0 : index
      %11 = vector.load %arg2[%c0_8, %c0_9] : memref<32x128xbf16, #tpu.memory_space<vmem>>, vector<32x128xbf16>
      %12 = arith.extf %11 : vector<32x128xbf16> to vector<32x128xf32>
      %cst_10 = arith.constant dense<0.000000e+00> : vector<32xf32>
      %13 = vector.multi_reduction <add>, %12, %cst_10 [1] : vector<32x128xf32> to vector<32xf32>
      %14 = vector.shape_cast %13 : vector<32xf32> to vector<32x1xf32>
      %cst_11 = arith.constant 1.280000e+02 : f32
      %15 = vector.broadcast %cst_11 : f32 to vector<32x1xf32>
      %16 = arith.divf %14, %15 : vector<32x1xf32>
      %17 = vector.broadcast %16 : vector<32x1xf32> to vector<32x128xf32>
      %18 = arith.subf %12, %17 : vector<32x128xf32>
      %19 = arith.mulf %18, %18 : vector<32x128xf32>
      %cst_12 = arith.constant dense<0.000000e+00> : vector<32xf32>
      %20 = vector.multi_reduction <add>, %19, %cst_12 [1] : vector<32x128xf32> to vector<32xf32>
      %21 = vector.shape_cast %20 : vector<32xf32> to vector<32x1xf32>
      %cst_13 = arith.constant 1.280000e+02 : f32
      %22 = vector.broadcast %cst_13 : f32 to vector<32x1xf32>
      %23 = arith.divf %21, %22 : vector<32x1xf32>
      %24 = vector.broadcast %16 : vector<32x1xf32> to vector<32x128xf32>
      %25 = arith.subf %12, %24 : vector<32x128xf32>
      %cst_14 = arith.constant 9.99999997E-7 : f32
      %26 = vector.broadcast %cst_14 : f32 to vector<32x1xf32>
      %27 = arith.addf %23, %26 : vector<32x1xf32>
      %28 = math.rsqrt %27 : vector<32x1xf32>
      %29 = vector.broadcast %28 : vector<32x1xf32> to vector<32x128xf32>
      %30 = arith.mulf %25, %29 : vector<32x128xf32>
      %c0_15 = arith.constant 0 : index
      %c0_16 = arith.constant 0 : index
      %31 = vector.load %arg3[%c0_15, %c0_16] : memref<1x128xf32, #tpu.memory_space<vmem>>, vector<1x128xf32>
      %32 = vector.broadcast %31 : vector<1x128xf32> to vector<32x128xf32>
      %33 = arith.mulf %30, %32 : vector<32x128xf32>
      %c0_17 = arith.constant 0 : index
      %c0_18 = arith.constant 0 : index
      %34 = vector.load %arg4[%c0_17, %c0_18] : memref<1x128xf32, #tpu.memory_space<vmem>>, vector<1x128xf32>
      %35 = vector.broadcast %34 : vector<1x128xf32> to vector<32x128xf32>
      %36 = arith.addf %33, %35 : vector<32x128xf32>
      %37 = arith.truncf %36 : vector<32x128xf32> to vector<32x128xbf16>
      %c0_19 = arith.constant 0 : index
      %c0_20 = arith.constant 0 : index
      %38 = vector.load %arg8[%c0_19, %c0_20] : memref<32x128xbf16, #tpu.memory_space<vmem>>, vector<32x128xbf16>
      tpu.vector_store %arg8[%c0_19, %c0_20], %37 {strides = array<i32>} : memref<32x128xbf16, #tpu.memory_space<vmem>>, vector<32x128xbf16>,
    } else {
    }
    %c0 = arith.constant 0 : index
    %c0_1 = arith.constant 0 : index
    %3 = vector.load %arg8[%c0, %c0_1] : memref<32x128xbf16, #tpu.memory_space<vmem>>, vector<32x128xbf16>
    %c0_2 = arith.constant 0 : index
    %c0_3 = arith.constant 0 : index
    %4 = vector.load %arg5[%c0_2, %c0_3] : memref<128x384xbf16, #tpu.memory_space<vmem>>, vector<128x384xbf16>
    %cst = arith.constant dense<0.000000e+00> : vector<32x384xf32>
    %5 = tpu.matmul %3, %4, %cst {dimension_numbers = #tpu.dot_dimension_numbers<[1], [0], [0], [1], [0, 0, 1, 1], [], []>} : vector<32x128xbf16>, vector<128x384xbf16>, vector<32x384xf32> -> vector<32x384xf32>
    %c0_4 = arith.constant 0 : index
    %c0_5 = arith.constant 0 : index
    %6 = vector.load %arg6[%c0_4, %c0_5] : memref<1x384xf32, #tpu.memory_space<vmem>>, vector<1x384xf32>
    %7 = vector.broadcast %6 : vector<1x384xf32> to vector<32x384xf32>
    %8 = arith.addf %5, %7 : vector<32x384xf32>
    %9 = arith.truncf %8 : vector<32x384xf32> to vector<32x384xbf16>
    %c0_6 = arith.constant 0 : index
    %c0_7 = arith.constant 0 : index
    %10 = vector.load %arg7[%c0_6, %c0_7] : memref<32x384xbf16, #tpu.memory_space<vmem>>, vector<32x384xbf16>
    tpu.vector_store %arg7[%c0_6, %c0_7], %9 {strides = array<i32>} : memref<32x384xbf16, #tpu.memory_space<vmem>>, vector<32x384xbf16>,
    return
  }
  func.func @transform_0(%arg0: i32, %arg1: i32) -> (i32, i32) {
    %c0_i32 = arith.constant 0 : i32
    %c0_i32_0 = arith.constant 0 : i32
    return %arg0, %c0_i32 : i32, i32
  }
  func.func @transform_1(%arg0: i32, %arg1: i32) -> (i32, i32) {
    %c0_i32 = arith.constant 0 : i32
    %c0_i32_0 = arith.constant 0 : i32
    %c0_i32_1 = arith.constant 0 : i32
    return %c0_i32, %c0_i32_0 : i32, i32
  }
  func.func @transform_2(%arg0: i32, %arg1: i32) -> (i32, i32) {
    %c0_i32 = arith.constant 0 : i32
    %c0_i32_0 = arith.constant 0 : i32
    %c0_i32_1 = arith.constant 0 : i32
    return %c0_i32, %c0_i32_0 : i32, i32
  }
  func.func @transform_3(%arg0: i32, %arg1: i32) -> (i32, i32) {
    %c0_i32 = arith.constant 0 : i32
    %c0_i32_0 = arith.constant 0 : i32
    return %c0_i32, %arg1 : i32, i32
  }
  func.func @transform_4(%arg0: i32, %arg1: i32) -> (i32, i32) {
    %c0_i32 = arith.constant 0 : i32
    %c0_i32_0 = arith.constant 0 : i32
    return %c0_i32, %arg1 : i32, i32
  }
  func.func @transform_5(%arg0: i32, %arg1: i32) -> (i32, i32) {
    %c0_i32 = arith.constant 0 : i32
    return %arg0, %arg1 : i32, i32
  }
}

module attributes {stable_mosaic.version = 11 : i64} {
  func.func @_linear_residual_kernel(%arg0: i32, %arg1: i32, %arg2: i32, %arg3: memref<32x128xbf16, #tpu.memory_space<vmem>>, %arg4: memref<128x128xbf16, #tpu.memory_space<vmem>>, %arg5: memref<1x128xf32, #tpu.memory_space<vmem>>, %arg6: memref<32x128xbf16, #tpu.memory_space<vmem>>, %arg7: memref<32x128xbf16, #tpu.memory_space<vmem>>, %arg8: memref<32x128xf32, #tpu.memory_space<vmem>>) attributes {dimension_semantics = [#tpu.dimension_semantics<parallel>, #tpu.dimension_semantics<parallel>, #tpu.dimension_semantics<arbitrary>], iteration_bounds = array<i64: 1, 1, 1>, scalar_prefetch = 0 : i64, scratch_operands = 1 : i64, tpu.core_type = #tpu.core_type<tc>, window_params = [{transform_indices = @transform_0, window_bounds = array<i64: 32, 128>}, {transform_indices = @transform_1, window_bounds = array<i64: 128, 128>}, {transform_indices = @transform_2, window_bounds = array<i64: 1, 128>}, {transform_indices = @transform_3, window_bounds = array<i64: 32, 128>}, {transform_indices = @transform_4, window_bounds = array<i64: 32, 128>}]} {
    %c0_i32 = arith.constant 0 : i32
    %0 = arith.cmpi eq, %arg2, %c0_i32 : i32
    %1 = arith.extui %0 : i1 to i32
    %c0_i32_0 = arith.constant 0 : i32
    %2 = arith.cmpi ne, %1, %c0_i32_0 : i32
    scf.if %2 {
      %cst_10 = arith.constant 0.000000e+00 : f32
      %12 = vector.broadcast %cst_10 : f32 to vector<32x128xf32>
      %c0_11 = arith.constant 0 : index
      %c0_12 = arith.constant 0 : index
      %13 = vector.load %arg8[%c0_11, %c0_12] : memref<32x128xf32, #tpu.memory_space<vmem>>, vector<32x128xf32>
      tpu.vector_store %arg8[%c0_11, %c0_12], %12 {strides = array<i32>} : memref<32x128xf32, #tpu.memory_space<vmem>>, vector<32x128xf32>,
    } else {
    }
    %c0 = arith.constant 0 : index
    %c0_1 = arith.constant 0 : index
    %3 = vector.load %arg8[%c0, %c0_1] : memref<32x128xf32, #tpu.memory_space<vmem>>, vector<32x128xf32>
    %c0_2 = arith.constant 0 : index
    %c0_3 = arith.constant 0 : index
    %4 = vector.load %arg3[%c0_2, %c0_3] : memref<32x128xbf16, #tpu.memory_space<vmem>>, vector<32x128xbf16>
    %c0_4 = arith.constant 0 : index
    %c0_5 = arith.constant 0 : index
    %5 = vector.load %arg4[%c0_4, %c0_5] : memref<128x128xbf16, #tpu.memory_space<vmem>>, vector<128x128xbf16>
    %cst = arith.constant dense<0.000000e+00> : vector<32x128xf32>
    %6 = tpu.matmul %4, %5, %cst {dimension_numbers = #tpu.dot_dimension_numbers<[1], [0], [0], [1], [0, 0, 1, 1], [], []>} : vector<32x128xbf16>, vector<128x128xbf16>, vector<32x128xf32> -> vector<32x128xf32>
    %7 = arith.addf %3, %6 : vector<32x128xf32>
    %c0_6 = arith.constant 0 : index
    %c0_7 = arith.constant 0 : index
    %8 = vector.load %arg8[%c0_6, %c0_7] : memref<32x128xf32, #tpu.memory_space<vmem>>, vector<32x128xf32>
    tpu.vector_store %arg8[%c0_6, %c0_7], %7 {strides = array<i32>} : memref<32x128xf32, #tpu.memory_space<vmem>>, vector<32x128xf32>,
    %c0_i32_8 = arith.constant 0 : i32
    %9 = arith.cmpi eq, %arg2, %c0_i32_8 : i32
    %10 = arith.extui %9 : i1 to i32
    %c0_i32_9 = arith.constant 0 : i32
    %11 = arith.cmpi ne, %10, %c0_i32_9 : i32
    scf.if %11 {
      %c0_10 = arith.constant 0 : index
      %c0_11 = arith.constant 0 : index
      %12 = vector.load %arg8[%c0_10, %c0_11] : memref<32x128xf32, #tpu.memory_space<vmem>>, vector<32x128xf32>
      %c0_12 = arith.constant 0 : index
      %c0_13 = arith.constant 0 : index
      %13 = vector.load %arg5[%c0_12, %c0_13] : memref<1x128xf32, #tpu.memory_space<vmem>>, vector<1x128xf32>
      %14 = vector.broadcast %13 : vector<1x128xf32> to vector<32x128xf32>
      %15 = arith.addf %12, %14 : vector<32x128xf32>
      %c0_14 = arith.constant 0 : index
      %c0_15 = arith.constant 0 : index
      %16 = vector.load %arg6[%c0_14, %c0_15] : memref<32x128xbf16, #tpu.memory_space<vmem>>, vector<32x128xbf16>
      %17 = arith.extf %16 : vector<32x128xbf16> to vector<32x128xf32>
      %18 = arith.addf %15, %17 : vector<32x128xf32>
      %19 = arith.truncf %18 : vector<32x128xf32> to vector<32x128xbf16>
      %c0_16 = arith.constant 0 : index
      %c0_17 = arith.constant 0 : index
      %20 = vector.load %arg7[%c0_16, %c0_17] : memref<32x128xbf16, #tpu.memory_space<vmem>>, vector<32x128xbf16>
      tpu.vector_store %arg7[%c0_16, %c0_17], %19 {strides = array<i32>} : memref<32x128xbf16, #tpu.memory_space<vmem>>, vector<32x128xbf16>,
    } else {
    }
    return
  }
  func.func @transform_0(%arg0: i32, %arg1: i32, %arg2: i32) -> (i32, i32) {
    %c0_i32 = arith.constant 0 : i32
    return %arg0, %arg2 : i32, i32
  }
  func.func @transform_1(%arg0: i32, %arg1: i32, %arg2: i32) -> (i32, i32) {
    %c0_i32 = arith.constant 0 : i32
    return %arg2, %arg1 : i32, i32
  }
  func.func @transform_2(%arg0: i32, %arg1: i32, %arg2: i32) -> (i32, i32) {
    %c0_i32 = arith.constant 0 : i32
    %c0_i32_0 = arith.constant 0 : i32
    return %c0_i32, %arg1 : i32, i32
  }
  func.func @transform_3(%arg0: i32, %arg1: i32, %arg2: i32) -> (i32, i32) {
    %c0_i32 = arith.constant 0 : i32
    return %arg0, %arg1 : i32, i32
  }
  func.func @transform_4(%arg0: i32, %arg1: i32, %arg2: i32) -> (i32, i32) {
    %c0_i32 = arith.constant 0 : i32
    return %arg0, %arg1 : i32, i32
  }
}

module attributes {stable_mosaic.version = 11 : i64} {
  func.func @_ln_linear_kernel(%arg0: i32, %arg1: i32, %arg2: memref<32x128xbf16, #tpu.memory_space<vmem>>, %arg3: memref<1x128xf32, #tpu.memory_space<vmem>>, %arg4: memref<1x128xf32, #tpu.memory_space<vmem>>, %arg5: memref<128x512xbf16, #tpu.memory_space<vmem>>, %arg6: memref<1x512xf32, #tpu.memory_space<vmem>>, %arg7: memref<32x512xbf16, #tpu.memory_space<vmem>>, %arg8: memref<32x128xbf16, #tpu.memory_space<vmem>>) attributes {dimension_semantics = [#tpu.dimension_semantics<parallel>, #tpu.dimension_semantics<arbitrary>], iteration_bounds = array<i64: 1, 1>, scalar_prefetch = 0 : i64, scratch_operands = 1 : i64, tpu.core_type = #tpu.core_type<tc>, window_params = [{transform_indices = @transform_0, window_bounds = array<i64: 32, 128>}, {pipeline_mode = #tpu.pipeline_mode<synchronous>, transform_indices = @transform_1, window_bounds = array<i64: 1, 128>}, {pipeline_mode = #tpu.pipeline_mode<synchronous>, transform_indices = @transform_2, window_bounds = array<i64: 1, 128>}, {transform_indices = @transform_3, window_bounds = array<i64: 128, 512>}, {transform_indices = @transform_4, window_bounds = array<i64: 1, 512>}, {transform_indices = @transform_5, window_bounds = array<i64: 32, 512>}]} {
    %c0_i32 = arith.constant 0 : i32
    %0 = arith.cmpi eq, %arg1, %c0_i32 : i32
    %1 = arith.extui %0 : i1 to i32
    %c0_i32_0 = arith.constant 0 : i32
    %2 = arith.cmpi ne, %1, %c0_i32_0 : i32
    scf.if %2 {
      %c0_12 = arith.constant 0 : index
      %c0_13 = arith.constant 0 : index
      %24 = vector.load %arg2[%c0_12, %c0_13] : memref<32x128xbf16, #tpu.memory_space<vmem>>, vector<32x128xbf16>
      %25 = arith.extf %24 : vector<32x128xbf16> to vector<32x128xf32>
      %cst_14 = arith.constant dense<0.000000e+00> : vector<32xf32>
      %26 = vector.multi_reduction <add>, %25, %cst_14 [1] : vector<32x128xf32> to vector<32xf32>
      %27 = vector.shape_cast %26 : vector<32xf32> to vector<32x1xf32>
      %cst_15 = arith.constant 1.280000e+02 : f32
      %28 = vector.broadcast %cst_15 : f32 to vector<32x1xf32>
      %29 = arith.divf %27, %28 : vector<32x1xf32>
      %30 = vector.broadcast %29 : vector<32x1xf32> to vector<32x128xf32>
      %31 = arith.subf %25, %30 : vector<32x128xf32>
      %32 = arith.mulf %31, %31 : vector<32x128xf32>
      %cst_16 = arith.constant dense<0.000000e+00> : vector<32xf32>
      %33 = vector.multi_reduction <add>, %32, %cst_16 [1] : vector<32x128xf32> to vector<32xf32>
      %34 = vector.shape_cast %33 : vector<32xf32> to vector<32x1xf32>
      %cst_17 = arith.constant 1.280000e+02 : f32
      %35 = vector.broadcast %cst_17 : f32 to vector<32x1xf32>
      %36 = arith.divf %34, %35 : vector<32x1xf32>
      %37 = vector.broadcast %29 : vector<32x1xf32> to vector<32x128xf32>
      %38 = arith.subf %25, %37 : vector<32x128xf32>
      %cst_18 = arith.constant 9.99999997E-7 : f32
      %39 = vector.broadcast %cst_18 : f32 to vector<32x1xf32>
      %40 = arith.addf %36, %39 : vector<32x1xf32>
      %41 = math.rsqrt %40 : vector<32x1xf32>
      %42 = vector.broadcast %41 : vector<32x1xf32> to vector<32x128xf32>
      %43 = arith.mulf %38, %42 : vector<32x128xf32>
      %c0_19 = arith.constant 0 : index
      %c0_20 = arith.constant 0 : index
      %44 = vector.load %arg3[%c0_19, %c0_20] : memref<1x128xf32, #tpu.memory_space<vmem>>, vector<1x128xf32>
      %45 = vector.broadcast %44 : vector<1x128xf32> to vector<32x128xf32>
      %46 = arith.mulf %43, %45 : vector<32x128xf32>
      %c0_21 = arith.constant 0 : index
      %c0_22 = arith.constant 0 : index
      %47 = vector.load %arg4[%c0_21, %c0_22] : memref<1x128xf32, #tpu.memory_space<vmem>>, vector<1x128xf32>
      %48 = vector.broadcast %47 : vector<1x128xf32> to vector<32x128xf32>
      %49 = arith.addf %46, %48 : vector<32x128xf32>
      %50 = arith.truncf %49 : vector<32x128xf32> to vector<32x128xbf16>
      %c0_23 = arith.constant 0 : index
      %c0_24 = arith.constant 0 : index
      %51 = vector.load %arg8[%c0_23, %c0_24] : memref<32x128xbf16, #tpu.memory_space<vmem>>, vector<32x128xbf16>
      tpu.vector_store %arg8[%c0_23, %c0_24], %50 {strides = array<i32>} : memref<32x128xbf16, #tpu.memory_space<vmem>>, vector<32x128xbf16>,
    } else {
    }
    %c0 = arith.constant 0 : index
    %c0_1 = arith.constant 0 : index
    %3 = vector.load %arg8[%c0, %c0_1] : memref<32x128xbf16, #tpu.memory_space<vmem>>, vector<32x128xbf16>
    %c0_2 = arith.constant 0 : index
    %c0_3 = arith.constant 0 : index
    %4 = vector.load %arg5[%c0_2, %c0_3] : memref<128x512xbf16, #tpu.memory_space<vmem>>, vector<128x512xbf16>
    %cst = arith.constant dense<0.000000e+00> : vector<32x512xf32>
    %5 = tpu.matmul %3, %4, %cst {dimension_numbers = #tpu.dot_dimension_numbers<[1], [0], [0], [1], [0, 0, 1, 1], [], []>} : vector<32x128xbf16>, vector<128x512xbf16>, vector<32x512xf32> -> vector<32x512xf32>
    %c0_4 = arith.constant 0 : index
    %c0_5 = arith.constant 0 : index
    %6 = vector.load %arg6[%c0_4, %c0_5] : memref<1x512xf32, #tpu.memory_space<vmem>>, vector<1x512xf32>
    %7 = vector.broadcast %6 : vector<1x512xf32> to vector<32x512xf32>
    %8 = arith.addf %5, %7 : vector<32x512xf32>
    %9 = arith.mulf %8, %8 : vector<32x512xf32>
    %10 = arith.mulf %8, %9 : vector<32x512xf32>
    %cst_6 = arith.constant 4.471500e-02 : f32
    %11 = vector.broadcast %cst_6 : f32 to vector<32x512xf32>
    %12 = arith.mulf %11, %10 : vector<32x512xf32>
    %13 = arith.addf %8, %12 : vector<32x512xf32>
    %cst_7 = arith.constant 0.797884583 : f32
    %14 = vector.broadcast %cst_7 : f32 to vector<32x512xf32>
    %15 = arith.mulf %14, %13 : vector<32x512xf32>
    %16 = math.tanh %15 : vector<32x512xf32>
    %cst_8 = arith.constant 1.000000e+00 : f32
    %17 = vector.broadcast %cst_8 : f32 to vector<32x512xf32>
    %18 = arith.addf %17, %16 : vector<32x512xf32>
    %cst_9 = arith.constant 5.000000e-01 : f32
    %19 = vector.broadcast %cst_9 : f32 to vector<32x512xf32>
    %20 = arith.mulf %19, %18 : vector<32x512xf32>
    %21 = arith.mulf %8, %20 : vector<32x512xf32>
    %22 = arith.truncf %21 : vector<32x512xf32> to vector<32x512xbf16>
    %c0_10 = arith.constant 0 : index
    %c0_11 = arith.constant 0 : index
    %23 = vector.load %arg7[%c0_10, %c0_11] : memref<32x512xbf16, #tpu.memory_space<vmem>>, vector<32x512xbf16>
    tpu.vector_store %arg7[%c0_10, %c0_11], %22 {strides = array<i32>} : memref<32x512xbf16, #tpu.memory_space<vmem>>, vector<32x512xbf16>,
    return
  }
  func.func @transform_0(%arg0: i32, %arg1: i32) -> (i32, i32) {
    %c0_i32 = arith.constant 0 : i32
    %c0_i32_0 = arith.constant 0 : i32
    return %arg0, %c0_i32 : i32, i32
  }
  func.func @transform_1(%arg0: i32, %arg1: i32) -> (i32, i32) {
    %c0_i32 = arith.constant 0 : i32
    %c0_i32_0 = arith.constant 0 : i32
    %c0_i32_1 = arith.constant 0 : i32
    return %c0_i32, %c0_i32_0 : i32, i32
  }
  func.func @transform_2(%arg0: i32, %arg1: i32) -> (i32, i32) {
    %c0_i32 = arith.constant 0 : i32
    %c0_i32_0 = arith.constant 0 : i32
    %c0_i32_1 = arith.constant 0 : i32
    return %c0_i32, %c0_i32_0 : i32, i32
  }
  func.func @transform_3(%arg0: i32, %arg1: i32) -> (i32, i32) {
    %c0_i32 = arith.constant 0 : i32
    %c0_i32_0 = arith.constant 0 : i32
    return %c0_i32, %arg1 : i32, i32
  }
  func.func @transform_4(%arg0: i32, %arg1: i32) -> (i32, i32) {
    %c0_i32 = arith.constant 0 : i32
    %c0_i32_0 = arith.constant 0 : i32
    return %c0_i32, %arg1 : i32, i32
  }
  func.func @transform_5(%arg0: i32, %arg1: i32) -> (i32, i32) {
    %c0_i32 = arith.constant 0 : i32
    return %arg0, %arg1 : i32, i32
  }
}

module attributes {stable_mosaic.version = 11 : i64} {
  func.func @_linear_residual_kernel(%arg0: i32, %arg1: i32, %arg2: i32, %arg3: memref<32x512xbf16, #tpu.memory_space<vmem>>, %arg4: memref<512x128xbf16, #tpu.memory_space<vmem>>, %arg5: memref<1x128xf32, #tpu.memory_space<vmem>>, %arg6: memref<32x128xbf16, #tpu.memory_space<vmem>>, %arg7: memref<32x128xbf16, #tpu.memory_space<vmem>>, %arg8: memref<32x128xf32, #tpu.memory_space<vmem>>) attributes {dimension_semantics = [#tpu.dimension_semantics<parallel>, #tpu.dimension_semantics<parallel>, #tpu.dimension_semantics<arbitrary>], iteration_bounds = array<i64: 1, 1, 1>, scalar_prefetch = 0 : i64, scratch_operands = 1 : i64, tpu.core_type = #tpu.core_type<tc>, window_params = [{transform_indices = @transform_0, window_bounds = array<i64: 32, 512>}, {transform_indices = @transform_1, window_bounds = array<i64: 512, 128>}, {transform_indices = @transform_2, window_bounds = array<i64: 1, 128>}, {transform_indices = @transform_3, window_bounds = array<i64: 32, 128>}, {transform_indices = @transform_4, window_bounds = array<i64: 32, 128>}]} {
    %c0_i32 = arith.constant 0 : i32
    %0 = arith.cmpi eq, %arg2, %c0_i32 : i32
    %1 = arith.extui %0 : i1 to i32
    %c0_i32_0 = arith.constant 0 : i32
    %2 = arith.cmpi ne, %1, %c0_i32_0 : i32
    scf.if %2 {
      %cst_10 = arith.constant 0.000000e+00 : f32
      %12 = vector.broadcast %cst_10 : f32 to vector<32x128xf32>
      %c0_11 = arith.constant 0 : index
      %c0_12 = arith.constant 0 : index
      %13 = vector.load %arg8[%c0_11, %c0_12] : memref<32x128xf32, #tpu.memory_space<vmem>>, vector<32x128xf32>
      tpu.vector_store %arg8[%c0_11, %c0_12], %12 {strides = array<i32>} : memref<32x128xf32, #tpu.memory_space<vmem>>, vector<32x128xf32>,
    } else {
    }
    %c0 = arith.constant 0 : index
    %c0_1 = arith.constant 0 : index
    %3 = vector.load %arg8[%c0, %c0_1] : memref<32x128xf32, #tpu.memory_space<vmem>>, vector<32x128xf32>
    %c0_2 = arith.constant 0 : index
    %c0_3 = arith.constant 0 : index
    %4 = vector.load %arg3[%c0_2, %c0_3] : memref<32x512xbf16, #tpu.memory_space<vmem>>, vector<32x512xbf16>
    %c0_4 = arith.constant 0 : index
    %c0_5 = arith.constant 0 : index
    %5 = vector.load %arg4[%c0_4, %c0_5] : memref<512x128xbf16, #tpu.memory_space<vmem>>, vector<512x128xbf16>
    %cst = arith.constant dense<0.000000e+00> : vector<32x128xf32>
    %6 = tpu.matmul %4, %5, %cst {dimension_numbers = #tpu.dot_dimension_numbers<[1], [0], [0], [1], [0, 0, 1, 1], [], []>} : vector<32x512xbf16>, vector<512x128xbf16>, vector<32x128xf32> -> vector<32x128xf32>
    %7 = arith.addf %3, %6 : vector<32x128xf32>
    %c0_6 = arith.constant 0 : index
    %c0_7 = arith.constant 0 : index
    %8 = vector.load %arg8[%c0_6, %c0_7] : memref<32x128xf32, #tpu.memory_space<vmem>>, vector<32x128xf32>
    tpu.vector_store %arg8[%c0_6, %c0_7], %7 {strides = array<i32>} : memref<32x128xf32, #tpu.memory_space<vmem>>, vector<32x128xf32>,
    %c0_i32_8 = arith.constant 0 : i32
    %9 = arith.cmpi eq, %arg2, %c0_i32_8 : i32
    %10 = arith.extui %9 : i1 to i32
    %c0_i32_9 = arith.constant 0 : i32
    %11 = arith.cmpi ne, %10, %c0_i32_9 : i32
    scf.if %11 {
      %c0_10 = arith.constant 0 : index
      %c0_11 = arith.constant 0 : index
      %12 = vector.load %arg8[%c0_10, %c0_11] : memref<32x128xf32, #tpu.memory_space<vmem>>, vector<32x128xf32>
      %c0_12 = arith.constant 0 : index
      %c0_13 = arith.constant 0 : index
      %13 = vector.load %arg5[%c0_12, %c0_13] : memref<1x128xf32, #tpu.memory_space<vmem>>, vector<1x128xf32>
      %14 = vector.broadcast %13 : vector<1x128xf32> to vector<32x128xf32>
      %15 = arith.addf %12, %14 : vector<32x128xf32>
      %c0_14 = arith.constant 0 : index
      %c0_15 = arith.constant 0 : index
      %16 = vector.load %arg6[%c0_14, %c0_15] : memref<32x128xbf16, #tpu.memory_space<vmem>>, vector<32x128xbf16>
      %17 = arith.extf %16 : vector<32x128xbf16> to vector<32x128xf32>
      %18 = arith.addf %15, %17 : vector<32x128xf32>
      %19 = arith.truncf %18 : vector<32x128xf32> to vector<32x128xbf16>
      %c0_16 = arith.constant 0 : index
      %c0_17 = arith.constant 0 : index
      %20 = vector.load %arg7[%c0_16, %c0_17] : memref<32x128xbf16, #tpu.memory_space<vmem>>, vector<32x128xbf16>
      tpu.vector_store %arg7[%c0_16, %c0_17], %19 {strides = array<i32>} : memref<32x128xbf16, #tpu.memory_space<vmem>>, vector<32x128xbf16>,
    } else {
    }
    return
  }
  func.func @transform_0(%arg0: i32, %arg1: i32, %arg2: i32) -> (i32, i32) {
    %c0_i32 = arith.constant 0 : i32
    return %arg0, %arg2 : i32, i32
  }
  func.func @transform_1(%arg0: i32, %arg1: i32, %arg2: i32) -> (i32, i32) {
    %c0_i32 = arith.constant 0 : i32
    return %arg2, %arg1 : i32, i32
  }
  func.func @transform_2(%arg0: i32, %arg1: i32, %arg2: i32) -> (i32, i32) {
    %c0_i32 = arith.constant 0 : i32
    %c0_i32_0 = arith.constant 0 : i32
    return %c0_i32, %arg1 : i32, i32
  }
  func.func @transform_3(%arg0: i32, %arg1: i32, %arg2: i32) -> (i32, i32) {
    %c0_i32 = arith.constant 0 : i32
    return %arg0, %arg1 : i32, i32
  }
  func.func @transform_4(%arg0: i32, %arg1: i32, %arg2: i32) -> (i32, i32) {
    %c0_i32 = arith.constant 0 : i32
    return %arg0, %arg1 : i32, i32
  }
}

module attributes {stable_mosaic.version = 11 : i64} {
  func.func @_layernorm_kernel(%arg0: i32, %arg1: memref<32x128xbf16, #tpu.memory_space<vmem>>, %arg2: memref<1x128xf32, #tpu.memory_space<vmem>>, %arg3: memref<1x128xf32, #tpu.memory_space<vmem>>, %arg4: memref<32x128xf32, #tpu.memory_space<vmem>>) attributes {dimension_semantics = [#tpu.dimension_semantics<parallel>], iteration_bounds = array<i64: 1>, scalar_prefetch = 0 : i64, scratch_operands = 0 : i64, tpu.core_type = #tpu.core_type<tc>, window_params = [{transform_indices = @transform_0, window_bounds = array<i64: 32, 128>}, {pipeline_mode = #tpu.pipeline_mode<synchronous>, transform_indices = @transform_1, window_bounds = array<i64: 1, 128>}, {pipeline_mode = #tpu.pipeline_mode<synchronous>, transform_indices = @transform_2, window_bounds = array<i64: 1, 128>}, {transform_indices = @transform_3, window_bounds = array<i64: 32, 128>}]} {
    %c0 = arith.constant 0 : index
    %c0_0 = arith.constant 0 : index
    %0 = vector.load %arg1[%c0, %c0_0] : memref<32x128xbf16, #tpu.memory_space<vmem>>, vector<32x128xbf16>
    %1 = arith.extf %0 : vector<32x128xbf16> to vector<32x128xf32>
    %cst = arith.constant dense<0.000000e+00> : vector<32xf32>
    %2 = vector.multi_reduction <add>, %1, %cst [1] : vector<32x128xf32> to vector<32xf32>
    %3 = vector.shape_cast %2 : vector<32xf32> to vector<32x1xf32>
    %cst_1 = arith.constant 1.280000e+02 : f32
    %4 = vector.broadcast %cst_1 : f32 to vector<32x1xf32>
    %5 = arith.divf %3, %4 : vector<32x1xf32>
    %6 = vector.broadcast %5 : vector<32x1xf32> to vector<32x128xf32>
    %7 = arith.subf %1, %6 : vector<32x128xf32>
    %8 = arith.mulf %7, %7 : vector<32x128xf32>
    %cst_2 = arith.constant dense<0.000000e+00> : vector<32xf32>
    %9 = vector.multi_reduction <add>, %8, %cst_2 [1] : vector<32x128xf32> to vector<32xf32>
    %10 = vector.shape_cast %9 : vector<32xf32> to vector<32x1xf32>
    %cst_3 = arith.constant 1.280000e+02 : f32
    %11 = vector.broadcast %cst_3 : f32 to vector<32x1xf32>
    %12 = arith.divf %10, %11 : vector<32x1xf32>
    %13 = vector.broadcast %5 : vector<32x1xf32> to vector<32x128xf32>
    %14 = arith.subf %1, %13 : vector<32x128xf32>
    %cst_4 = arith.constant 9.99999997E-7 : f32
    %15 = vector.broadcast %cst_4 : f32 to vector<32x1xf32>
    %16 = arith.addf %12, %15 : vector<32x1xf32>
    %17 = math.rsqrt %16 : vector<32x1xf32>
    %18 = vector.broadcast %17 : vector<32x1xf32> to vector<32x128xf32>
    %19 = arith.mulf %14, %18 : vector<32x128xf32>
    %c0_5 = arith.constant 0 : index
    %c0_6 = arith.constant 0 : index
    %20 = vector.load %arg2[%c0_5, %c0_6] : memref<1x128xf32, #tpu.memory_space<vmem>>, vector<1x128xf32>
    %21 = vector.broadcast %20 : vector<1x128xf32> to vector<32x128xf32>
    %22 = arith.mulf %19, %21 : vector<32x128xf32>
    %c0_7 = arith.constant 0 : index
    %c0_8 = arith.constant 0 : index
    %23 = vector.load %arg3[%c0_7, %c0_8] : memref<1x128xf32, #tpu.memory_space<vmem>>, vector<1x128xf32>
    %24 = vector.broadcast %23 : vector<1x128xf32> to vector<32x128xf32>
    %25 = arith.addf %22, %24 : vector<32x128xf32>
    %c0_9 = arith.constant 0 : index
    %c0_10 = arith.constant 0 : index
    %26 = vector.load %arg4[%c0_9, %c0_10] : memref<32x128xf32, #tpu.memory_space<vmem>>, vector<32x128xf32>
    tpu.vector_store %arg4[%c0_9, %c0_10], %25 {strides = array<i32>} : memref<32x128xf32, #tpu.memory_space<vmem>>, vector<32x128xf32>,
    return
  }
  func.func @transform_0(%arg0: i32) -> (i32, i32) {
    %c0_i32 = arith.constant 0 : i32
    %c0_i32_0 = arith.constant 0 : i32
    return %arg0, %c0_i32 : i32, i32
  }
  func.func @transform_1(%arg0: i32) -> (i32, i32) {
    %c0_i32 = arith.constant 0 : i32
    %c0_i32_0 = arith.constant 0 : i32
    %c0_i32_1 = arith.constant 0 : i32
    return %c0_i32, %c0_i32_0 : i32, i32
  }
  func.func @transform_2(%arg0: i32) -> (i32, i32) {
    %c0_i32 = arith.constant 0 : i32
    %c0_i32_0 = arith.constant 0 : i32
    %c0_i32_1 = arith.constant 0 : i32
    return %c0_i32, %c0_i32_0 : i32, i32
  }
  func.func @transform_3(%arg0: i32) -> (i32, i32) {
    %c0_i32 = arith.constant 0 : i32
    %c0_i32_0 = arith.constant 0 : i32
    return %arg0, %c0_i32 : i32, i32
  }
}

</mosaic_0001>

<llo_original>
// kernel: pat_forward.12
$region0: #{pat_forward.12}
  #allocation0 [shape = 'u32[]', space=smem, size = 0x4, offset = 0x4, fixed_abs, tag = 'smem constant byte address 0x4 - core index']
  #allocation1 [shape = 'u32[72,128]{1,0:T(1,128)}', space=vmem, size = 0x9000, scoped, tag = 'internal scratch']
  #allocation2 [shape = 'f32[16,128]{1,0:T(8,128)}', space=vmem, size = 0x2000, scoped, tag = 'scratch operand']
  %s0 = inlined_call_operand.vmem [shape: bf16[16,192], index: 0, kind: input, shape index: {}]
  %s1 = inlined_call_operand.vmem [shape: bf16[192,128], index: 1, kind: input, shape index: {}]
  %s2 = inlined_call_operand.vmem [shape: f32[1,128], index: 2, kind: input, shape index: {}]
  %s3 = inlined_call_operand.vmem [shape: bf16[16,128], index: 3, kind: output, shape index: {}]
  %s4 = sld [smem:[#allocation0]]
  $region30: #{pat_forward.12} parent=0
    _
  %s6 = ssub.s32 1, %s4
  %s7 = scalar_select 0, %s6, %s4
  // Predicated region
  $region2: #{pat_forward.12} parent=0 // pred_check
    _
  $region3: #{pat_forward.12} parent=0 // pred_check_branch
    %9 = sbr.rel (0) target = $region5
  $region4: #{pat_forward.12} parent=0 // pred_region
    _
  $region5: #{pat_forward.12} parent=0 // pred_fallthru
    _
  // Predicated region
  $region6: #{pat_forward.12} parent=0 // pred_check
    _
  $region7: #{pat_forward.12} parent=0 // pred_check_branch
    %11 = sbr.rel (0) target = $region9
  $region8: #{pat_forward.12} parent=0 // pred_region
    _
  $region9: #{pat_forward.12} parent=0 // pred_fallthru
    _
  // Predicated region
  $region10: #{pat_forward.12} parent=0 // pred_check
    _
  $region11: #{pat_forward.12} parent=0 // pred_check_branch
    %13 = sbr.rel (0) target = $region13
  $region12: #{pat_forward.12} parent=0 // pred_region
    _
  $region13: #{pat_forward.12} parent=0 // pred_fallthru
    _
  %p15 = scmp.eq.s32.totalorder 0, 0
  // Predicated region
  $region14: #{pat_forward.12} parent=0 // pred_check
    %p16 = pneg %p15
  $region15: #{pat_forward.12} parent=0 // pred_check_branch
    %18 = sbr.rel (%p16) target = $region17
  $region16: #{pat_forward.12} parent=0 // pred_region
    %19 = vst [vmem:[#allocation2] sm:$0xff] 0.0
    %20 = vst [vmem:[#allocation2 + $0x8] sm:$0xff] 0.0
  $region17: #{pat_forward.12} parent=0 // pred_fallthru
    _
  %v21 = vld [vmem:[#allocation2] sm:$0xff]
  %v22 = vld [vmem:[#allocation2 + $0x8] sm:$0xff]
  %v23 = vld [vmem:[%s0] sm:$0xff]
  %v24 = vld [vmem:[%s0 + $0x8] sm:$0xff]
  %v25 = vld [vmem:[%s1] sm:$0xf]
  %v26 = vld [vmem:[%s1 + $0x4] sm:$0xf]
  %v27 = vld [vmem:[%s1 + $0x8] sm:$0xf]
  %v28 = vld [vmem:[%s1 + $0xc] sm:$0xf]
  %v29 = vld [vmem:[%s1 + $0x10] sm:$0xf]
  %v30 = vld [vmem:[%s1 + $0x14] sm:$0xf]
  %v31 = vld [vmem:[%s1 + $0x18] sm:$0xf]
  %v32 = vld [vmem:[%s1 + $0x1c] sm:$0xf]
  %v33 = vld [vmem:[%s1 + $0x20] sm:$0xf]
  %v34 = vld [vmem:[%s1 + $0x24] sm:$0xf]
  %v35 = vld [vmem:[%s1 + $0x28] sm:$0xf]
  %v36 = vld [vmem:[%s1 + $0x2c] sm:$0xf]
  %v37 = vld [vmem:[%s1 + $0x30] sm:$0xf]
  %v38 = vld [vmem:[%s1 + $0x34] sm:$0xf]
  %v39 = vld [vmem:[%s1 + $0x38] sm:$0xf]
  %v40 = vld [vmem:[%s1 + $0x3c] sm:$0xf]
  %v41 = vld [vmem:[%s1 + $0x40] sm:$0xf]
  %v42 = vld [vmem:[%s1 + $0x44] sm:$0xf]
  %v43 = vld [vmem:[%s1 + $0x48] sm:$0xf]
  %v44 = vld [vmem:[%s1 + $0x4c] sm:$0xf]
  %v45 = vld [vmem:[%s1 + $0x50] sm:$0xf]
  %v46 = vld [vmem:[%s1 + $0x54] sm:$0xf]
  %v47 = vld [vmem:[%s1 + $0x58] sm:$0xf]
  %v48 = vld [vmem:[%s1 + $0x5c] sm:$0xf]
  %v51 = vunpack.c.l.b16 %v23
  %v52 = vunpack.c.h.b16 %v23
  %v53 = vunpack.c.l.b16 %v24
  %v54 = vunpack.c.h.b16 %v24
  %v55 = vpack.c.b16 %v53, %v51
  %v56 = vpack.c.b16 %v54, %v52
  %v82 = vunpack.c.l.b16 %v25
  %v83 = vunpack.c.l.b16 %v26
  %v84 = vunpack.c.l.b16 %v27
  %v85 = vunpack.c.l.b16 %v28
  %v86 = vunpack.c.l.b16 %v29
  %v87 = vunpack.c.l.b16 %v30
  %v88 = vunpack.c.l.b16 %v31
  %v89 = vunpack.c.l.b16 %v32
  %v90 = vunpack.c.l.b16 %v33
  %v91 = vunpack.c.l.b16 %v34
  %v92 = vunpack.c.l.b16 %v35
  %v93 = vunpack.c.l.b16 %v36
  %v94 = vunpack.c.l.b16 %v37
  %v95 = vunpack.c.l.b16 %v38
  %v96 = vunpack.c.l.b16 %v39
  %v97 = vunpack.c.l.b16 %v40
  %v98 = vunpack.c.l.b16 %v41
  %v99 = vunpack.c.l.b16 %v42
  %v100 = vunpack.c.l.b16 %v43
  %v101 = vunpack.c.l.b16 %v44
  %v102 = vunpack.c.l.b16 %v45
  %v103 = vunpack.c.l.b16 %v46
  %v104 = vunpack.c.l.b16 %v47
  %v105 = vunpack.c.l.b16 %v48
  %v106 = vpack.c.b16 %v83, %v82
  %v107 = vpack.c.b16 %v85, %v84
  %v108 = vpack.c.b16 %v87, %v86
  %v109 = vpack.c.b16 %v89, %v88
  %v110 = vpack.c.b16 %v91, %v90
  %v111 = vpack.c.b16 %v93, %v92
  %v112 = vpack.c.b16 %v95, %v94
  %v113 = vpack.c.b16 %v97, %v96
  %v114 = vpack.c.b16 %v99, %v98
  %v115 = vpack.c.b16 %v101, %v100
  %v116 = vpack.c.b16 %v103, %v102
  %v117 = vpack.c.b16 %v105, %v104
  %vm130 = vcmask 523264
  %v132 = vsel %vm130, %v56, 0
  %134 = vmatpush.bf16.msra.mxu0 %v113
  %135 = vmatpush.bf16.msra.mxu0 %v112
  %136 = vmatpush.bf16.msra.mxu0 %v111
  %137 = vmatpush.bf16.msra.mxu0 %v110
  %138 = vmatpush.bf16.msra.mxu0 %v109
  %139 = vmatpush.bf16.msra.mxu0 %v108
  %140 = vmatpush.bf16.msra.mxu0 %v107
  %141 = vmatpush.bf16.msra.mxu0 %v106
  %142 = vmatmul.bf16.gmra.mxu0 %v55
  %v143 = vpop.f32.mrf.mxu0
  %v144 = vadd.f32 0.0, %v143
  %v145 = vpop.f32.mrf.mxu0
  %v146 = vadd.f32 0.0, %v145
  %147 = vdwg.mxu0
  %148 = vmatpush.bf16.msra.mxu0 0
  %149 = vmatpush.bf16.msra.mxu0 0
  %150 = vmatpush.bf16.msra.mxu0 0
  %151 = vmatpush.bf16.msra.mxu0 0
  %152 = vmatpush.bf16.msra.mxu0 %v117
  %153 = vmatpush.bf16.msra.mxu0 %v116
  %154 = vmatpush.bf16.msra.mxu0 %v115
  %155 = vmatpush.bf16.msra.mxu0 %v114
  %156 = vmatmul.bf16.gmra.mxu0 %v132
  %v157 = vpop.f32.mrf.mxu0
  %v158 = vadd.f32 %v144, %v157
  %v159 = vpop.f32.mrf.mxu0
  %v160 = vadd.f32 %v146, %v159
  %161 = vdwg.mxu0
  %v162 = vadd.f32 %v21, %v158
  %v163 = vadd.f32 %v22, %v160
  %164 = vst [vmem:[#allocation2] sm:$0xff] %v162
  %165 = vst [vmem:[#allocation2 + $0x8] sm:$0xff] %v163
  // Predicated region
  $region18: #{pat_forward.12} parent=0 // pred_check
    %p166 = pneg %p15
  $region19: #{pat_forward.12} parent=0 // pred_check_branch
    %168 = sbr.rel (%p166) target = $region21
  $region20: #{pat_forward.12} parent=0 // pred_region
    %v169 = vld [vmem:[#allocation2] sm:$0xff]
    %v170 = vld [vmem:[#allocation2 + $0x8] sm:$0xff]
    %v171 = vld [vmem:[%s2] sm:$0x1]
    %v173 = vperm.slane %v171, 0
    %v175 = vadd.f32 %v169, %v173
    %v176 = vadd.f32 %v170, %v173
    %v177 = vpack.c.bf16 %v175, %v175
    %v178 = vpack.c.bf16 %v176, %v176
    %179 = vst [vmem:[%s3] sm:$0xf] %v177
    %180 = vst [vmem:[%s3 + $0x4] sm:$0xf] %v178
  $region21: #{pat_forward.12} parent=0 // pred_fallthru
    _
  // Predicated region
  $region22: #{pat_forward.12} parent=0 // pred_check
    _
  $region23: #{pat_forward.12} parent=0 // pred_check_branch
    %182 = sbr.rel (0) target = $region25
  $region24: #{pat_forward.12} parent=0 // pred_region
    _
  $region25: #{pat_forward.12} parent=0 // pred_fallthru
    _
  // Predicated region
  $region26: #{pat_forward.12} parent=0 // pred_check
    _
  $region27: #{pat_forward.12} parent=0 // pred_check_branch
    %184 = sbr.rel (0) target = $region29
  $region28: #{pat_forward.12} parent=0 // pred_region
    _
  $region29: #{pat_forward.12} parent=0 // pred_fallthru
    _

// kernel: pat_forward.15
$region0: #{pat_forward.15}
  #allocation0 [shape = 'u32[]', space=smem, size = 0x4, offset = 0x4, fixed_abs, tag = 'smem constant byte address 0x4 - core index']
  #allocation1 [shape = 'u32[72,128]{1,0:T(1,128)}', space=vmem, size = 0x9000, scoped, tag = 'internal scratch']
  #allocation2 [shape = 'f32[32,128]{1,0:T(8,128)}', space=vmem, size = 0x4000, scoped, tag = 'scratch operand']
  %s0 = inlined_call_operand.vmem [shape: bf16[32,128], index: 0, kind: input, shape index: {}]
  %s1 = inlined_call_operand.vmem [shape: bf16[128,128], index: 1, kind: input, shape index: {}]
  %s2 = inlined_call_operand.vmem [shape: f32[1,128], index: 2, kind: input, shape index: {}]
  %s3 = inlined_call_operand.vmem [shape: bf16[32,128], index: 3, kind: input, shape index: {}]
  %s4 = inlined_call_operand.vmem [shape: bf16[32,128], index: 4, kind: output, shape index: {}]
  %s5 = sld [smem:[#allocation0]]
  $region34: #{pat_forward.15} parent=0
    _
  %s7 = ssub.s32 1, %s5
  %s8 = scalar_select 0, %s7, %s5
  // Predicated region
  $region2: #{pat_forward.15} parent=0 // pred_check
    _
  $region3: #{pat_forward.15} parent=0 // pred_check_branch
    %10 = sbr.rel (0) target = $region5
  $region4: #{pat_forward.15} parent=0 // pred_region
    _
  $region5: #{pat_forward.15} parent=0 // pred_fallthru
    _
  // Predicated region
  $region6: #{pat_forward.15} parent=0 // pred_check
    _
  $region7: #{pat_forward.15} parent=0 // pred_check_branch
    %12 = sbr.rel (0) target = $region9
  $region8: #{pat_forward.15} parent=0 // pred_region
    _
  $region9: #{pat_forward.15} parent=0 // pred_fallthru
    _
  // Predicated region
  $region10: #{pat_forward.15} parent=0 // pred_check
    _
  $region11: #{pat_forward.15} parent=0 // pred_check_branch
    %14 = sbr.rel (0) target = $region13
  $region12: #{pat_forward.15} parent=0 // pred_region
    _
  $region13: #{pat_forward.15} parent=0 // pred_fallthru
    _
  // Predicated region
  $region14: #{pat_forward.15} parent=0 // pred_check
    _
  $region15: #{pat_forward.15} parent=0 // pred_check_branch
    %16 = sbr.rel (0) target = $region17
  $region16: #{pat_forward.15} parent=0 // pred_region
    _
  $region17: #{pat_forward.15} parent=0 // pred_fallthru
    _
  %p17 = scmp.eq.s32.totalorder 0, 0
  // Predicated region
  $region18: #{pat_forward.15} parent=0 // pred_check
    %p18 = pneg %p17
  $region19: #{pat_forward.15} parent=0 // pred_check_branch
    %20 = sbr.rel (%p18) target = $region21
  $region20: #{pat_forward.15} parent=0 // pred_region
    %21 = vst [vmem:[#allocation2] sm:$0xff] 0.0
    %22 = vst [vmem:[#allocation2 + $0x8] sm:$0xff] 0.0
    %23 = vst [vmem:[#allocation2 + $0x10] sm:$0xff] 0.0
    %24 = vst [vmem:[#allocation2 + $0x18] sm:$0xff] 0.0
  $region21: #{pat_forward.15} parent=0 // pred_fallthru
    _
  %v25 = vld [vmem:[#allocation2] sm:$0xff]
  %v26 = vld [vmem:[#allocation2 + $0x8] sm:$0xff]
  %v27 = vld [vmem:[#allocation2 + $0x10] sm:$0xff]
  %v28 = vld [vmem:[#allocation2 + $0x18] sm:$0xff]
  %v29 = vld [vmem:[%s0] sm:$0xf]
  %v30 = vld [vmem:[%s0 + $0x4] sm:$0xf]
  %v31 = vld [vmem:[%s0 + $0x8] sm:$0xf]
  %v32 = vld [vmem:[%s0 + $0xc] sm:$0xf]
  %v33 = vld [vmem:[%s1] sm:$0xf]
  %v34 = vld [vmem:[%s1 + $0x4] sm:$0xf]
  %v35 = vld [vmem:[%s1 + $0x8] sm:$0xf]
  %v36 = vld [vmem:[%s1 + $0xc] sm:$0xf]
  %v37 = vld [vmem:[%s1 + $0x10] sm:$0xf]
  %v38 = vld [vmem:[%s1 + $0x14] sm:$0xf]
  %v39 = vld [vmem:[%s1 + $0x18] sm:$0xf]
  %v40 = vld [vmem:[%s1 + $0x1c] sm:$0xf]
  %v41 = vld [vmem:[%s1 + $0x20] sm:$0xf]
  %v42 = vld [vmem:[%s1 + $0x24] sm:$0xf]
  %v43 = vld [vmem:[%s1 + $0x28] sm:$0xf]
  %v44 = vld [vmem:[%s1 + $0x2c] sm:$0xf]
  %v45 = vld [vmem:[%s1 + $0x30] sm:$0xf]
  %v46 = vld [vmem:[%s1 + $0x34] sm:$0xf]
  %v47 = vld [vmem:[%s1 + $0x38] sm:$0xf]
  %v48 = vld [vmem:[%s1 + $0x3c] sm:$0xf]
  %v53 = vunpack.c.l.b16 %v29
  %v54 = vunpack.c.l.b16 %v30
  %v55 = vunpack.c.l.b16 %v31
  %v56 = vunpack.c.l.b16 %v32
  %v57 = vpack.c.b16 %v54, %v53
  %v58 = vpack.c.b16 %v56, %v55
  %v77 = vunpack.c.l.b16 %v33
  %v78 = vunpack.c.l.b16 %v34
  %v79 = vunpack.c.l.b16 %v35
  %v80 = vunpack.c.l.b16 %v36
  %v81 = vunpack.c.l.b16 %v37
  %v82 = vunpack.c.l.b16 %v38
  %v83 = vunpack.c.l.b16 %v39
  %v84 = vunpack.c.l.b16 %v40
  %v85 = vunpack.c.l.b16 %v41
  %v86 = vunpack.c.l.b16 %v42
  %v87 = vunpack.c.l.b16 %v43
  %v88 = vunpack.c.l.b16 %v44
  %v89 = vunpack.c.l.b16 %v45
  %v90 = vunpack.c.l.b16 %v46
  %v91 = vunpack.c.l.b16 %v47
  %v92 = vunpack.c.l.b16 %v48
  %v93 = vpack.c.b16 %v78, %v77
  %v94 = vpack.c.b16 %v80, %v79
  %v95 = vpack.c.b16 %v82, %v81
  %v96 = vpack.c.b16 %v84, %v83
  %v97 = vpack.c.b16 %v86, %v85
  %v98 = vpack.c.b16 %v88, %v87
  %v99 = vpack.c.b16 %v90, %v89
  %v100 = vpack.c.b16 %v92, %v91
  %109 = vmatpush.bf16.msra.mxu0 %v100
  %110 = vmatpush.bf16.msra.mxu0 %v99
  %111 = vmatpush.bf16.msra.mxu0 %v98
  %112 = vmatpush.bf16.msra.mxu0 %v97
  %113 = vmatpush.bf16.msra.mxu0 %v96
  %114 = vmatpush.bf16.msra.mxu0 %v95
  %115 = vmatpush.bf16.msra.mxu0 %v94
  %116 = vmatpush.bf16.msra.mxu0 %v93
  %117 = vmatmul.bf16.gmra.mxu0 %v57
  %v118 = vpop.f32.mrf.mxu0
  %v119 = vadd.f32 0.0, %v118
  %v120 = vpop.f32.mrf.mxu0
  %v121 = vadd.f32 0.0, %v120
  %122 = vmatmul.bf16.gmra.mxu0 %v58
  %v123 = vpop.f32.mrf.mxu0
  %v124 = vadd.f32 0.0, %v123
  %v125 = vpop.f32.mrf.mxu0
  %v126 = vadd.f32 0.0, %v125
  %127 = vdwg.mxu0
  %v128 = vadd.f32 %v25, %v119
  %v129 = vadd.f32 %v26, %v121
  %v130 = vadd.f32 %v27, %v124
  %v131 = vadd.f32 %v28, %v126
  %132 = vst [vmem:[#allocation2] sm:$0xff] %v128
  %133 = vst [vmem:[#allocation2 + $0x8] sm:$0xff] %v129
  %134 = vst [vmem:[#allocation2 + $0x10] sm:$0xff] %v130
  %135 = vst [vmem:[#allocation2 + $0x18] sm:$0xff] %v131
  // Predicated region
  $region22: #{pat_forward.15} parent=0 // pred_check
    %p136 = pneg %p17
  $region23: #{pat_forward.15} parent=0 // pred_check_branch
    %138 = sbr.rel (%p136) target = $region25
  $region24: #{pat_forward.15} parent=0 // pred_region
    %v139 = vld [vmem:[#allocation2] sm:$0xff]
    %v140 = vld [vmem:[#allocation2 + $0x8] sm:$0xff]
    %v141 = vld [vmem:[#allocation2 + $0x10] sm:$0xff]
    %v142 = vld [vmem:[#allocation2 + $0x18] sm:$0xff]
    %v143 = vld [vmem:[%s2] sm:$0x1]
    %v145 = vperm.slane %v143, 0
    %v147 = vadd.f32 %v139, %v145
    %v148 = vadd.f32 %v140, %v145
    %v149 = vadd.f32 %v141, %v145
    %v150 = vadd.f32 %v142, %v145
    %v151 = vld [vmem:[%s3] sm:$0xf]
    %v152 = vld [vmem:[%s3 + $0x4] sm:$0xf]
    %v153 = vld [vmem:[%s3 + $0x8] sm:$0xf]
    %v154 = vld [vmem:[%s3 + $0xc] sm:$0xf]
    %v155 = vunpack.c.l.bf16 %v151
    %v156 = vunpack.c.l.bf16 %v152
    %v157 = vunpack.c.l.bf16 %v153
    %v158 = vunpack.c.l.bf16 %v154
    %v159 = vadd.f32 %v147, %v155
    %v160 = vadd.f32 %v148, %v156
    %v161 = vadd.f32 %v149, %v157
    %v162 = vadd.f32 %v150, %v158
    %v163 = vpack.c.bf16 %v159, %v159
    %v164 = vpack.c.bf16 %v160, %v160
    %v165 = vpack.c.bf16 %v161, %v161
    %v166 = vpack.c.bf16 %v162, %v162
    %167 = vst [vmem:[%s4] sm:$0xf] %v163
    %168 = vst [vmem:[%s4 + $0x4] sm:$0xf] %v164
    %169 = vst [vmem:[%s4 + $0x8] sm:$0xf] %v165
    %170 = vst [vmem:[%s4 + $0xc] sm:$0xf] %v166
  $region25: #{pat_forward.15} parent=0 // pred_fallthru
    _
  // Predicated region
  $region26: #{pat_forward.15} parent=0 // pred_check
    _
  $region27: #{pat_forward.15} parent=0 // pred_check_branch
    %172 = sbr.rel (0) target = $region29
  $region28: #{pat_forward.15} parent=0 // pred_region
    _
  $region29: #{pat_forward.15} parent=0 // pred_fallthru
    _
  // Predicated region
  $region30: #{pat_forward.15} parent=0 // pred_check
    _
  $region31: #{pat_forward.15} parent=0 // pred_check_branch
    %174 = sbr.rel (0) target = $region33
  $region32: #{pat_forward.15} parent=0 // pred_region
    _
  $region33: #{pat_forward.15} parent=0 // pred_fallthru
    _

// kernel: pat_forward.14
$region0: #{pat_forward.14}
  #allocation0 [shape = 'u32[]', space=smem, size = 0x4, offset = 0x4, fixed_abs, tag = 'smem constant byte address 0x4 - core index']
  #allocation1 [shape = 'u32[72,128]{1,0:T(1,128)}', space=vmem, size = 0x9000, scoped, tag = 'internal scratch']
  %s0 = inlined_call_operand.vmem [shape: bf16[2,16,384], index: 0, kind: input, shape index: {}]
  %s1 = inlined_call_operand.vmem [shape: bf16[2,16,128], index: 1, kind: output, shape index: {}]
  %s2 = sld [smem:[#allocation0]]
  $region37: #{pat_forward.14} parent=0
    _
  %s4 = ssub.s32 1, %s2
  %s5 = scalar_select 0, %s4, %s2
  loop: start=0, step=1, limit=4
  $region2: #{pat_forward.14} parent=0 // loop_pre_header
    _
  $region3: #{pat_forward.14} parent=0 // loop_header
    %s7 = sphi 0, %s11
    %p8 = scmp.ge.s32.totalorder %s7, 4
    %s17 = sphi 0, %s19
    %s20 = sphi 0, %s17
    %s21 = sphi 0, %s20
    %s37 = sphi 0, %s21
    %s43 = sphi 0, %s45
    %s46 = sphi 0, %s43
    %s47 = sphi 0, %s46
    %s63 = sphi 0, %s47
  $region4: #{pat_forward.14} parent=0 // loop_header_branch
    %10 = sbr.rel (%p8) target = $region8
  $region5: #{pat_forward.14} parent=0 // loop_body
    %s12 = ssub.s32 %s7, 1
    %s13 = ssub.s32 %s7, 2
    %s14 = sadd.s32 %s7, 1
    %s15 = ssub.s32 %s7, %s14
    %p16 = scmp.eq.s32.totalorder %s15, 0
    %s18 = sadd.s32 %s17, 1
    %s19 = scalar_select %p16, %s17, %s18
    %p22 = pneg %p16
    %p23 = scmp.eq.s32.totalorder %s7, 1
    %p24 = por %p22, %p23
    %p25 = scmp.ne.s32.totalorder %s17, %s20
    %p26 = scmp.eq.s32.totalorder %s7, 0
    %p27 = por %p25, %p26
    %p28 = scmp.ne.s32.totalorder %s17, %s20
    %p29 = scmp.eq.s32.totalorder %s12, 1
    %p30 = por %p28, %p29
    %p31 = scmp.ne.s32.totalorder %s20, %s21
    %p32 = scmp.eq.s32.totalorder %s12, 0
    %p33 = por %p31, %p32
    %p34 = scmp.ne.s32.totalorder %s20, %s21
    %p35 = scmp.eq.s32.totalorder %s13, 1
    %p36 = por %p34, %p35
    %p38 = scmp.ne.s32.totalorder %s21, %s37
    %p39 = scmp.eq.s32.totalorder %s13, 0
    %p40 = por %p38, %p39
    %s41 = ssub.s32 %s7, %s14
    %p42 = scmp.eq.s32.totalorder %s41, 0
    %s44 = sadd.s32 %s43, 1
    %s45 = scalar_select %p42, %s43, %s44
    %p48 = pneg %p42
    %p49 = scmp.eq.s32.totalorder %s7, 1
    %p50 = por %p48, %p49
    %p51 = scmp.ne.s32.totalorder %s43, %s46
    %p52 = scmp.eq.s32.totalorder %s7, 0
    %p53 = por %p51, %p52
    %p54 = scmp.ne.s32.totalorder %s43, %s46
    %p55 = scmp.eq.s32.totalorder %s12, 1
    %p56 = por %p54, %p55
    %p57 = scmp.ne.s32.totalorder %s46, %s47
    %p58 = scmp.eq.s32.totalorder %s12, 0
    %p59 = por %p57, %p58
    %p60 = scmp.ne.s32.totalorder %s46, %s47
    %p61 = scmp.eq.s32.totalorder %s13, 1
    %p62 = por %p60, %p61
    %p64 = scmp.ne.s32.totalorder %s47, %s63
    %p65 = scmp.eq.s32.totalorder %s13, 0
    %p66 = por %p64, %p65
    %p67 = scmp.le.s32.totalorder 1, %s7
    %p68 = scmp.lt.s32.totalorder %s7, 3
    %p69 = pnand %p67, %p68
    %p70 = pneg %p69
    // Predicated region
    $region9: #{pat_forward.14} parent=5 // pred_check
      _
    $region10: #{pat_forward.14} parent=5 // pred_check_branch
      %72 = sbr.rel (%p69) target = $region12
    $region11: #{pat_forward.14} parent=5 // pred_region
      %s73 = ssub.s32 %s7, 1
    $region12: #{pat_forward.14} parent=5 // pred_fallthru
      _
    %p74 = scmp.lt.s32.totalorder %s7, 2
    // Predicated region
    $region13: #{pat_forward.14} parent=5 // pred_check
      %p75 = pneg %p74
    $region14: #{pat_forward.14} parent=5 // pred_check_branch
      %77 = sbr.rel (%p75) target = $region16
    $region15: #{pat_forward.14} parent=5 // pred_region
      // Predicated region
      $region17: #{pat_forward.14} parent=15 // pred_check
        %p78 = pneg %p27
      $region18: #{pat_forward.14} parent=15 // pred_check_branch
        %80 = sbr.rel (%p78) target = $region20
      $region19: #{pat_forward.14} parent=15 // pred_region
        %p81 = scmp.lt.s32.totalorder %s7, 1
        %s82 = scalar_select %p81, %s7, 1
        %s83 = smul.addr %s82, 6
        %s84 = smul.addr %s83, 4
        %s85 = scalar_lea.vmem %s0, %s84
      $region20: #{pat_forward.14} parent=15 // pred_fallthru
        _
    $region16: #{pat_forward.14} parent=5 // pred_fallthru
      _
    %p86 = scmp.le.s32.totalorder 1, %s7
    %p87 = scmp.lt.s32.totalorder %s7, 3
    %p88 = pnand %p86, %p87
    %p89 = pneg %p88
    // Predicated region
    $region21: #{pat_forward.14} parent=5 // pred_check
      _
    $region22: #{pat_forward.14} parent=5 // pred_check_branch
      %91 = sbr.rel (%p88) target = $region24
    $region23: #{pat_forward.14} parent=5 // pred_region
      %s92 = ssub.s32 %s7, 1
      %p93 = scmp.lt.s32.totalorder %s12, 1
      %s94 = scalar_select %p93, %s12, 1
      %s95 = smul.addr %s94, 6
      %s96 = smul.addr %s95, 4
      %s97 = scalar_lea.vmem %s0, %s96
      %p98 = pneg %p33
      %p99 = pneg %p30
      %p100 = pneg %p59
      %p101 = pneg %p56
      %p102 = scmp.lt.s32.totalorder %s12, 1
      %s103 = scalar_select %p102, %s12, 1
      %s104 = smul.addr %s103, 2
      %s105 = smul.addr %s104, 4
      %s106 = scalar_lea.vmem %s1, %s105
      %p107 = scmp.lt.s32.totalorder %s12, 1
      %s108 = scalar_select %p107, %s12, 1
      %s109 = smul.addr %s108, 6
      %s110 = smul.addr %s109, 4
      %s111 = scalar_lea.vmem %s0, %s110
      %p112 = scmp.lt.s32.totalorder %s12, 1
      %s113 = scalar_select %p112, %s12, 1
      %s114 = smul.addr %s113, 2
      %s115 = smul.addr %s114, 4
      %s116 = scalar_lea.vmem %s1, %s115
      %v118 = vld [vmem:[%s111] sm:$0xff]
      %v119 = vld [vmem:[%s111 + $0x8] sm:$0xf]
      %v120 = vld [vmem:[%s111 + $0xc] sm:$0xff]
      %v121 = vld [vmem:[%s111 + $0x14] sm:$0xf]
      %v122 = vlaneseq
      %v123 = vand.u32 %v122, 127
      %vm124 = vcmp.lt.s32.totalorder %v123, 12
      %v127 = vunpack.c.l.b16 %v118
      %v128 = vunpack.c.l.b16 %v120
      %v129 = vpack.c.b16 %v128, %v127
      %v130 = vunpack.c.h.b16 %v118
      %v131 = vunpack.c.h.b16 %v120
      %v132 = vpack.c.b16 %v131, %v130
      %vm133 = vcmask 261120
      %v135 = vsel %vm133, %v129, 0
      %v138 = vsel %vm133, %v132, 0
      %140 = vmatpush.bf16.xpose.msra.mxu0 0
      %141 = vmatpush.bf16.xpose.msra.mxu0 0
      %142 = vmatpush.bf16.xpose.msra.mxu0 0
      %143 = vmatpush.bf16.xpose.msra.mxu0 0
      %144 = vmatpush.bf16.xpose.msra.mxu0 0
      %145 = vmatpush.bf16.xpose.msra.mxu0 0
      %146 = vmatpush.bf16.xpose.msra.mxu0 0
      %147 = vmatpush.bf16.xpose.msra.mxu0 %v138
      %148 = vmatmul.bf16.gmra.mxu0 %v135
      %v149 = vpop.f32.mrf.mxu0
      %v150 = vadd.f32 0.0, %v149
      %v151 = vpop.f32.mrf.mxu0
      %v152 = vadd.f32 0.0, %v151
      %153 = vdwg.mxu0
      %v154 = vmul.f32 %v150, 0.17677669
      %v155 = vmul.f32 %v152, 0.17677669
      %v156 = vsel %vm124, %v154, -1e+30
      %v157 = vsel %vm124, %v155, -1e+30
      %vm158 = vcmask 130048
      %v159 = vsel %vm158, %v156, -inf
      %160 = vmax.xlane.f32.xlu0 %v159
      %v161 = vpop.xlane.xlu0 %160
      %v162 = vsel %vm158, %v157, -inf
      %163 = vmax.xlane.f32.xlu0 %v162
      %v164 = vpop.xlane.xlu0 %163
      %v165 = vsub.f32 %v156, %v161
      %v166 = vsub.f32 %v157, %v164
      %v167 = vmul.f32 %v165, 1.442695
      %v168 = vpow.pop %v167
      %v169 = vmul.f32 %v166, 1.442695
      %v170 = vpow.pop %v169
      %v171 = vsel %vm158, %v168, 0.0
      %172 = vadd.xlane.f32.xlu0 %v171
      %v173 = vpop.xlane.xlu0 %172
      %v174 = vsel %vm158, %v170, 0.0
      %175 = vadd.xlane.f32.xlu0 %v174
      %v176 = vpop.xlane.xlu0 %175
      %v177 = vrcp.pop %v173
      %v178 = vrcp.pop %v176
      %v179 = vmul.f32 %v168, %v177
      %v180 = vmul.f32 %v170, %v178
      %v181 = vpack.c.bf16 %v180, %v179
      %v184 = vunpack.c.l.b16 %v119
      %v185 = vunpack.c.l.b16 %v121
      %v186 = vpack.c.b16 %v185, %v184
      %v189 = vsel %vm158, %v181, 0
      %191 = vmatpush.bf16.msra.mxu0 0
      %192 = vmatpush.bf16.msra.mxu0 0
      %193 = vmatpush.bf16.msra.mxu0 0
      %194 = vmatpush.bf16.msra.mxu0 0
      %195 = vmatpush.bf16.msra.mxu0 0
      %196 = vmatpush.bf16.msra.mxu0 0
      %197 = vmatpush.bf16.msra.mxu0 0
      %198 = vmatpush.bf16.msra.mxu0 %v186
      %199 = vmatmul.bf16.gmra.mxu0 %v189
      %v200 = vpop.f32.mrf.mxu0
      %v201 = vadd.f32 0.0, %v200
      %v202 = vpop.f32.mrf.mxu0
      %v203 = vadd.f32 0.0, %v202
      %204 = vdwg.mxu0
      %205 = vrot.lane.b32.xlu0 %v129, 96
      %v206 = vpop.permute.xlu0 %205
      %207 = vrot.lane.b32.xlu0 %v132, 96
      %v208 = vpop.permute.xlu0 %207
      %v210 = vsel %vm133, %v206, 0
      %v213 = vsel %vm133, %v208, 0
      %215 = vmatpush.bf16.xpose.msra.mxu0 0
      %216 = vmatpush.bf16.xpose.msra.mxu0 0
      %217 = vmatpush.bf16.xpose.msra.mxu0 0
      %218 = vmatpush.bf16.xpose.msra.mxu0 0
      %219 = vmatpush.bf16.xpose.msra.mxu0 0
      %220 = vmatpush.bf16.xpose.msra.mxu0 0
      %221 = vmatpush.bf16.xpose.msra.mxu0 0
      %222 = vmatpush.bf16.xpose.msra.mxu0 %v213
      %223 = vmatmul.bf16.gmra.mxu0 %v210
      %v224 = vpop.f32.mrf.mxu0
      %v225 = vadd.f32 0.0, %v224
      %v226 = vpop.f32.mrf.mxu0
      %v227 = vadd.f32 0.0, %v226
      %228 = vdwg.mxu0
      %v229 = vmul.f32 %v225, 0.17677669
      %v230 = vmul.f32 %v227, 0.17677669
      %v231 = vsel %vm124, %v229, -1e+30
      %v232 = vsel %vm124, %v230, -1e+30
      %v233 = vsel %vm158, %v231, -inf
      %234 = vmax.xlane.f32.xlu0 %v233
      %v235 = vpop.xlane.xlu0 %234
      %v236 = vsel %vm158, %v232, -inf
      %237 = vmax.xlane.f32.xlu0 %v236
      %v238 = vpop.xlane.xlu0 %237
      %v239 = vsub.f32 %v231, %v235
      %v240 = vsub.f32 %v232, %v238
      %v241 = vmul.f32 %v239, 1.442695
      %v242 = vpow.pop %v241
      %v243 = vmul.f32 %v240, 1.442695
      %v244 = vpow.pop %v243
      %v245 = vsel %vm158, %v242, 0.0
      %246 = vadd.xlane.f32.xlu0 %v245
      %v247 = vpop.xlane.xlu0 %246
      %v248 = vsel %vm158, %v244, 0.0
      %249 = vadd.xlane.f32.xlu0 %v248
      %v250 = vpop.xlane.xlu0 %249
      %v251 = vrcp.pop %v247
      %v252 = vrcp.pop %v250
      %v253 = vmul.f32 %v242, %v251
      %v254 = vmul.f32 %v244, %v252
      %v255 = vpack.c.bf16 %v254, %v253
      %256 = vrot.lane.b32.xlu0 %v186, 96
      %v257 = vpop.permute.xlu0 %256
      %v260 = vsel %vm158, %v255, 0
      %262 = vmatpush.bf16.msra.mxu0 0
      %263 = vmatpush.bf16.msra.mxu0 0
      %264 = vmatpush.bf16.msra.mxu0 0
      %265 = vmatpush.bf16.msra.mxu0 0
      %266 = vmatpush.bf16.msra.mxu0 0
      %267 = vmatpush.bf16.msra.mxu0 0
      %268 = vmatpush.bf16.msra.mxu0 0
      %269 = vmatpush.bf16.msra.mxu0 %v257
      %270 = vmatmul.bf16.gmra.mxu0 %v260
      %v271 = vpop.f32.mrf.mxu0
      %v272 = vadd.f32 0.0, %v271
      %v273 = vpop.f32.mrf.mxu0
      %v274 = vadd.f32 0.0, %v273
      %275 = vdwg.mxu0
      %276 = vrot.lane.b32.xlu0 %v129, 64
      %v277 = vpop.permute.xlu0 %276
      %278 = vrot.lane.b32.xlu0 %v132, 64
      %v279 = vpop.permute.xlu0 %278
      %v281 = vsel %vm133, %v277, 0
      %v284 = vsel %vm133, %v279, 0
      %286 = vmatpush.bf16.xpose.msra.mxu0 0
      %287 = vmatpush.bf16.xpose.msra.mxu0 0
      %288 = vmatpush.bf16.xpose.msra.mxu0 0
      %289 = vmatpush.bf16.xpose.msra.mxu0 0
      %290 = vmatpush.bf16.xpose.msra.mxu0 0
      %291 = vmatpush.bf16.xpose.msra.mxu0 0
      %292 = vmatpush.bf16.xpose.msra.mxu0 0
      %293 = vmatpush.bf16.xpose.msra.mxu0 %v284
      %294 = vmatmul.bf16.gmra.mxu0 %v281
      %v295 = vpop.f32.mrf.mxu0
      %v296 = vadd.f32 0.0, %v295
      %v297 = vpop.f32.mrf.mxu0
      %v298 = vadd.f32 0.0, %v297
      %299 = vdwg.mxu0
      %v300 = vmul.f32 %v296, 0.17677669
      %v301 = vmul.f32 %v298, 0.17677669
      %v302 = vsel %vm124, %v300, -1e+30
      %v303 = vsel %vm124, %v301, -1e+30
      %v304 = vsel %vm158, %v302, -inf
      %305 = vmax.xlane.f32.xlu0 %v304
      %v306 = vpop.xlane.xlu0 %305
      %v307 = vsel %vm158, %v303, -inf
      %308 = vmax.xlane.f32.xlu0 %v307
      %v309 = vpop.xlane.xlu0 %308
      %v310 = vsub.f32 %v302, %v306
      %v311 = vsub.f32 %v303, %v309
      %v312 = vmul.f32 %v310, 1.442695
      %v313 = vpow.pop %v312
      %v314 = vmul.f32 %v311, 1.442695
      %v315 = vpow.pop %v314
      %v316 = vsel %vm158, %v313, 0.0
      %317 = vadd.xlane.f32.xlu0 %v316
      %v318 = vpop.xlane.xlu0 %317
      %v319 = vsel %vm158, %v315, 0.0
      %320 = vadd.xlane.f32.xlu0 %v319
      %v321 = vpop.xlane.xlu0 %320
      %v322 = vrcp.pop %v318
      %v323 = vrcp.pop %v321
      %v324 = vmul.f32 %v313, %v322
      %v325 = vmul.f32 %v315, %v323
      %v326 = vpack.c.bf16 %v325, %v324
      %327 = vrot.lane.b32.xlu0 %v186, 64
      %v328 = vpop.permute.xlu0 %327
      %v331 = vsel %vm158, %v326, 0
      %333 = vmatpush.bf16.msra.mxu0 0
      %334 = vmatpush.bf16.msra.mxu0 0
      %335 = vmatpush.bf16.msra.mxu0 0
      %336 = vmatpush.bf16.msra.mxu0 0
      %337 = vmatpush.bf16.msra.mxu0 0
      %338 = vmatpush.bf16.msra.mxu0 0
      %339 = vmatpush.bf16.msra.mxu0 0
      %340 = vmatpush.bf16.msra.mxu0 %v328
      %341 = vmatmul.bf16.gmra.mxu0 %v331
      %v342 = vpop.f32.mrf.mxu0
      %v343 = vadd.f32 0.0, %v342
      %v344 = vpop.f32.mrf.mxu0
      %v345 = vadd.f32 0.0, %v344
      %346 = vdwg.mxu0
      %347 = vrot.lane.b32.xlu0 %v129, 32
      %v348 = vpop.permute.xlu0 %347
      %349 = vrot.lane.b32.xlu0 %v132, 32
      %v350 = vpop.permute.xlu0 %349
      %v352 = vsel %vm133, %v348, 0
      %v355 = vsel %vm133, %v350, 0
      %357 = vmatpush.bf16.xpose.msra.mxu0 0
      %358 = vmatpush.bf16.xpose.msra.mxu0 0
      %359 = vmatpush.bf16.xpose.msra.mxu0 0
      %360 = vmatpush.bf16.xpose.msra.mxu0 0
      %361 = vmatpush.bf16.xpose.msra.mxu0 0
      %362 = vmatpush.bf16.xpose.msra.mxu0 0
      %363 = vmatpush.bf16.xpose.msra.mxu0 0
      %364 = vmatpush.bf16.xpose.msra.mxu0 %v355
      %365 = vmatmul.bf16.gmra.mxu0 %v352
      %v366 = vpop.f32.mrf.mxu0
      %v367 = vadd.f32 0.0, %v366
      %v368 = vpop.f32.mrf.mxu0
      %v369 = vadd.f32 0.0, %v368
      %370 = vdwg.mxu0
      %v371 = vmul.f32 %v367, 0.17677669
      %v372 = vmul.f32 %v369, 0.17677669
      %v373 = vsel %vm124, %v371, -1e+30
      %v374 = vsel %vm124, %v372, -1e+30
      %v375 = vsel %vm158, %v373, -inf
      %376 = vmax.xlane.f32.xlu0 %v375
      %v377 = vpop.xlane.xlu0 %376
      %v378 = vsel %vm158, %v374, -inf
      %379 = vmax.xlane.f32.xlu0 %v378
      %v380 = vpop.xlane.xlu0 %379
      %v381 = vsub.f32 %v373, %v377
      %v382 = vsub.f32 %v374, %v380
      %v383 = vmul.f32 %v381, 1.442695
      %v384 = vpow.pop %v383
      %v385 = vmul.f32 %v382, 1.442695
      %v386 = vpow.pop %v385
      %v387 = vsel %vm158, %v384, 0.0
      %388 = vadd.xlane.f32.xlu0 %v387
      %v389 = vpop.xlane.xlu0 %388
      %v390 = vsel %vm158, %v386, 0.0
      %391 = vadd.xlane.f32.xlu0 %v390
      %v392 = vpop.xlane.xlu0 %391
      %v393 = vrcp.pop %v389
      %v394 = vrcp.pop %v392
      %v395 = vmul.f32 %v384, %v393
      %v396 = vmul.f32 %v386, %v394
      %v397 = vpack.c.bf16 %v396, %v395
      %398 = vrot.lane.b32.xlu0 %v186, 32
      %v399 = vpop.permute.xlu0 %398
      %v402 = vsel %vm158, %v397, 0
      %404 = vmatpush.bf16.msra.mxu0 0
      %405 = vmatpush.bf16.msra.mxu0 0
      %406 = vmatpush.bf16.msra.mxu0 0
      %407 = vmatpush.bf16.msra.mxu0 0
      %408 = vmatpush.bf16.msra.mxu0 0
      %409 = vmatpush.bf16.msra.mxu0 0
      %410 = vmatpush.bf16.msra.mxu0 0
      %411 = vmatpush.bf16.msra.mxu0 %v399
      %412 = vmatmul.bf16.gmra.mxu0 %v402
      %v413 = vpop.f32.mrf.mxu0
      %v414 = vadd.f32 0.0, %v413
      %v415 = vpop.f32.mrf.mxu0
      %v416 = vadd.f32 0.0, %v415
      %417 = vdwg.mxu0
      %420 = vrot.lane.b32.xlu0 %v272, 32
      %v421 = vpop.permute.xlu0 %420
      %422 = vrot.lane.b32.xlu0 %v274, 32
      %v423 = vpop.permute.xlu0 %422
      %428 = vrot.lane.b32.xlu0 %v343, 64
      %v429 = vpop.permute.xlu0 %428
      %430 = vrot.lane.b32.xlu0 %v345, 64
      %v431 = vpop.permute.xlu0 %430
      %436 = vrot.lane.b32.xlu0 %v414, 96
      %v437 = vpop.permute.xlu0 %436
      %438 = vrot.lane.b32.xlu0 %v416, 96
      %v439 = vpop.permute.xlu0 %438
      %v442 = vsel %vm133, %v201, %v421
      %v443 = vsel %vm133, %v203, %v423
      %vm444 = vcmask 523264
      %v445 = vsel %vm444, %v442, %v429
      %v446 = vsel %vm444, %v443, %v431
      %vm447 = vcmask 785408
      %v448 = vsel %vm447, %v445, %v437
      %v449 = vsel %vm447, %v446, %v439
      %v450 = vpack.c.bf16 %v448, %v448
      %v451 = vpack.c.bf16 %v449, %v449
      %452 = vst [vmem:[%s116] sm:$0xf] %v450
      %453 = vst [vmem:[%s116 + $0x4] sm:$0xf] %v451
      %p454 = scmp.lt.s32.totalorder %s12, 1
      %s455 = scalar_select %p454, %s12, 1
      %s456 = smul.addr %s455, 2
      %s457 = smul.addr %s456, 4
      %s458 = scalar_lea.vmem %s1, %s457
      // Predicated region
      $region25: #{pat_forward.14} parent=23 // pred_check
        %p459 = pneg %p56
      $region26: #{pat_forward.14} parent=23 // pred_check_branch
        %461 = sbr.rel (%p459) target = $region28
      $region27: #{pat_forward.14} parent=23 // pred_region
        _
      $region28: #{pat_forward.14} parent=23 // pred_fallthru
        _
    $region24: #{pat_forward.14} parent=5 // pred_fallthru
      _
    %p462 = scmp.le.s32.totalorder 2, %s7
    // Predicated region
    $region29: #{pat_forward.14} parent=5 // pred_check
      %p463 = pneg %p462
    $region30: #{pat_forward.14} parent=5 // pred_check_branch
      %465 = sbr.rel (%p463) target = $region32
    $region31: #{pat_forward.14} parent=5 // pred_region
      %s466 = ssub.s32 %s7, 2
      // Predicated region
      $region33: #{pat_forward.14} parent=31 // pred_check
        %p467 = pneg %p62
      $region34: #{pat_forward.14} parent=31 // pred_check_branch
        %469 = sbr.rel (%p467) target = $region36
      $region35: #{pat_forward.14} parent=31 // pred_region
        %p470 = scmp.lt.s32.totalorder %s13, 1
        %s471 = scalar_select %p470, %s13, 1
        %s472 = smul.addr %s471, 2
        %s473 = smul.addr %s472, 4
        %s474 = scalar_lea.vmem %s1, %s473
      $region36: #{pat_forward.14} parent=31 // pred_fallthru
        _
    $region32: #{pat_forward.14} parent=5 // pred_fallthru
      _
  $region6: #{pat_forward.14} parent=0 // loop_footer
    %s11 = sadd.s32 1, %s7
  $region7: #{pat_forward.14} parent=0 // loop_footer_branch
    %6 = sbr.rel target = $region3
  $region8: #{pat_forward.14} parent=0 // loop_exit
    _

// kernel: pat_forward.13
$region0: #{pat_forward.13}
  #allocation0 [shape = 'u32[]', space=smem, size = 0x4, offset = 0x4, fixed_abs, tag = 'smem constant byte address 0x4 - core index']
  #allocation1 [shape = 'u32[72,128]{1,0:T(1,128)}', space=vmem, size = 0x9000, scoped, tag = 'internal scratch']
  #allocation2 [shape = 'bf16[32,128]{1,0:T(8,128)(2,1)}', space=vmem, size = 0x2000, scoped, tag = 'scratch operand']
  %s0 = inlined_call_operand.vmem [shape: bf16[32,128], index: 0, kind: input, shape index: {}]
  %s1 = inlined_call_operand.vmem [shape: f32[1,128], index: 1, kind: input, shape index: {}]
  %s2 = inlined_call_operand.vmem [shape: f32[1,128], index: 2, kind: input, shape index: {}]
  %s3 = inlined_call_operand.vmem [shape: bf16[128,384], index: 3, kind: input, shape index: {}]
  %s4 = inlined_call_operand.vmem [shape: f32[1,384], index: 4, kind: input, shape index: {}]
  %s5 = inlined_call_operand.vmem [shape: bf16[32,384], index: 5, kind: output, shape index: {}]
  %s6 = sld [smem:[#allocation0]]
  $region34: #{pat_forward.13} parent=0
    _
  %s8 = ssub.s32 1, %s6
  %s9 = scalar_select 0, %s8, %s6
  // Predicated region
  $region2: #{pat_forward.13} parent=0 // pred_check
    _
  $region3: #{pat_forward.13} parent=0 // pred_check_branch
    %11 = sbr.rel (0) target = $region5
  $region4: #{pat_forward.13} parent=0 // pred_region
    _
  $region5: #{pat_forward.13} parent=0 // pred_fallthru
    _
  // Predicated region
  $region6: #{pat_forward.13} parent=0 // pred_check
    _
  $region7: #{pat_forward.13} parent=0 // pred_check_branch
    %13 = sbr.rel (0) target = $region9
  $region8: #{pat_forward.13} parent=0 // pred_region
    _
  $region9: #{pat_forward.13} parent=0 // pred_fallthru
    _
  // Predicated region
  $region10: #{pat_forward.13} parent=0 // pred_check
    _
  $region11: #{pat_forward.13} parent=0 // pred_check_branch
    %15 = sbr.rel (0) target = $region13
  $region12: #{pat_forward.13} parent=0 // pred_region
    _
  $region13: #{pat_forward.13} parent=0 // pred_fallthru
    _
  // Predicated region
  $region14: #{pat_forward.13} parent=0 // pred_check
    _
  $region15: #{pat_forward.13} parent=0 // pred_check_branch
    %17 = sbr.rel (0) target = $region17
  $region16: #{pat_forward.13} parent=0 // pred_region
    _
  $region17: #{pat_forward.13} parent=0 // pred_fallthru
    _
  // Predicated region
  $region18: #{pat_forward.13} parent=0 // pred_check
    _
  $region19: #{pat_forward.13} parent=0 // pred_check_branch
    %19 = sbr.rel (0) target = $region21
  $region20: #{pat_forward.13} parent=0 // pred_region
    _
  $region21: #{pat_forward.13} parent=0 // pred_fallthru
    _
  %p20 = scmp.eq.s32.totalorder 0, 0
  // Predicated region
  $region22: #{pat_forward.13} parent=0 // pred_check
    %p21 = pneg %p20
  $region23: #{pat_forward.13} parent=0 // pred_check_branch
    %23 = sbr.rel (%p21) target = $region25
  $region24: #{pat_forward.13} parent=0 // pred_region
    %v24 = vld [vmem:[%s0] sm:$0xf]
    %v25 = vld [vmem:[%s0 + $0x4] sm:$0xf]
    %v26 = vld [vmem:[%s0 + $0x8] sm:$0xf]
    %v27 = vld [vmem:[%s0 + $0xc] sm:$0xf]
    %v28 = vunpack.c.l.bf16 %v24
    %v29 = vunpack.c.l.bf16 %v25
    %v30 = vunpack.c.l.bf16 %v26
    %v31 = vunpack.c.l.bf16 %v27
    %32 = vadd.xlane.f32.xlu0 %v28
    %v33 = vpop.xlane.xlu0 %32
    %34 = vadd.xlane.f32.xlu0 %v29
    %v35 = vpop.xlane.xlu0 %34
    %36 = vadd.xlane.f32.xlu0 %v30
    %v37 = vpop.xlane.xlu0 %36
    %38 = vadd.xlane.f32.xlu0 %v31
    %v39 = vpop.xlane.xlu0 %38
    %v40 = vrcp.pop 128.0
    %v41 = vmul.f32 128.0, %v40
    %v42 = vsub.f32 1.0, %v41
    %v43 = vmul.f32 %v40, %v42
    %v44 = vadd.f32 %v40, %v43
    %vm45 = vweird.f32 %v40
    %v46 = vsel %vm45, %v40, %v44
    %v47 = vmul.f32 %v33, %v46
    %v48 = vmul.f32 %v35, %v46
    %v49 = vmul.f32 %v37, %v46
    %v50 = vmul.f32 %v39, %v46
    %v51 = vsub.f32 %v28, %v47
    %v52 = vsub.f32 %v29, %v48
    %v53 = vsub.f32 %v30, %v49
    %v54 = vsub.f32 %v31, %v50
    %v55 = vmul.f32 %v51, %v51
    %v56 = vmul.f32 %v52, %v52
    %v57 = vmul.f32 %v53, %v53
    %v58 = vmul.f32 %v54, %v54
    %59 = vadd.xlane.f32.xlu0 %v55
    %v60 = vpop.xlane.xlu0 %59
    %61 = vadd.xlane.f32.xlu0 %v56
    %v62 = vpop.xlane.xlu0 %61
    %63 = vadd.xlane.f32.xlu0 %v57
    %v64 = vpop.xlane.xlu0 %63
    %65 = vadd.xlane.f32.xlu0 %v58
    %v66 = vpop.xlane.xlu0 %65
    %v67 = vmul.f32 %v60, %v46
    %v68 = vmul.f32 %v62, %v46
    %v69 = vmul.f32 %v64, %v46
    %v70 = vmul.f32 %v66, %v46
    %v71 = vadd.f32 %v67, 1e-06
    %v72 = vadd.f32 %v68, 1e-06
    %v73 = vadd.f32 %v69, 1e-06
    %v74 = vadd.f32 %v70, 1e-06
    %v75 = vrsqrt.pop %v71
    %v76 = vmul.f32 %v75, %v71
    %v77 = vmul.f32 %v76, %v75
    %v78 = vmul.f32 0.5, %v77
    %v79 = vsub.f32 1.5, %v78
    %v80 = vmul.f32 %v75, %v79
    %vm81 = vweird.f32 %v71
    %vm82 = vweird.f32 %v75
    %vm83 = vmor %vm81, %vm82
    %v84 = vsel %vm83, %v75, %v80
    %v85 = vrsqrt.pop %v72
    %v86 = vmul.f32 %v85, %v72
    %v87 = vmul.f32 %v86, %v85
    %v88 = vmul.f32 0.5, %v87
    %v89 = vsub.f32 1.5, %v88
    %v90 = vmul.f32 %v85, %v89
    %vm91 = vweird.f32 %v72
    %vm92 = vweird.f32 %v85
    %vm93 = vmor %vm91, %vm92
    %v94 = vsel %vm93, %v85, %v90
    %v95 = vrsqrt.pop %v73
    %v96 = vmul.f32 %v95, %v73
    %v97 = vmul.f32 %v96, %v95
    %v98 = vmul.f32 0.5, %v97
    %v99 = vsub.f32 1.5, %v98
    %v100 = vmul.f32 %v95, %v99
    %vm101 = vweird.f32 %v73
    %vm102 = vweird.f32 %v95
    %vm103 = vmor %vm101, %vm102
    %v104 = vsel %vm103, %v95, %v100
    %v105 = vrsqrt.pop %v74
    %v106 = vmul.f32 %v105, %v74
    %v107 = vmul.f32 %v106, %v105
    %v108 = vmul.f32 0.5, %v107
    %v109 = vsub.f32 1.5, %v108
    %v110 = vmul.f32 %v105, %v109
    %vm111 = vweird.f32 %v74
    %vm112 = vweird.f32 %v105
    %vm113 = vmor %vm111, %vm112
    %v114 = vsel %vm113, %v105, %v110
    %v115 = vmul.f32 %v51, %v84
    %v116 = vmul.f32 %v52, %v94
    %v117 = vmul.f32 %v53, %v104
    %v118 = vmul.f32 %v54, %v114
    %v119 = vld [vmem:[%s1] sm:$0x1]
    %v121 = vperm.slane %v119, 0
    %v123 = vmul.f32 %v115, %v121
    %v124 = vmul.f32 %v116, %v121
    %v125 = vmul.f32 %v117, %v121
    %v126 = vmul.f32 %v118, %v121
    %v127 = vld [vmem:[%s2] sm:$0x1]
    %v129 = vperm.slane %v127, 0
    %v131 = vadd.f32 %v123, %v129
    %v132 = vadd.f32 %v124, %v129
    %v133 = vadd.f32 %v125, %v129
    %v134 = vadd.f32 %v126, %v129
    %v135 = vpack.c.bf16 %v131, %v131
    %v136 = vpack.c.bf16 %v132, %v132
    %v137 = vpack.c.bf16 %v133, %v133
    %v138 = vpack.c.bf16 %v134, %v134
    %139 = vst [vmem:[#allocation2] sm:$0xf] %v135
    %140 = vst [vmem:[#allocation2 + $0x4] sm:$0xf] %v136
    %141 = vst [vmem:[#allocation2 + $0x8] sm:$0xf] %v137
    %142 = vst [vmem:[#allocation2 + $0xc] sm:$0xf] %v138
  $region25: #{pat_forward.13} parent=0 // pred_fallthru
    _
  %v143 = vld [vmem:[#allocation2] sm:$0xf]
  %v144 = vld [vmem:[#allocation2 + $0x4] sm:$0xf]
  %v145 = vld [vmem:[#allocation2 + $0x8] sm:$0xf]
  %v146 = vld [vmem:[#allocation2 + $0xc] sm:$0xf]
  %v147 = vld [vmem:[%s3] sm:$0xff]
  %v148 = vld [vmem:[%s3 + $0x8] sm:$0xf]
  %v149 = vld [vmem:[%s3 + $0xc] sm:$0xff]
  %v150 = vld [vmem:[%s3 + $0x14] sm:$0xf]
  %v151 = vld [vmem:[%s3 + $0x18] sm:$0xff]
  %v152 = vld [vmem:[%s3 + $0x20] sm:$0xf]
  %v153 = vld [vmem:[%s3 + $0x24] sm:$0xff]
  %v154 = vld [vmem:[%s3 + $0x2c] sm:$0xf]
  %v155 = vld [vmem:[%s3 + $0x30] sm:$0xff]
  %v156 = vld [vmem:[%s3 + $0x38] sm:$0xf]
  %v157 = vld [vmem:[%s3 + $0x3c] sm:$0xff]
  %v158 = vld [vmem:[%s3 + $0x44] sm:$0xf]
  %v159 = vld [vmem:[%s3 + $0x48] sm:$0xff]
  %v160 = vld [vmem:[%s3 + $0x50] sm:$0xf]
  %v161 = vld [vmem:[%s3 + $0x54] sm:$0xff]
  %v162 = vld [vmem:[%s3 + $0x5c] sm:$0xf]
  %v163 = vld [vmem:[%s3 + $0x60] sm:$0xff]
  %v164 = vld [vmem:[%s3 + $0x68] sm:$0xf]
  %v165 = vld [vmem:[%s3 + $0x6c] sm:$0xff]
  %v166 = vld [vmem:[%s3 + $0x74] sm:$0xf]
  %v167 = vld [vmem:[%s3 + $0x78] sm:$0xff]
  %v168 = vld [vmem:[%s3 + $0x80] sm:$0xf]
  %v169 = vld [vmem:[%s3 + $0x84] sm:$0xff]
  %v170 = vld [vmem:[%s3 + $0x8c] sm:$0xf]
  %v171 = vld [vmem:[%s3 + $0x90] sm:$0xff]
  %v172 = vld [vmem:[%s3 + $0x98] sm:$0xf]
  %v173 = vld [vmem:[%s3 + $0x9c] sm:$0xff]
  %v174 = vld [vmem:[%s3 + $0xa4] sm:$0xf]
  %v175 = vld [vmem:[%s3 + $0xa8] sm:$0xff]
  %v176 = vld [vmem:[%s3 + $0xb0] sm:$0xf]
  %v177 = vld [vmem:[%s3 + $0xb4] sm:$0xff]
  %v178 = vld [vmem:[%s3 + $0xbc] sm:$0xf]
  %v179 = vld [vmem:[%s4] sm:$0x7]
  %v181 = vperm.slane %v179, 0
  %v182 = vperm.slane %v179, 1
  %v183 = vperm.slane %v179, 2
  %v191 = vunpack.c.l.b16 %v143
  %v192 = vunpack.c.l.b16 %v144
  %v193 = vunpack.c.l.b16 %v145
  %v194 = vunpack.c.l.b16 %v146
  %v195 = vpack.c.b16 %v192, %v191
  %v196 = vpack.c.b16 %v194, %v193
  %v231 = vunpack.c.l.b16 %v147
  %v232 = vunpack.c.h.b16 %v147
  %v233 = vunpack.c.l.b16 %v148
  %v234 = vunpack.c.l.b16 %v149
  %v235 = vunpack.c.h.b16 %v149
  %v236 = vunpack.c.l.b16 %v150
  %v237 = vunpack.c.l.b16 %v151
  %v238 = vunpack.c.h.b16 %v151
  %v239 = vunpack.c.l.b16 %v152
  %v240 = vunpack.c.l.b16 %v153
  %v241 = vunpack.c.h.b16 %v153
  %v242 = vunpack.c.l.b16 %v154
  %v243 = vunpack.c.l.b16 %v155
  %v244 = vunpack.c.h.b16 %v155
  %v245 = vunpack.c.l.b16 %v156
  %v246 = vunpack.c.l.b16 %v157
  %v247 = vunpack.c.h.b16 %v157
  %v248 = vunpack.c.l.b16 %v158
  %v249 = vunpack.c.l.b16 %v159
  %v250 = vunpack.c.h.b16 %v159
  %v251 = vunpack.c.l.b16 %v160
  %v252 = vunpack.c.l.b16 %v161
  %v253 = vunpack.c.h.b16 %v161
  %v254 = vunpack.c.l.b16 %v162
  %v255 = vunpack.c.l.b16 %v163
  %v256 = vunpack.c.h.b16 %v163
  %v257 = vunpack.c.l.b16 %v164
  %v258 = vunpack.c.l.b16 %v165
  %v259 = vunpack.c.h.b16 %v165
  %v260 = vunpack.c.l.b16 %v166
  %v261 = vunpack.c.l.b16 %v167
  %v262 = vunpack.c.h.b16 %v167
  %v263 = vunpack.c.l.b16 %v168
  %v264 = vunpack.c.l.b16 %v169
  %v265 = vunpack.c.h.b16 %v169
  %v266 = vunpack.c.l.b16 %v170
  %v267 = vunpack.c.l.b16 %v171
  %v268 = vunpack.c.h.b16 %v171
  %v269 = vunpack.c.l.b16 %v172
  %v270 = vunpack.c.l.b16 %v173
  %v271 = vunpack.c.h.b16 %v173
  %v272 = vunpack.c.l.b16 %v174
  %v273 = vunpack.c.l.b16 %v175
  %v274 = vunpack.c.h.b16 %v175
  %v275 = vunpack.c.l.b16 %v176
  %v276 = vunpack.c.l.b16 %v177
  %v277 = vunpack.c.h.b16 %v177
  %v278 = vunpack.c.l.b16 %v178
  %v279 = vpack.c.b16 %v234, %v231
  %v280 = vpack.c.b16 %v235, %v232
  %v281 = vpack.c.b16 %v236, %v233
  %v282 = vpack.c.b16 %v240, %v237
  %v283 = vpack.c.b16 %v241, %v238
  %v284 = vpack.c.b16 %v242, %v239
  %v285 = vpack.c.b16 %v246, %v243
  %v286 = vpack.c.b16 %v247, %v244
  %v287 = vpack.c.b16 %v248, %v245
  %v288 = vpack.c.b16 %v252, %v249
  %v289 = vpack.c.b16 %v253, %v250
  %v290 = vpack.c.b16 %v254, %v251
  %v291 = vpack.c.b16 %v258, %v255
  %v292 = vpack.c.b16 %v259, %v256
  %v293 = vpack.c.b16 %v260, %v257
  %v294 = vpack.c.b16 %v264, %v261
  %v295 = vpack.c.b16 %v265, %v262
  %v296 = vpack.c.b16 %v266, %v263
  %v297 = vpack.c.b16 %v270, %v267
  %v298 = vpack.c.b16 %v271, %v268
  %v299 = vpack.c.b16 %v272, %v269
  %v300 = vpack.c.b16 %v276, %v273
  %v301 = vpack.c.b16 %v277, %v274
  %v302 = vpack.c.b16 %v278, %v275
  %327 = vmatpush.bf16.msra.mxu0 %v300
  %328 = vmatpush.bf16.msra.mxu0 %v297
  %329 = vmatpush.bf16.msra.mxu0 %v294
  %330 = vmatpush.bf16.msra.mxu0 %v291
  %331 = vmatpush.bf16.msra.mxu0 %v288
  %332 = vmatpush.bf16.msra.mxu0 %v285
  %333 = vmatpush.bf16.msra.mxu0 %v282
  %334 = vmatpush.bf16.msra.mxu0 %v279
  %335 = vmatmul.bf16.gmra.mxu0 %v195
  %v336 = vpop.f32.mrf.mxu0
  %v337 = vadd.f32 %v181, %v336
  %v338 = vpop.f32.mrf.mxu0
  %v339 = vadd.f32 %v181, %v338
  %340 = vmatmul.bf16.gmra.mxu0 %v196
  %v341 = vpop.f32.mrf.mxu0
  %v342 = vadd.f32 %v181, %v341
  %v343 = vpop.f32.mrf.mxu0
  %v344 = vadd.f32 %v181, %v343
  %345 = vdwg.mxu0
  %346 = vmatpush.bf16.msra.mxu0 %v301
  %347 = vmatpush.bf16.msra.mxu0 %v298
  %348 = vmatpush.bf16.msra.mxu0 %v295
  %349 = vmatpush.bf16.msra.mxu0 %v292
  %350 = vmatpush.bf16.msra.mxu0 %v289
  %351 = vmatpush.bf16.msra.mxu0 %v286
  %352 = vmatpush.bf16.msra.mxu0 %v283
  %353 = vmatpush.bf16.msra.mxu0 %v280
  %354 = vmatmul.bf16.gmra.mxu0 %v195
  %v355 = vpop.f32.mrf.mxu0
  %v356 = vadd.f32 %v182, %v355
  %v357 = vpop.f32.mrf.mxu0
  %v358 = vadd.f32 %v182, %v357
  %359 = vmatmul.bf16.gmra.mxu0 %v196
  %v360 = vpop.f32.mrf.mxu0
  %v361 = vadd.f32 %v182, %v360
  %v362 = vpop.f32.mrf.mxu0
  %v363 = vadd.f32 %v182, %v362
  %364 = vdwg.mxu0
  %365 = vmatpush.bf16.msra.mxu0 %v302
  %366 = vmatpush.bf16.msra.mxu0 %v299
  %367 = vmatpush.bf16.msra.mxu0 %v296
  %368 = vmatpush.bf16.msra.mxu0 %v293
  %369 = vmatpush.bf16.msra.mxu0 %v290
  %370 = vmatpush.bf16.msra.mxu0 %v287
  %371 = vmatpush.bf16.msra.mxu0 %v284
  %372 = vmatpush.bf16.msra.mxu0 %v281
  %373 = vmatmul.bf16.gmra.mxu0 %v195
  %v374 = vpop.f32.mrf.mxu0
  %v375 = vadd.f32 %v183, %v374
  %v376 = vpop.f32.mrf.mxu0
  %v377 = vadd.f32 %v183, %v376
  %378 = vmatmul.bf16.gmra.mxu0 %v196
  %v379 = vpop.f32.mrf.mxu0
  %v380 = vadd.f32 %v183, %v379
  %v381 = vpop.f32.mrf.mxu0
  %v382 = vadd.f32 %v183, %v381
  %383 = vdwg.mxu0
  %v384 = vpack.c.bf16 %v356, %v337
  %v385 = vpack.c.bf16 %v375, %v375
  %v386 = vpack.c.bf16 %v358, %v339
  %v387 = vpack.c.bf16 %v377, %v377
  %v388 = vpack.c.bf16 %v361, %v342
  %v389 = vpack.c.bf16 %v380, %v380
  %v390 = vpack.c.bf16 %v363, %v344
  %v391 = vpack.c.bf16 %v382, %v382
  %392 = vst [vmem:[%s5] sm:$0xff] %v384
  %393 = vst [vmem:[%s5 + $0x8] sm:$0xf] %v385
  %394 = vst [vmem:[%s5 + $0xc] sm:$0xff] %v386
  %395 = vst [vmem:[%s5 + $0x14] sm:$0xf] %v387
  %396 = vst [vmem:[%s5 + $0x18] sm:$0xff] %v388
  %397 = vst [vmem:[%s5 + $0x20] sm:$0xf] %v389
  %398 = vst [vmem:[%s5 + $0x24] sm:$0xff] %v390
  %399 = vst [vmem:[%s5 + $0x2c] sm:$0xf] %v391
  // Predicated region
  $region26: #{pat_forward.13} parent=0 // pred_check
    _
  $region27: #{pat_forward.13} parent=0 // pred_check_branch
    %401 = sbr.rel (0) target = $region29
  $region28: #{pat_forward.13} parent=0 // pred_region
    _
  $region29: #{pat_forward.13} parent=0 // pred_fallthru
    _
  // Predicated region
  $region30: #{pat_forward.13} parent=0 // pred_check
    _
  $region31: #{pat_forward.13} parent=0 // pred_check_branch
    %403 = sbr.rel (0) target = $region33
  $region32: #{pat_forward.13} parent=0 // pred_region
    _
  $region33: #{pat_forward.13} parent=0 // pred_fallthru
    _

// kernel: pat_forward.23
$region0: #{pat_forward.23}
  #allocation0 [shape = 'u32[]', space=smem, size = 0x4, offset = 0x4, fixed_abs, tag = 'smem constant byte address 0x4 - core index']
  #allocation1 [shape = 'u32[72,128]{1,0:T(1,128)}', space=vmem, size = 0x9000, scoped, tag = 'internal scratch']
  %s0 = inlined_call_operand.vmem [shape: bf16[32,128], index: 0, kind: input, shape index: {}]
  %s1 = inlined_call_operand.vmem [shape: f32[1,128], index: 1, kind: input, shape index: {}]
  %s2 = inlined_call_operand.vmem [shape: f32[1,128], index: 2, kind: input, shape index: {}]
  %s3 = inlined_call_operand.vmem [shape: f32[32,128], index: 3, kind: output, shape index: {}]
  %s4 = sld [smem:[#allocation0]]
  $region22: #{pat_forward.23} parent=0
    _
  %s6 = ssub.s32 1, %s4
  %s7 = scalar_select 0, %s6, %s4
  // Predicated region
  $region2: #{pat_forward.23} parent=0 // pred_check
    _
  $region3: #{pat_forward.23} parent=0 // pred_check_branch
    %9 = sbr.rel (0) target = $region5
  $region4: #{pat_forward.23} parent=0 // pred_region
    _
  $region5: #{pat_forward.23} parent=0 // pred_fallthru
    _
  // Predicated region
  $region6: #{pat_forward.23} parent=0 // pred_check
    _
  $region7: #{pat_forward.23} parent=0 // pred_check_branch
    %11 = sbr.rel (0) target = $region9
  $region8: #{pat_forward.23} parent=0 // pred_region
    _
  $region9: #{pat_forward.23} parent=0 // pred_fallthru
    _
  // Predicated region
  $region10: #{pat_forward.23} parent=0 // pred_check
    _
  $region11: #{pat_forward.23} parent=0 // pred_check_branch
    %13 = sbr.rel (0) target = $region13
  $region12: #{pat_forward.23} parent=0 // pred_region
    _
  $region13: #{pat_forward.23} parent=0 // pred_fallthru
    _
  %v14 = vld [vmem:[%s0] sm:$0xf]
  %v15 = vld [vmem:[%s0 + $0x4] sm:$0xf]
  %v16 = vld [vmem:[%s0 + $0x8] sm:$0xf]
  %v17 = vld [vmem:[%s0 + $0xc] sm:$0xf]
  %v18 = vunpack.c.l.bf16 %v14
  %v19 = vunpack.c.l.bf16 %v15
  %v20 = vunpack.c.l.bf16 %v16
  %v21 = vunpack.c.l.bf16 %v17
  %22 = vadd.xlane.f32.xlu0 %v18
  %v23 = vpop.xlane.xlu0 %22
  %24 = vadd.xlane.f32.xlu0 %v19
  %v25 = vpop.xlane.xlu0 %24
  %26 = vadd.xlane.f32.xlu0 %v20
  %v27 = vpop.xlane.xlu0 %26
  %28 = vadd.xlane.f32.xlu0 %v21
  %v29 = vpop.xlane.xlu0 %28
  %v30 = vrcp.pop 128.0
  %v31 = vmul.f32 128.0, %v30
  %v32 = vsub.f32 1.0, %v31
  %v33 = vmul.f32 %v30, %v32
  %v34 = vadd.f32 %v30, %v33
  %vm35 = vweird.f32 %v30
  %v36 = vsel %vm35, %v30, %v34
  %v37 = vmul.f32 %v23, %v36
  %v38 = vmul.f32 %v25, %v36
  %v39 = vmul.f32 %v27, %v36
  %v40 = vmul.f32 %v29, %v36
  %v41 = vsub.f32 %v18, %v37
  %v42 = vsub.f32 %v19, %v38
  %v43 = vsub.f32 %v20, %v39
  %v44 = vsub.f32 %v21, %v40
  %v45 = vmul.f32 %v41, %v41
  %v46 = vmul.f32 %v42, %v42
  %v47 = vmul.f32 %v43, %v43
  %v48 = vmul.f32 %v44, %v44
  %49 = vadd.xlane.f32.xlu0 %v45
  %v50 = vpop.xlane.xlu0 %49
  %51 = vadd.xlane.f32.xlu0 %v46
  %v52 = vpop.xlane.xlu0 %51
  %53 = vadd.xlane.f32.xlu0 %v47
  %v54 = vpop.xlane.xlu0 %53
  %55 = vadd.xlane.f32.xlu0 %v48
  %v56 = vpop.xlane.xlu0 %55
  %v57 = vmul.f32 %v50, %v36
  %v58 = vmul.f32 %v52, %v36
  %v59 = vmul.f32 %v54, %v36
  %v60 = vmul.f32 %v56, %v36
  %v61 = vadd.f32 %v57, 1e-06
  %v62 = vadd.f32 %v58, 1e-06
  %v63 = vadd.f32 %v59, 1e-06
  %v64 = vadd.f32 %v60, 1e-06
  %v65 = vrsqrt.pop %v61
  %v66 = vmul.f32 %v65, %v61
  %v67 = vmul.f32 %v66, %v65
  %v68 = vmul.f32 0.5, %v67
  %v69 = vsub.f32 1.5, %v68
  %v70 = vmul.f32 %v65, %v69
  %vm71 = vweird.f32 %v61
  %vm72 = vweird.f32 %v65
  %vm73 = vmor %vm71, %vm72
  %v74 = vsel %vm73, %v65, %v70
  %v75 = vrsqrt.pop %v62
  %v76 = vmul.f32 %v75, %v62
  %v77 = vmul.f32 %v76, %v75
  %v78 = vmul.f32 0.5, %v77
  %v79 = vsub.f32 1.5, %v78
  %v80 = vmul.f32 %v75, %v79
  %vm81 = vweird.f32 %v62
  %vm82 = vweird.f32 %v75
  %vm83 = vmor %vm81, %vm82
  %v84 = vsel %vm83, %v75, %v80
  %v85 = vrsqrt.pop %v63
  %v86 = vmul.f32 %v85, %v63
  %v87 = vmul.f32 %v86, %v85
  %v88 = vmul.f32 0.5, %v87
  %v89 = vsub.f32 1.5, %v88
  %v90 = vmul.f32 %v85, %v89
  %vm91 = vweird.f32 %v63
  %vm92 = vweird.f32 %v85
  %vm93 = vmor %vm91, %vm92
  %v94 = vsel %vm93, %v85, %v90
  %v95 = vrsqrt.pop %v64
  %v96 = vmul.f32 %v95, %v64
  %v97 = vmul.f32 %v96, %v95
  %v98 = vmul.f32 0.5, %v97
  %v99 = vsub.f32 1.5, %v98
  %v100 = vmul.f32 %v95, %v99
  %vm101 = vweird.f32 %v64
  %vm102 = vweird.f32 %v95
  %vm103 = vmor %vm101, %vm102
  %v104 = vsel %vm103, %v95, %v100
  %v105 = vmul.f32 %v41, %v74
  %v106 = vmul.f32 %v42, %v84
  %v107 = vmul.f32 %v43, %v94
  %v108 = vmul.f32 %v44, %v104
  %v109 = vld [vmem:[%s1] sm:$0x1]
  %v111 = vperm.slane %v109, 0
  %v113 = vmul.f32 %v105, %v111
  %v114 = vmul.f32 %v106, %v111
  %v115 = vmul.f32 %v107, %v111
  %v116 = vmul.f32 %v108, %v111
  %v117 = vld [vmem:[%s2] sm:$0x1]
  %v119 = vperm.slane %v117, 0
  %v121 = vadd.f32 %v113, %v119
  %v122 = vadd.f32 %v114, %v119
  %v123 = vadd.f32 %v115, %v119
  %v124 = vadd.f32 %v116, %v119
  %125 = vst [vmem:[%s3] sm:$0xff] %v121
  %126 = vst [vmem:[%s3 + $0x8] sm:$0xff] %v122
  %127 = vst [vmem:[%s3 + $0x10] sm:$0xff] %v123
  %128 = vst [vmem:[%s3 + $0x18] sm:$0xff] %v124
  // Predicated region
  $region14: #{pat_forward.23} parent=0 // pred_check
    _
  $region15: #{pat_forward.23} parent=0 // pred_check_branch
    %130 = sbr.rel (0) target = $region17
  $region16: #{pat_forward.23} parent=0 // pred_region
    _
  $region17: #{pat_forward.23} parent=0 // pred_fallthru
    _
  // Predicated region
  $region18: #{pat_forward.23} parent=0 // pred_check
    _
  $region19: #{pat_forward.23} parent=0 // pred_check_branch
    %132 = sbr.rel (0) target = $region21
  $region20: #{pat_forward.23} parent=0 // pred_region
    _
  $region21: #{pat_forward.23} parent=0 // pred_fallthru
    _

// kernel: pat_forward.17
$region0: #{pat_forward.17}
  #allocation0 [shape = 'u32[]', space=smem, size = 0x4, offset = 0x4, fixed_abs, tag = 'smem constant byte address 0x4 - core index']
  #allocation1 [shape = 'u32[72,128]{1,0:T(1,128)}', space=vmem, size = 0x9000, scoped, tag = 'internal scratch']
  #allocation2 [shape = 'f32[32,128]{1,0:T(8,128)}', space=vmem, size = 0x4000, scoped, tag = 'scratch operand']
  %s0 = inlined_call_operand.vmem [shape: bf16[32,512], index: 0, kind: input, shape index: {}]
  %s1 = inlined_call_operand.vmem [shape: bf16[512,128], index: 1, kind: input, shape index: {}]
  %s2 = inlined_call_operand.vmem [shape: f32[1,128], index: 2, kind: input, shape index: {}]
  %s3 = inlined_call_operand.vmem [shape: bf16[32,128], index: 3, kind: input, shape index: {}]
  %s4 = inlined_call_operand.vmem [shape: bf16[32,128], index: 4, kind: output, shape index: {}]
  %s5 = sld [smem:[#allocation0]]
  $region34: #{pat_forward.17} parent=0
    _
  %s7 = ssub.s32 1, %s5
  %s8 = scalar_select 0, %s7, %s5
  // Predicated region
  $region2: #{pat_forward.17} parent=0 // pred_check
    _
  $region3: #{pat_forward.17} parent=0 // pred_check_branch
    %10 = sbr.rel (0) target = $region5
  $region4: #{pat_forward.17} parent=0 // pred_region
    _
  $region5: #{pat_forward.17} parent=0 // pred_fallthru
    _
  // Predicated region
  $region6: #{pat_forward.17} parent=0 // pred_check
    _
  $region7: #{pat_forward.17} parent=0 // pred_check_branch
    %12 = sbr.rel (0) target = $region9
  $region8: #{pat_forward.17} parent=0 // pred_region
    _
  $region9: #{pat_forward.17} parent=0 // pred_fallthru
    _
  // Predicated region
  $region10: #{pat_forward.17} parent=0 // pred_check
    _
  $region11: #{pat_forward.17} parent=0 // pred_check_branch
    %14 = sbr.rel (0) target = $region13
  $region12: #{pat_forward.17} parent=0 // pred_region
    _
  $region13: #{pat_forward.17} parent=0 // pred_fallthru
    _
  // Predicated region
  $region14: #{pat_forward.17} parent=0 // pred_check
    _
  $region15: #{pat_forward.17} parent=0 // pred_check_branch
    %16 = sbr.rel (0) target = $region17
  $region16: #{pat_forward.17} parent=0 // pred_region
    _
  $region17: #{pat_forward.17} parent=0 // pred_fallthru
    _
  %p17 = scmp.eq.s32.totalorder 0, 0
  // Predicated region
  $region18: #{pat_forward.17} parent=0 // pred_check
    %p18 = pneg %p17
  $region19: #{pat_forward.17} parent=0 // pred_check_branch
    %20 = sbr.rel (%p18) target = $region21
  $region20: #{pat_forward.17} parent=0 // pred_region
    %21 = vst [vmem:[#allocation2] sm:$0xff] 0.0
    %22 = vst [vmem:[#allocation2 + $0x8] sm:$0xff] 0.0
    %23 = vst [vmem:[#allocation2 + $0x10] sm:$0xff] 0.0
    %24 = vst [vmem:[#allocation2 + $0x18] sm:$0xff] 0.0
  $region21: #{pat_forward.17} parent=0 // pred_fallthru
    _
  %v25 = vld [vmem:[#allocation2] sm:$0xff]
  %v26 = vld [vmem:[#allocation2 + $0x8] sm:$0xff]
  %v27 = vld [vmem:[#allocation2 + $0x10] sm:$0xff]
  %v28 = vld [vmem:[#allocation2 + $0x18] sm:$0xff]
  %v29 = vld [vmem:[%s0] sm:$0xff]
  %v30 = vld [vmem:[%s0 + $0x8] sm:$0xff]
  %v31 = vld [vmem:[%s0 + $0x10] sm:$0xff]
  %v32 = vld [vmem:[%s0 + $0x18] sm:$0xff]
  %v33 = vld [vmem:[%s0 + $0x20] sm:$0xff]
  %v34 = vld [vmem:[%s0 + $0x28] sm:$0xff]
  %v35 = vld [vmem:[%s0 + $0x30] sm:$0xff]
  %v36 = vld [vmem:[%s0 + $0x38] sm:$0xff]
  %v37 = vld [vmem:[%s1] sm:$0xf]
  %v38 = vld [vmem:[%s1 + $0x4] sm:$0xf]
  %v39 = vld [vmem:[%s1 + $0x8] sm:$0xf]
  %v40 = vld [vmem:[%s1 + $0xc] sm:$0xf]
  %v41 = vld [vmem:[%s1 + $0x10] sm:$0xf]
  %v42 = vld [vmem:[%s1 + $0x14] sm:$0xf]
  %v43 = vld [vmem:[%s1 + $0x18] sm:$0xf]
  %v44 = vld [vmem:[%s1 + $0x1c] sm:$0xf]
  %v45 = vld [vmem:[%s1 + $0x20] sm:$0xf]
  %v46 = vld [vmem:[%s1 + $0x24] sm:$0xf]
  %v47 = vld [vmem:[%s1 + $0x28] sm:$0xf]
  %v48 = vld [vmem:[%s1 + $0x2c] sm:$0xf]
  %v49 = vld [vmem:[%s1 + $0x30] sm:$0xf]
  %v50 = vld [vmem:[%s1 + $0x34] sm:$0xf]
  %v51 = vld [vmem:[%s1 + $0x38] sm:$0xf]
  %v52 = vld [vmem:[%s1 + $0x3c] sm:$0xf]
  %v53 = vld [vmem:[%s1 + $0x40] sm:$0xf]
  %v54 = vld [vmem:[%s1 + $0x44] sm:$0xf]
  %v55 = vld [vmem:[%s1 + $0x48] sm:$0xf]
  %v56 = vld [vmem:[%s1 + $0x4c] sm:$0xf]
  %v57 = vld [vmem:[%s1 + $0x50] sm:$0xf]
  %v58 = vld [vmem:[%s1 + $0x54] sm:$0xf]
  %v59 = vld [vmem:[%s1 + $0x58] sm:$0xf]
  %v60 = vld [vmem:[%s1 + $0x5c] sm:$0xf]
  %v61 = vld [vmem:[%s1 + $0x60] sm:$0xf]
  %v62 = vld [vmem:[%s1 + $0x64] sm:$0xf]
  %v63 = vld [vmem:[%s1 + $0x68] sm:$0xf]
  %v64 = vld [vmem:[%s1 + $0x6c] sm:$0xf]
  %v65 = vld [vmem:[%s1 + $0x70] sm:$0xf]
  %v66 = vld [vmem:[%s1 + $0x74] sm:$0xf]
  %v67 = vld [vmem:[%s1 + $0x78] sm:$0xf]
  %v68 = vld [vmem:[%s1 + $0x7c] sm:$0xf]
  %v69 = vld [vmem:[%s1 + $0x80] sm:$0xf]
  %v70 = vld [vmem:[%s1 + $0x84] sm:$0xf]
  %v71 = vld [vmem:[%s1 + $0x88] sm:$0xf]
  %v72 = vld [vmem:[%s1 + $0x8c] sm:$0xf]
  %v73 = vld [vmem:[%s1 + $0x90] sm:$0xf]
  %v74 = vld [vmem:[%s1 + $0x94] sm:$0xf]
  %v75 = vld [vmem:[%s1 + $0x98] sm:$0xf]
  %v76 = vld [vmem:[%s1 + $0x9c] sm:$0xf]
  %v77 = vld [vmem:[%s1 + $0xa0] sm:$0xf]
  %v78 = vld [vmem:[%s1 + $0xa4] sm:$0xf]
  %v79 = vld [vmem:[%s1 + $0xa8] sm:$0xf]
  %v80 = vld [vmem:[%s1 + $0xac] sm:$0xf]
  %v81 = vld [vmem:[%s1 + $0xb0] sm:$0xf]
  %v82 = vld [vmem:[%s1 + $0xb4] sm:$0xf]
  %v83 = vld [vmem:[%s1 + $0xb8] sm:$0xf]
  %v84 = vld [vmem:[%s1 + $0xbc] sm:$0xf]
  %v85 = vld [vmem:[%s1 + $0xc0] sm:$0xf]
  %v86 = vld [vmem:[%s1 + $0xc4] sm:$0xf]
  %v87 = vld [vmem:[%s1 + $0xc8] sm:$0xf]
  %v88 = vld [vmem:[%s1 + $0xcc] sm:$0xf]
  %v89 = vld [vmem:[%s1 + $0xd0] sm:$0xf]
  %v90 = vld [vmem:[%s1 + $0xd4] sm:$0xf]
  %v91 = vld [vmem:[%s1 + $0xd8] sm:$0xf]
  %v92 = vld [vmem:[%s1 + $0xdc] sm:$0xf]
  %v93 = vld [vmem:[%s1 + $0xe0] sm:$0xf]
  %v94 = vld [vmem:[%s1 + $0xe4] sm:$0xf]
  %v95 = vld [vmem:[%s1 + $0xe8] sm:$0xf]
  %v96 = vld [vmem:[%s1 + $0xec] sm:$0xf]
  %v97 = vld [vmem:[%s1 + $0xf0] sm:$0xf]
  %v98 = vld [vmem:[%s1 + $0xf4] sm:$0xf]
  %v99 = vld [vmem:[%s1 + $0xf8] sm:$0xf]
  %v100 = vld [vmem:[%s1 + $0xfc] sm:$0xf]
  %v109 = vunpack.c.l.b16 %v29
  %v110 = vunpack.c.h.b16 %v29
  %v111 = vunpack.c.l.b16 %v30
  %v112 = vunpack.c.h.b16 %v30
  %v113 = vunpack.c.l.b16 %v31
  %v114 = vunpack.c.h.b16 %v31
  %v115 = vunpack.c.l.b16 %v32
  %v116 = vunpack.c.h.b16 %v32
  %v117 = vunpack.c.l.b16 %v33
  %v118 = vunpack.c.h.b16 %v33
  %v119 = vunpack.c.l.b16 %v34
  %v120 = vunpack.c.h.b16 %v34
  %v121 = vunpack.c.l.b16 %v35
  %v122 = vunpack.c.h.b16 %v35
  %v123 = vunpack.c.l.b16 %v36
  %v124 = vunpack.c.h.b16 %v36
  %v125 = vpack.c.b16 %v113, %v109
  %v126 = vpack.c.b16 %v114, %v110
  %v127 = vpack.c.b16 %v115, %v111
  %v128 = vpack.c.b16 %v116, %v112
  %v129 = vpack.c.b16 %v121, %v117
  %v130 = vpack.c.b16 %v122, %v118
  %v131 = vpack.c.b16 %v123, %v119
  %v132 = vpack.c.b16 %v124, %v120
  %v205 = vunpack.c.l.b16 %v37
  %v206 = vunpack.c.l.b16 %v38
  %v207 = vunpack.c.l.b16 %v39
  %v208 = vunpack.c.l.b16 %v40
  %v209 = vunpack.c.l.b16 %v41
  %v210 = vunpack.c.l.b16 %v42
  %v211 = vunpack.c.l.b16 %v43
  %v212 = vunpack.c.l.b16 %v44
  %v213 = vunpack.c.l.b16 %v45
  %v214 = vunpack.c.l.b16 %v46
  %v215 = vunpack.c.l.b16 %v47
  %v216 = vunpack.c.l.b16 %v48
  %v217 = vunpack.c.l.b16 %v49
  %v218 = vunpack.c.l.b16 %v50
  %v219 = vunpack.c.l.b16 %v51
  %v220 = vunpack.c.l.b16 %v52
  %v221 = vunpack.c.l.b16 %v53
  %v222 = vunpack.c.l.b16 %v54
  %v223 = vunpack.c.l.b16 %v55
  %v224 = vunpack.c.l.b16 %v56
  %v225 = vunpack.c.l.b16 %v57
  %v226 = vunpack.c.l.b16 %v58
  %v227 = vunpack.c.l.b16 %v59
  %v228 = vunpack.c.l.b16 %v60
  %v229 = vunpack.c.l.b16 %v61
  %v230 = vunpack.c.l.b16 %v62
  %v231 = vunpack.c.l.b16 %v63
  %v232 = vunpack.c.l.b16 %v64
  %v233 = vunpack.c.l.b16 %v65
  %v234 = vunpack.c.l.b16 %v66
  %v235 = vunpack.c.l.b16 %v67
  %v236 = vunpack.c.l.b16 %v68
  %v237 = vunpack.c.l.b16 %v69
  %v238 = vunpack.c.l.b16 %v70
  %v239 = vunpack.c.l.b16 %v71
  %v240 = vunpack.c.l.b16 %v72
  %v241 = vunpack.c.l.b16 %v73
  %v242 = vunpack.c.l.b16 %v74
  %v243 = vunpack.c.l.b16 %v75
  %v244 = vunpack.c.l.b16 %v76
  %v245 = vunpack.c.l.b16 %v77
  %v246 = vunpack.c.l.b16 %v78
  %v247 = vunpack.c.l.b16 %v79
  %v248 = vunpack.c.l.b16 %v80
  %v249 = vunpack.c.l.b16 %v81
  %v250 = vunpack.c.l.b16 %v82
  %v251 = vunpack.c.l.b16 %v83
  %v252 = vunpack.c.l.b16 %v84
  %v253 = vunpack.c.l.b16 %v85
  %v254 = vunpack.c.l.b16 %v86
  %v255 = vunpack.c.l.b16 %v87
  %v256 = vunpack.c.l.b16 %v88
  %v257 = vunpack.c.l.b16 %v89
  %v258 = vunpack.c.l.b16 %v90
  %v259 = vunpack.c.l.b16 %v91
  %v260 = vunpack.c.l.b16 %v92
  %v261 = vunpack.c.l.b16 %v93
  %v262 = vunpack.c.l.b16 %v94
  %v263 = vunpack.c.l.b16 %v95
  %v264 = vunpack.c.l.b16 %v96
  %v265 = vunpack.c.l.b16 %v97
  %v266 = vunpack.c.l.b16 %v98
  %v267 = vunpack.c.l.b16 %v99
  %v268 = vunpack.c.l.b16 %v100
  %v269 = vpack.c.b16 %v206, %v205
  %v270 = vpack.c.b16 %v208, %v207
  %v271 = vpack.c.b16 %v210, %v209
  %v272 = vpack.c.b16 %v212, %v211
  %v273 = vpack.c.b16 %v214, %v213
  %v274 = vpack.c.b16 %v216, %v215
  %v275 = vpack.c.b16 %v218, %v217
  %v276 = vpack.c.b16 %v220, %v219
  %v277 = vpack.c.b16 %v222, %v221
  %v278 = vpack.c.b16 %v224, %v223
  %v279 = vpack.c.b16 %v226, %v225
  %v280 = vpack.c.b16 %v228, %v227
  %v281 = vpack.c.b16 %v230, %v229
  %v282 = vpack.c.b16 %v232, %v231
  %v283 = vpack.c.b16 %v234, %v233
  %v284 = vpack.c.b16 %v236, %v235
  %v285 = vpack.c.b16 %v238, %v237
  %v286 = vpack.c.b16 %v240, %v239
  %v287 = vpack.c.b16 %v242, %v241
  %v288 = vpack.c.b16 %v244, %v243
  %v289 = vpack.c.b16 %v246, %v245
  %v290 = vpack.c.b16 %v248, %v247
  %v291 = vpack.c.b16 %v250, %v249
  %v292 = vpack.c.b16 %v252, %v251
  %v293 = vpack.c.b16 %v254, %v253
  %v294 = vpack.c.b16 %v256, %v255
  %v295 = vpack.c.b16 %v258, %v257
  %v296 = vpack.c.b16 %v260, %v259
  %v297 = vpack.c.b16 %v262, %v261
  %v298 = vpack.c.b16 %v264, %v263
  %v299 = vpack.c.b16 %v266, %v265
  %v300 = vpack.c.b16 %v268, %v267
  %333 = vmatpush.bf16.msra.mxu0 %v276
  %334 = vmatpush.bf16.msra.mxu0 %v275
  %335 = vmatpush.bf16.msra.mxu0 %v274
  %336 = vmatpush.bf16.msra.mxu0 %v273
  %337 = vmatpush.bf16.msra.mxu0 %v272
  %338 = vmatpush.bf16.msra.mxu0 %v271
  %339 = vmatpush.bf16.msra.mxu0 %v270
  %340 = vmatpush.bf16.msra.mxu0 %v269
  %341 = vmatmul.bf16.gmra.mxu0 %v125
  %v342 = vpop.f32.mrf.mxu0
  %v343 = vadd.f32 0.0, %v342
  %v344 = vpop.f32.mrf.mxu0
  %v345 = vadd.f32 0.0, %v344
  %346 = vmatmul.bf16.gmra.mxu0 %v129
  %v347 = vpop.f32.mrf.mxu0
  %v348 = vadd.f32 0.0, %v347
  %v349 = vpop.f32.mrf.mxu0
  %v350 = vadd.f32 0.0, %v349
  %351 = vdwg.mxu0
  %352 = vmatpush.bf16.msra.mxu0 %v284
  %353 = vmatpush.bf16.msra.mxu0 %v283
  %354 = vmatpush.bf16.msra.mxu0 %v282
  %355 = vmatpush.bf16.msra.mxu0 %v281
  %356 = vmatpush.bf16.msra.mxu0 %v280
  %357 = vmatpush.bf16.msra.mxu0 %v279
  %358 = vmatpush.bf16.msra.mxu0 %v278
  %359 = vmatpush.bf16.msra.mxu0 %v277
  %360 = vmatmul.bf16.gmra.mxu0 %v126
  %v361 = vpop.f32.mrf.mxu0
  %v362 = vadd.f32 %v343, %v361
  %v363 = vpop.f32.mrf.mxu0
  %v364 = vadd.f32 %v345, %v363
  %365 = vmatmul.bf16.gmra.mxu0 %v130
  %v366 = vpop.f32.mrf.mxu0
  %v367 = vadd.f32 %v348, %v366
  %v368 = vpop.f32.mrf.mxu0
  %v369 = vadd.f32 %v350, %v368
  %370 = vdwg.mxu0
  %371 = vmatpush.bf16.msra.mxu0 %v292
  %372 = vmatpush.bf16.msra.mxu0 %v291
  %373 = vmatpush.bf16.msra.mxu0 %v290
  %374 = vmatpush.bf16.msra.mxu0 %v289
  %375 = vmatpush.bf16.msra.mxu0 %v288
  %376 = vmatpush.bf16.msra.mxu0 %v287
  %377 = vmatpush.bf16.msra.mxu0 %v286
  %378 = vmatpush.bf16.msra.mxu0 %v285
  %379 = vmatmul.bf16.gmra.mxu0 %v127
  %v380 = vpop.f32.mrf.mxu0
  %v381 = vadd.f32 %v362, %v380
  %v382 = vpop.f32.mrf.mxu0
  %v383 = vadd.f32 %v364, %v382
  %384 = vmatmul.bf16.gmra.mxu0 %v131
  %v385 = vpop.f32.mrf.mxu0
  %v386 = vadd.f32 %v367, %v385
  %v387 = vpop.f32.mrf.mxu0
  %v388 = vadd.f32 %v369, %v387
  %389 = vdwg.mxu0
  %390 = vmatpush.bf16.msra.mxu0 %v300
  %391 = vmatpush.bf16.msra.mxu0 %v299
  %392 = vmatpush.bf16.msra.mxu0 %v298
  %393 = vmatpush.bf16.msra.mxu0 %v297
  %394 = vmatpush.bf16.msra.mxu0 %v296
  %395 = vmatpush.bf16.msra.mxu0 %v295
  %396 = vmatpush.bf16.msra.mxu0 %v294
  %397 = vmatpush.bf16.msra.mxu0 %v293
  %398 = vmatmul.bf16.gmra.mxu0 %v128
  %v399 = vpop.f32.mrf.mxu0
  %v400 = vadd.f32 %v381, %v399
  %v401 = vpop.f32.mrf.mxu0
  %v402 = vadd.f32 %v383, %v401
  %403 = vmatmul.bf16.gmra.mxu0 %v132
  %v404 = vpop.f32.mrf.mxu0
  %v405 = vadd.f32 %v386, %v404
  %v406 = vpop.f32.mrf.mxu0
  %v407 = vadd.f32 %v388, %v406
  %408 = vdwg.mxu0
  %v409 = vadd.f32 %v25, %v400
  %v410 = vadd.f32 %v26, %v402
  %v411 = vadd.f32 %v27, %v405
  %v412 = vadd.f32 %v28, %v407
  %413 = vst [vmem:[#allocation2] sm:$0xff] %v409
  %414 = vst [vmem:[#allocation2 + $0x8] sm:$0xff] %v410
  %415 = vst [vmem:[#allocation2 + $0x10] sm:$0xff] %v411
  %416 = vst [vmem:[#allocation2 + $0x18] sm:$0xff] %v412
  // Predicated region
  $region22: #{pat_forward.17} parent=0 // pred_check
    %p417 = pneg %p17
  $region23: #{pat_forward.17} parent=0 // pred_check_branch
    %419 = sbr.rel (%p417) target = $region25
  $region24: #{pat_forward.17} parent=0 // pred_region
    %v420 = vld [vmem:[#allocation2] sm:$0xff]
    %v421 = vld [vmem:[#allocation2 + $0x8] sm:$0xff]
    %v422 = vld [vmem:[#allocation2 + $0x10] sm:$0xff]
    %v423 = vld [vmem:[#allocation2 + $0x18] sm:$0xff]
    %v424 = vld [vmem:[%s2] sm:$0x1]
    %v426 = vperm.slane %v424, 0
    %v428 = vadd.f32 %v420, %v426
    %v429 = vadd.f32 %v421, %v426
    %v430 = vadd.f32 %v422, %v426
    %v431 = vadd.f32 %v423, %v426
    %v432 = vld [vmem:[%s3] sm:$0xf]
    %v433 = vld [vmem:[%s3 + $0x4] sm:$0xf]
    %v434 = vld [vmem:[%s3 + $0x8] sm:$0xf]
    %v435 = vld [vmem:[%s3 + $0xc] sm:$0xf]
    %v436 = vunpack.c.l.bf16 %v432
    %v437 = vunpack.c.l.bf16 %v433
    %v438 = vunpack.c.l.bf16 %v434
    %v439 = vunpack.c.l.bf16 %v435
    %v440 = vadd.f32 %v428, %v436
    %v441 = vadd.f32 %v429, %v437
    %v442 = vadd.f32 %v430, %v438
    %v443 = vadd.f32 %v431, %v439
    %v444 = vpack.c.bf16 %v440, %v440
    %v445 = vpack.c.bf16 %v441, %v441
    %v446 = vpack.c.bf16 %v442, %v442
    %v447 = vpack.c.bf16 %v443, %v443
    %448 = vst [vmem:[%s4] sm:$0xf] %v444
    %449 = vst [vmem:[%s4 + $0x4] sm:$0xf] %v445
    %450 = vst [vmem:[%s4 + $0x8] sm:$0xf] %v446
    %451 = vst [vmem:[%s4 + $0xc] sm:$0xf] %v447
  $region25: #{pat_forward.17} parent=0 // pred_fallthru
    _
  // Predicated region
  $region26: #{pat_forward.17} parent=0 // pred_check
    _
  $region27: #{pat_forward.17} parent=0 // pred_check_branch
    %453 = sbr.rel (0) target = $region29
  $region28: #{pat_forward.17} parent=0 // pred_region
    _
  $region29: #{pat_forward.17} parent=0 // pred_fallthru
    _
  // Predicated region
  $region30: #{pat_forward.17} parent=0 // pred_check
    _
  $region31: #{pat_forward.17} parent=0 // pred_check_branch
    %455 = sbr.rel (0) target = $region33
  $region32: #{pat_forward.17} parent=0 // pred_region
    _
  $region33: #{pat_forward.17} parent=0 // pred_fallthru
    _

// kernel: pat_forward.16
$region0: #{pat_forward.16}
  #allocation0 [shape = 'u32[]', space=smem, size = 0x4, offset = 0x4, fixed_abs, tag = 'smem constant byte address 0x4 - core index']
  #allocation1 [shape = 'u32[72,128]{1,0:T(1,128)}', space=vmem, size = 0x9000, scoped, tag = 'internal scratch']
  #allocation2 [shape = 'bf16[32,128]{1,0:T(8,128)(2,1)}', space=vmem, size = 0x2000, scoped, tag = 'scratch operand']
  %s0 = inlined_call_operand.vmem [shape: bf16[32,128], index: 0, kind: input, shape index: {}]
  %s1 = inlined_call_operand.vmem [shape: f32[1,128], index: 1, kind: input, shape index: {}]
  %s2 = inlined_call_operand.vmem [shape: f32[1,128], index: 2, kind: input, shape index: {}]
  %s3 = inlined_call_operand.vmem [shape: bf16[128,512], index: 3, kind: input, shape index: {}]
  %s4 = inlined_call_operand.vmem [shape: f32[1,512], index: 4, kind: input, shape index: {}]
  %s5 = inlined_call_operand.vmem [shape: bf16[32,512], index: 5, kind: output, shape index: {}]
  %s6 = sld [smem:[#allocation0]]
  $region34: #{pat_forward.16} parent=0
    _
  %s8 = ssub.s32 1, %s6
  %s9 = scalar_select 0, %s8, %s6
  // Predicated region
  $region2: #{pat_forward.16} parent=0 // pred_check
    _
  $region3: #{pat_forward.16} parent=0 // pred_check_branch
    %11 = sbr.rel (0) target = $region5
  $region4: #{pat_forward.16} parent=0 // pred_region
    _
  $region5: #{pat_forward.16} parent=0 // pred_fallthru
    _
  // Predicated region
  $region6: #{pat_forward.16} parent=0 // pred_check
    _
  $region7: #{pat_forward.16} parent=0 // pred_check_branch
    %13 = sbr.rel (0) target = $region9
  $region8: #{pat_forward.16} parent=0 // pred_region
    _
  $region9: #{pat_forward.16} parent=0 // pred_fallthru
    _
  // Predicated region
  $region10: #{pat_forward.16} parent=0 // pred_check
    _
  $region11: #{pat_forward.16} parent=0 // pred_check_branch
    %15 = sbr.rel (0) target = $region13
  $region12: #{pat_forward.16} parent=0 // pred_region
    _
  $region13: #{pat_forward.16} parent=0 // pred_fallthru
    _
  // Predicated region
  $region14: #{pat_forward.16} parent=0 // pred_check
    _
  $region15: #{pat_forward.16} parent=0 // pred_check_branch
    %17 = sbr.rel (0) target = $region17
  $region16: #{pat_forward.16} parent=0 // pred_region
    _
  $region17: #{pat_forward.16} parent=0 // pred_fallthru
    _
  // Predicated region
  $region18: #{pat_forward.16} parent=0 // pred_check
    _
  $region19: #{pat_forward.16} parent=0 // pred_check_branch
    %19 = sbr.rel (0) target = $region21
  $region20: #{pat_forward.16} parent=0 // pred_region
    _
  $region21: #{pat_forward.16} parent=0 // pred_fallthru
    _
  %p20 = scmp.eq.s32.totalorder 0, 0
  // Predicated region
  $region22: #{pat_forward.16} parent=0 // pred_check
    %p21 = pneg %p20
  $region23: #{pat_forward.16} parent=0 // pred_check_branch
    %23 = sbr.rel (%p21) target = $region25
  $region24: #{pat_forward.16} parent=0 // pred_region
    %v24 = vld [vmem:[%s0] sm:$0xf]
    %v25 = vld [vmem:[%s0 + $0x4] sm:$0xf]
    %v26 = vld [vmem:[%s0 + $0x8] sm:$0xf]
    %v27 = vld [vmem:[%s0 + $0xc] sm:$0xf]
    %v28 = vunpack.c.l.bf16 %v24
    %v29 = vunpack.c.l.bf16 %v25
    %v30 = vunpack.c.l.bf16 %v26
    %v31 = vunpack.c.l.bf16 %v27
    %32 = vadd.xlane.f32.xlu0 %v28
    %v33 = vpop.xlane.xlu0 %32
    %34 = vadd.xlane.f32.xlu0 %v29
    %v35 = vpop.xlane.xlu0 %34
    %36 = vadd.xlane.f32.xlu0 %v30
    %v37 = vpop.xlane.xlu0 %36
    %38 = vadd.xlane.f32.xlu0 %v31
    %v39 = vpop.xlane.xlu0 %38
    %v40 = vrcp.pop 128.0
    %v41 = vmul.f32 128.0, %v40
    %v42 = vsub.f32 1.0, %v41
    %v43 = vmul.f32 %v40, %v42
    %v44 = vadd.f32 %v40, %v43
    %vm45 = vweird.f32 %v40
    %v46 = vsel %vm45, %v40, %v44
    %v47 = vmul.f32 %v33, %v46
    %v48 = vmul.f32 %v35, %v46
    %v49 = vmul.f32 %v37, %v46
    %v50 = vmul.f32 %v39, %v46
    %v51 = vsub.f32 %v28, %v47
    %v52 = vsub.f32 %v29, %v48
    %v53 = vsub.f32 %v30, %v49
    %v54 = vsub.f32 %v31, %v50
    %v55 = vmul.f32 %v51, %v51
    %v56 = vmul.f32 %v52, %v52
    %v57 = vmul.f32 %v53, %v53
    %v58 = vmul.f32 %v54, %v54
    %59 = vadd.xlane.f32.xlu0 %v55
    %v60 = vpop.xlane.xlu0 %59
    %61 = vadd.xlane.f32.xlu0 %v56
    %v62 = vpop.xlane.xlu0 %61
    %63 = vadd.xlane.f32.xlu0 %v57
    %v64 = vpop.xlane.xlu0 %63
    %65 = vadd.xlane.f32.xlu0 %v58
    %v66 = vpop.xlane.xlu0 %65
    %v67 = vmul.f32 %v60, %v46
    %v68 = vmul.f32 %v62, %v46
    %v69 = vmul.f32 %v64, %v46
    %v70 = vmul.f32 %v66, %v46
    %v71 = vadd.f32 %v67, 1e-06
    %v72 = vadd.f32 %v68, 1e-06
    %v73 = vadd.f32 %v69, 1e-06
    %v74 = vadd.f32 %v70, 1e-06
    %v75 = vrsqrt.pop %v71
    %v76 = vmul.f32 %v75, %v71
    %v77 = vmul.f32 %v76, %v75
    %v78 = vmul.f32 0.5, %v77
    %v79 = vsub.f32 1.5, %v78
    %v80 = vmul.f32 %v75, %v79
    %vm81 = vweird.f32 %v71
    %vm82 = vweird.f32 %v75
    %vm83 = vmor %vm81, %vm82
    %v84 = vsel %vm83, %v75, %v80
    %v85 = vrsqrt.pop %v72
    %v86 = vmul.f32 %v85, %v72
    %v87 = vmul.f32 %v86, %v85
    %v88 = vmul.f32 0.5, %v87
    %v89 = vsub.f32 1.5, %v88
    %v90 = vmul.f32 %v85, %v89
    %vm91 = vweird.f32 %v72
    %vm92 = vweird.f32 %v85
    %vm93 = vmor %vm91, %vm92
    %v94 = vsel %vm93, %v85, %v90
    %v95 = vrsqrt.pop %v73
    %v96 = vmul.f32 %v95, %v73
    %v97 = vmul.f32 %v96, %v95
    %v98 = vmul.f32 0.5, %v97
    %v99 = vsub.f32 1.5, %v98
    %v100 = vmul.f32 %v95, %v99
    %vm101 = vweird.f32 %v73
    %vm102 = vweird.f32 %v95
    %vm103 = vmor %vm101, %vm102
    %v104 = vsel %vm103, %v95, %v100
    %v105 = vrsqrt.pop %v74
    %v106 = vmul.f32 %v105, %v74
    %v107 = vmul.f32 %v106, %v105
    %v108 = vmul.f32 0.5, %v107
    %v109 = vsub.f32 1.5, %v108
    %v110 = vmul.f32 %v105, %v109
    %vm111 = vweird.f32 %v74
    %vm112 = vweird.f32 %v105
    %vm113 = vmor %vm111, %vm112
    %v114 = vsel %vm113, %v105, %v110
    %v115 = vmul.f32 %v51, %v84
    %v116 = vmul.f32 %v52, %v94
    %v117 = vmul.f32 %v53, %v104
    %v118 = vmul.f32 %v54, %v114
    %v119 = vld [vmem:[%s1] sm:$0x1]
    %v121 = vperm.slane %v119, 0
    %v123 = vmul.f32 %v115, %v121
    %v124 = vmul.f32 %v116, %v121
    %v125 = vmul.f32 %v117, %v121
    %v126 = vmul.f32 %v118, %v121
    %v127 = vld [vmem:[%s2] sm:$0x1]
    %v129 = vperm.slane %v127, 0
    %v131 = vadd.f32 %v123, %v129
    %v132 = vadd.f32 %v124, %v129
    %v133 = vadd.f32 %v125, %v129
    %v134 = vadd.f32 %v126, %v129
    %v135 = vpack.c.bf16 %v131, %v131
    %v136 = vpack.c.bf16 %v132, %v132
    %v137 = vpack.c.bf16 %v133, %v133
    %v138 = vpack.c.bf16 %v134, %v134
    %139 = vst [vmem:[#allocation2] sm:$0xf] %v135
    %140 = vst [vmem:[#allocation2 + $0x4] sm:$0xf] %v136
    %141 = vst [vmem:[#allocation2 + $0x8] sm:$0xf] %v137
    %142 = vst [vmem:[#allocation2 + $0xc] sm:$0xf] %v138
  $region25: #{pat_forward.16} parent=0 // pred_fallthru
    _
  %v143 = vld [vmem:[#allocation2] sm:$0xf]
  %v144 = vld [vmem:[#allocation2 + $0x4] sm:$0xf]
  %v145 = vld [vmem:[#allocation2 + $0x8] sm:$0xf]
  %v146 = vld [vmem:[#allocation2 + $0xc] sm:$0xf]
  %v147 = vld [vmem:[%s3] sm:$0xff]
  %v148 = vld [vmem:[%s3 + $0x8] sm:$0xff]
  %v149 = vld [vmem:[%s3 + $0x10] sm:$0xff]
  %v150 = vld [vmem:[%s3 + $0x18] sm:$0xff]
  %v151 = vld [vmem:[%s3 + $0x20] sm:$0xff]
  %v152 = vld [vmem:[%s3 + $0x28] sm:$0xff]
  %v153 = vld [vmem:[%s3 + $0x30] sm:$0xff]
  %v154 = vld [vmem:[%s3 + $0x38] sm:$0xff]
  %v155 = vld [vmem:[%s3 + $0x40] sm:$0xff]
  %v156 = vld [vmem:[%s3 + $0x48] sm:$0xff]
  %v157 = vld [vmem:[%s3 + $0x50] sm:$0xff]
  %v158 = vld [vmem:[%s3 + $0x58] sm:$0xff]
  %v159 = vld [vmem:[%s3 + $0x60] sm:$0xff]
  %v160 = vld [vmem:[%s3 + $0x68] sm:$0xff]
  %v161 = vld [vmem:[%s3 + $0x70] sm:$0xff]
  %v162 = vld [vmem:[%s3 + $0x78] sm:$0xff]
  %v163 = vld [vmem:[%s3 + $0x80] sm:$0xff]
  %v164 = vld [vmem:[%s3 + $0x88] sm:$0xff]
  %v165 = vld [vmem:[%s3 + $0x90] sm:$0xff]
  %v166 = vld [vmem:[%s3 + $0x98] sm:$0xff]
  %v167 = vld [vmem:[%s3 + $0xa0] sm:$0xff]
  %v168 = vld [vmem:[%s3 + $0xa8] sm:$0xff]
  %v169 = vld [vmem:[%s3 + $0xb0] sm:$0xff]
  %v170 = vld [vmem:[%s3 + $0xb8] sm:$0xff]
  %v171 = vld [vmem:[%s3 + $0xc0] sm:$0xff]
  %v172 = vld [vmem:[%s3 + $0xc8] sm:$0xff]
  %v173 = vld [vmem:[%s3 + $0xd0] sm:$0xff]
  %v174 = vld [vmem:[%s3 + $0xd8] sm:$0xff]
  %v175 = vld [vmem:[%s3 + $0xe0] sm:$0xff]
  %v176 = vld [vmem:[%s3 + $0xe8] sm:$0xff]
  %v177 = vld [vmem:[%s3 + $0xf0] sm:$0xff]
  %v178 = vld [vmem:[%s3 + $0xf8] sm:$0xff]
  %v179 = vld [vmem:[%s4] sm:$0xf]
  %v181 = vperm.slane %v179, 0
  %v182 = vperm.slane %v179, 1
  %v183 = vperm.slane %v179, 2
  %v184 = vperm.slane %v179, 3
  %v193 = vunpack.c.l.b16 %v143
  %v194 = vunpack.c.l.b16 %v144
  %v195 = vunpack.c.l.b16 %v145
  %v196 = vunpack.c.l.b16 %v146
  %v197 = vpack.c.b16 %v194, %v193
  %v198 = vpack.c.b16 %v196, %v195
  %v233 = vunpack.c.l.b16 %v147
  %v234 = vunpack.c.h.b16 %v147
  %v235 = vunpack.c.l.b16 %v148
  %v236 = vunpack.c.h.b16 %v148
  %v237 = vunpack.c.l.b16 %v149
  %v238 = vunpack.c.h.b16 %v149
  %v239 = vunpack.c.l.b16 %v150
  %v240 = vunpack.c.h.b16 %v150
  %v241 = vunpack.c.l.b16 %v151
  %v242 = vunpack.c.h.b16 %v151
  %v243 = vunpack.c.l.b16 %v152
  %v244 = vunpack.c.h.b16 %v152
  %v245 = vunpack.c.l.b16 %v153
  %v246 = vunpack.c.h.b16 %v153
  %v247 = vunpack.c.l.b16 %v154
  %v248 = vunpack.c.h.b16 %v154
  %v249 = vunpack.c.l.b16 %v155
  %v250 = vunpack.c.h.b16 %v155
  %v251 = vunpack.c.l.b16 %v156
  %v252 = vunpack.c.h.b16 %v156
  %v253 = vunpack.c.l.b16 %v157
  %v254 = vunpack.c.h.b16 %v157
  %v255 = vunpack.c.l.b16 %v158
  %v256 = vunpack.c.h.b16 %v158
  %v257 = vunpack.c.l.b16 %v159
  %v258 = vunpack.c.h.b16 %v159
  %v259 = vunpack.c.l.b16 %v160
  %v260 = vunpack.c.h.b16 %v160
  %v261 = vunpack.c.l.b16 %v161
  %v262 = vunpack.c.h.b16 %v161
  %v263 = vunpack.c.l.b16 %v162
  %v264 = vunpack.c.h.b16 %v162
  %v265 = vunpack.c.l.b16 %v163
  %v266 = vunpack.c.h.b16 %v163
  %v267 = vunpack.c.l.b16 %v164
  %v268 = vunpack.c.h.b16 %v164
  %v269 = vunpack.c.l.b16 %v165
  %v270 = vunpack.c.h.b16 %v165
  %v271 = vunpack.c.l.b16 %v166
  %v272 = vunpack.c.h.b16 %v166
  %v273 = vunpack.c.l.b16 %v167
  %v274 = vunpack.c.h.b16 %v167
  %v275 = vunpack.c.l.b16 %v168
  %v276 = vunpack.c.h.b16 %v168
  %v277 = vunpack.c.l.b16 %v169
  %v278 = vunpack.c.h.b16 %v169
  %v279 = vunpack.c.l.b16 %v170
  %v280 = vunpack.c.h.b16 %v170
  %v281 = vunpack.c.l.b16 %v171
  %v282 = vunpack.c.h.b16 %v171
  %v283 = vunpack.c.l.b16 %v172
  %v284 = vunpack.c.h.b16 %v172
  %v285 = vunpack.c.l.b16 %v173
  %v286 = vunpack.c.h.b16 %v173
  %v287 = vunpack.c.l.b16 %v174
  %v288 = vunpack.c.h.b16 %v174
  %v289 = vunpack.c.l.b16 %v175
  %v290 = vunpack.c.h.b16 %v175
  %v291 = vunpack.c.l.b16 %v176
  %v292 = vunpack.c.h.b16 %v176
  %v293 = vunpack.c.l.b16 %v177
  %v294 = vunpack.c.h.b16 %v177
  %v295 = vunpack.c.l.b16 %v178
  %v296 = vunpack.c.h.b16 %v178
  %v297 = vpack.c.b16 %v237, %v233
  %v298 = vpack.c.b16 %v238, %v234
  %v299 = vpack.c.b16 %v239, %v235
  %v300 = vpack.c.b16 %v240, %v236
  %v301 = vpack.c.b16 %v245, %v241
  %v302 = vpack.c.b16 %v246, %v242
  %v303 = vpack.c.b16 %v247, %v243
  %v304 = vpack.c.b16 %v248, %v244
  %v305 = vpack.c.b16 %v253, %v249
  %v306 = vpack.c.b16 %v254, %v250
  %v307 = vpack.c.b16 %v255, %v251
  %v308 = vpack.c.b16 %v256, %v252
  %v309 = vpack.c.b16 %v261, %v257
  %v310 = vpack.c.b16 %v262, %v258
  %v311 = vpack.c.b16 %v263, %v259
  %v312 = vpack.c.b16 %v264, %v260
  %v313 = vpack.c.b16 %v269, %v265
  %v314 = vpack.c.b16 %v270, %v266
  %v315 = vpack.c.b16 %v271, %v267
  %v316 = vpack.c.b16 %v272, %v268
  %v317 = vpack.c.b16 %v277, %v273
  %v318 = vpack.c.b16 %v278, %v274
  %v319 = vpack.c.b16 %v279, %v275
  %v320 = vpack.c.b16 %v280, %v276
  %v321 = vpack.c.b16 %v285, %v281
  %v322 = vpack.c.b16 %v286, %v282
  %v323 = vpack.c.b16 %v287, %v283
  %v324 = vpack.c.b16 %v288, %v284
  %v325 = vpack.c.b16 %v293, %v289
  %v326 = vpack.c.b16 %v294, %v290
  %v327 = vpack.c.b16 %v295, %v291
  %v328 = vpack.c.b16 %v296, %v292
  %361 = vmatpush.bf16.msra.mxu0 %v325
  %362 = vmatpush.bf16.msra.mxu0 %v321
  %363 = vmatpush.bf16.msra.mxu0 %v317
  %364 = vmatpush.bf16.msra.mxu0 %v313
  %365 = vmatpush.bf16.msra.mxu0 %v309
  %366 = vmatpush.bf16.msra.mxu0 %v305
  %367 = vmatpush.bf16.msra.mxu0 %v301
  %368 = vmatpush.bf16.msra.mxu0 %v297
  %369 = vmatmul.bf16.gmra.mxu0 %v197
  %v370 = vpop.f32.mrf.mxu0
  %v371 = vadd.f32 %v181, %v370
  %v372 = vpop.f32.mrf.mxu0
  %v373 = vadd.f32 %v181, %v372
  %374 = vmatmul.bf16.gmra.mxu0 %v198
  %v375 = vpop.f32.mrf.mxu0
  %v376 = vadd.f32 %v181, %v375
  %v377 = vpop.f32.mrf.mxu0
  %v378 = vadd.f32 %v181, %v377
  %379 = vdwg.mxu0
  %380 = vmatpush.bf16.msra.mxu0 %v326
  %381 = vmatpush.bf16.msra.mxu0 %v322
  %382 = vmatpush.bf16.msra.mxu0 %v318
  %383 = vmatpush.bf16.msra.mxu0 %v314
  %384 = vmatpush.bf16.msra.mxu0 %v310
  %385 = vmatpush.bf16.msra.mxu0 %v306
  %386 = vmatpush.bf16.msra.mxu0 %v302
  %387 = vmatpush.bf16.msra.mxu0 %v298
  %388 = vmatmul.bf16.gmra.mxu0 %v197
  %v389 = vpop.f32.mrf.mxu0
  %v390 = vadd.f32 %v182, %v389
  %v391 = vpop.f32.mrf.mxu0
  %v392 = vadd.f32 %v182, %v391
  %393 = vmatmul.bf16.gmra.mxu0 %v198
  %v394 = vpop.f32.mrf.mxu0
  %v395 = vadd.f32 %v182, %v394
  %v396 = vpop.f32.mrf.mxu0
  %v397 = vadd.f32 %v182, %v396
  %398 = vdwg.mxu0
  %399 = vmatpush.bf16.msra.mxu0 %v327
  %400 = vmatpush.bf16.msra.mxu0 %v323
  %401 = vmatpush.bf16.msra.mxu0 %v319
  %402 = vmatpush.bf16.msra.mxu0 %v315
  %403 = vmatpush.bf16.msra.mxu0 %v311
  %404 = vmatpush.bf16.msra.mxu0 %v307
  %405 = vmatpush.bf16.msra.mxu0 %v303
  %406 = vmatpush.bf16.msra.mxu0 %v299
  %407 = vmatmul.bf16.gmra.mxu0 %v197
  %v408 = vpop.f32.mrf.mxu0
  %v409 = vadd.f32 %v183, %v408
  %v410 = vpop.f32.mrf.mxu0
  %v411 = vadd.f32 %v183, %v410
  %412 = vmatmul.bf16.gmra.mxu0 %v198
  %v413 = vpop.f32.mrf.mxu0
  %v414 = vadd.f32 %v183, %v413
  %v415 = vpop.f32.mrf.mxu0
  %v416 = vadd.f32 %v183, %v415
  %417 = vdwg.mxu0
  %418 = vmatpush.bf16.msra.mxu0 %v328
  %419 = vmatpush.bf16.msra.mxu0 %v324
  %420 = vmatpush.bf16.msra.mxu0 %v320
  %421 = vmatpush.bf16.msra.mxu0 %v316
  %422 = vmatpush.bf16.msra.mxu0 %v312
  %423 = vmatpush.bf16.msra.mxu0 %v308
  %424 = vmatpush.bf16.msra.mxu0 %v304
  %425 = vmatpush.bf16.msra.mxu0 %v300
  %426 = vmatmul.bf16.gmra.mxu0 %v197
  %v427 = vpop.f32.mrf.mxu0
  %v428 = vadd.f32 %v184, %v427
  %v429 = vpop.f32.mrf.mxu0
  %v430 = vadd.f32 %v184, %v429
  %431 = vmatmul.bf16.gmra.mxu0 %v198
  %v432 = vpop.f32.mrf.mxu0
  %v433 = vadd.f32 %v184, %v432
  %v434 = vpop.f32.mrf.mxu0
  %v435 = vadd.f32 %v184, %v434
  %436 = vdwg.mxu0
  %v437 = vmul.f32 %v371, %v371
  %v438 = vmul.f32 %v390, %v390
  %v439 = vmul.f32 %v409, %v409
  %v440 = vmul.f32 %v428, %v428
  %v441 = vmul.f32 %v373, %v373
  %v442 = vmul.f32 %v392, %v392
  %v443 = vmul.f32 %v411, %v411
  %v444 = vmul.f32 %v430, %v430
  %v445 = vmul.f32 %v376, %v376
  %v446 = vmul.f32 %v395, %v395
  %v447 = vmul.f32 %v414, %v414
  %v448 = vmul.f32 %v433, %v433
  %v449 = vmul.f32 %v378, %v378
  %v450 = vmul.f32 %v397, %v397
  %v451 = vmul.f32 %v416, %v416
  %v452 = vmul.f32 %v435, %v435
  %v453 = vmul.f32 %v371, %v437
  %v454 = vmul.f32 %v390, %v438
  %v455 = vmul.f32 %v409, %v439
  %v456 = vmul.f32 %v428, %v440
  %v457 = vmul.f32 %v373, %v441
  %v458 = vmul.f32 %v392, %v442
  %v459 = vmul.f32 %v411, %v443
  %v460 = vmul.f32 %v430, %v444
  %v461 = vmul.f32 %v376, %v445
  %v462 = vmul.f32 %v395, %v446
  %v463 = vmul.f32 %v414, %v447
  %v464 = vmul.f32 %v433, %v448
  %v465 = vmul.f32 %v378, %v449
  %v466 = vmul.f32 %v397, %v450
  %v467 = vmul.f32 %v416, %v451
  %v468 = vmul.f32 %v435, %v452
  %v469 = vmul.f32 %v453, 0.044715
  %v470 = vmul.f32 %v454, 0.044715
  %v471 = vmul.f32 %v455, 0.044715
  %v472 = vmul.f32 %v456, 0.044715
  %v473 = vmul.f32 %v457, 0.044715
  %v474 = vmul.f32 %v458, 0.044715
  %v475 = vmul.f32 %v459, 0.044715
  %v476 = vmul.f32 %v460, 0.044715
  %v477 = vmul.f32 %v461, 0.044715
  %v478 = vmul.f32 %v462, 0.044715
  %v479 = vmul.f32 %v463, 0.044715
  %v480 = vmul.f32 %v464, 0.044715
  %v481 = vmul.f32 %v465, 0.044715
  %v482 = vmul.f32 %v466, 0.044715
  %v483 = vmul.f32 %v467, 0.044715
  %v484 = vmul.f32 %v468, 0.044715
  %v485 = vadd.f32 %v371, %v469
  %v486 = vadd.f32 %v390, %v470
  %v487 = vadd.f32 %v409, %v471
  %v488 = vadd.f32 %v428, %v472
  %v489 = vadd.f32 %v373, %v473
  %v490 = vadd.f32 %v392, %v474
  %v491 = vadd.f32 %v411, %v475
  %v492 = vadd.f32 %v430, %v476
  %v493 = vadd.f32 %v376, %v477
  %v494 = vadd.f32 %v395, %v478
  %v495 = vadd.f32 %v414, %v479
  %v496 = vadd.f32 %v433, %v480
  %v497 = vadd.f32 %v378, %v481
  %v498 = vadd.f32 %v397, %v482
  %v499 = vadd.f32 %v416, %v483
  %v500 = vadd.f32 %v435, %v484
  %v501 = vmul.f32 %v485, 0.7978846
  %v502 = vmul.f32 %v486, 0.7978846
  %v503 = vmul.f32 %v487, 0.7978846
  %v504 = vmul.f32 %v488, 0.7978846
  %v505 = vmul.f32 %v489, 0.7978846
  %v506 = vmul.f32 %v490, 0.7978846
  %v507 = vmul.f32 %v491, 0.7978846
  %v508 = vmul.f32 %v492, 0.7978846
  %v509 = vmul.f32 %v493, 0.7978846
  %v510 = vmul.f32 %v494, 0.7978846
  %v511 = vmul.f32 %v495, 0.7978846
  %v512 = vmul.f32 %v496, 0.7978846
  %v513 = vmul.f32 %v497, 0.7978846
  %v514 = vmul.f32 %v498, 0.7978846
  %v515 = vmul.f32 %v499, 0.7978846
  %v516 = vmul.f32 %v500, 0.7978846
  %v517 = vtanh.pop %v501
  %v518 = vtanh.pop %v502
  %v519 = vtanh.pop %v503
  %v520 = vtanh.pop %v504
  %v521 = vtanh.pop %v505
  %v522 = vtanh.pop %v506
  %v523 = vtanh.pop %v507
  %v524 = vtanh.pop %v508
  %v525 = vtanh.pop %v509
  %v526 = vtanh.pop %v510
  %v527 = vtanh.pop %v511
  %v528 = vtanh.pop %v512
  %v529 = vtanh.pop %v513
  %v530 = vtanh.pop %v514
  %v531 = vtanh.pop %v515
  %v532 = vtanh.pop %v516
  %v533 = vadd.f32 %v517, 1.0
  %v534 = vadd.f32 %v518, 1.0
  %v535 = vadd.f32 %v519, 1.0
  %v536 = vadd.f32 %v520, 1.0
  %v537 = vadd.f32 %v521, 1.0
  %v538 = vadd.f32 %v522, 1.0
  %v539 = vadd.f32 %v523, 1.0
  %v540 = vadd.f32 %v524, 1.0
  %v541 = vadd.f32 %v525, 1.0
  %v542 = vadd.f32 %v526, 1.0
  %v543 = vadd.f32 %v527, 1.0
  %v544 = vadd.f32 %v528, 1.0
  %v545 = vadd.f32 %v529, 1.0
  %v546 = vadd.f32 %v530, 1.0
  %v547 = vadd.f32 %v531, 1.0
  %v548 = vadd.f32 %v532, 1.0
  %v549 = vmul.f32 %v533, 0.5
  %v550 = vmul.f32 %v534, 0.5
  %v551 = vmul.f32 %v535, 0.5
  %v552 = vmul.f32 %v536, 0.5
  %v553 = vmul.f32 %v537, 0.5
  %v554 = vmul.f32 %v538, 0.5
  %v555 = vmul.f32 %v539, 0.5
  %v556 = vmul.f32 %v540, 0.5
  %v557 = vmul.f32 %v541, 0.5
  %v558 = vmul.f32 %v542, 0.5
  %v559 = vmul.f32 %v543, 0.5
  %v560 = vmul.f32 %v544, 0.5
  %v561 = vmul.f32 %v545, 0.5
  %v562 = vmul.f32 %v546, 0.5
  %v563 = vmul.f32 %v547, 0.5
  %v564 = vmul.f32 %v548, 0.5
  %v565 = vmul.f32 %v371, %v549
  %v566 = vmul.f32 %v390, %v550
  %v567 = vmul.f32 %v409, %v551
  %v568 = vmul.f32 %v428, %v552
  %v569 = vmul.f32 %v373, %v553
  %v570 = vmul.f32 %v392, %v554
  %v571 = vmul.f32 %v411, %v555
  %v572 = vmul.f32 %v430, %v556
  %v573 = vmul.f32 %v376, %v557
  %v574 = vmul.f32 %v395, %v558
  %v575 = vmul.f32 %v414, %v559
  %v576 = vmul.f32 %v433, %v560
  %v577 = vmul.f32 %v378, %v561
  %v578 = vmul.f32 %v397, %v562
  %v579 = vmul.f32 %v416, %v563
  %v580 = vmul.f32 %v435, %v564
  %v581 = vpack.c.bf16 %v566, %v565
  %v582 = vpack.c.bf16 %v568, %v567
  %v583 = vpack.c.bf16 %v570, %v569
  %v584 = vpack.c.bf16 %v572, %v571
  %v585 = vpack.c.bf16 %v574, %v573
  %v586 = vpack.c.bf16 %v576, %v575
  %v587 = vpack.c.bf16 %v578, %v577
  %v588 = vpack.c.bf16 %v580, %v579
  %589 = vst [vmem:[%s5] sm:$0xff] %v581
  %590 = vst [vmem:[%s5 + $0x8] sm:$0xff] %v582
  %591 = vst [vmem:[%s5 + $0x10] sm:$0xff] %v583
  %592 = vst [vmem:[%s5 + $0x18] sm:$0xff] %v584
  %593 = vst [vmem:[%s5 + $0x20] sm:$0xff] %v585
  %594 = vst [vmem:[%s5 + $0x28] sm:$0xff] %v586
  %595 = vst [vmem:[%s5 + $0x30] sm:$0xff] %v587
  %596 = vst [vmem:[%s5 + $0x38] sm:$0xff] %v588
  // Predicated region
  $region26: #{pat_forward.16} parent=0 // pred_check
    _
  $region27: #{pat_forward.16} parent=0 // pred_check_branch
    %598 = sbr.rel (0) target = $region29
  $region28: #{pat_forward.16} parent=0 // pred_region
    _
  $region29: #{pat_forward.16} parent=0 // pred_fallthru
    _
  // Predicated region
  $region30: #{pat_forward.16} parent=0 // pred_check
    _
  $region31: #{pat_forward.16} parent=0 // pred_check_branch
    %600 = sbr.rel (0) target = $region33
  $region32: #{pat_forward.16} parent=0 // pred_region
    _
  $region33: #{pat_forward.16} parent=0 // pred_fallthru
    _

</llo_original>
